<compile_context>
chip_gen: v7x
topology: tpu7x:2x2x1
jax: 0.10.0
libtpu: 0.0.40
codegen_flags: <defaults>
</compile_context>

<pallas_src>
import functools
import math

import jax
import jax.numpy as jnp
from jax.experimental import pallas as pl
from jax.experimental.pallas import tpu as pltpu

# ----------------------------- model config (small, DistilBERT-shaped) -----------------------------
VOCAB = 100
MAX_POS = 64
HIDDEN = 32         # distilbert hidden_size analogue
HEADS = 4
FFN = 64
LAYERS = 2
CLS_HIDDEN = 128    # classification head width, as in the PyTorch module
NUM_LABELS = 3
LN_EPS = 1e-12      # DistilBERT layer-norm epsilon


# ----------------------------- in-kernel value helpers -----------------------------

def _ln(x, g, b, eps=LN_EPS):
    """LayerNorm over the last dim; g/b are (1, D) and broadcast."""
    mu = jnp.mean(x, axis=-1, keepdims=True)
    xc = x - mu
    var = jnp.mean(xc * xc, axis=-1, keepdims=True)
    return xc * jax.lax.rsqrt(var + eps) * g + b


def _gelu(x):
    # TODO(synk): HF DistilBERT uses erf-GELU; tanh approximation used here for a
    # clean EUP lowering (numerically very close, may differ at tight tolerances).
    c = math.sqrt(2.0 / math.pi)
    return 0.5 * x * (1.0 + jnp.tanh(c * (x + 0.044715 * x * x * x)))


# ----------------------------- the single fused kernel -----------------------------
# ref layout (all 2-D, all fully VMEM-resident):
#   [0] x            (B*S, HIDDEN)   embedded tokens (word + pos)
#   [1] mask_add     (B, S)          additive key mask (0 keep / -1e9 pad)
#   [2] emb_ln_g     (1, HIDDEN)
#   [3] emb_ln_b     (1, HIDDEN)
#   per layer (12 refs): wqkv (H,3H), bqkv (1,3H), wo (H,H), bo (1,H),
#                        sa_g (1,H), sa_b (1,H), w1 (H,FFN), b1 (1,FFN),
#                        w2 (FFN,H), b2 (1,H), out_g (1,H), out_b (1,H)
#   tail: cls1_w (H,128), cls1_b (1,128), cls2_w (128,NL), cls2_b (1,NL)
#   out:  logits (B, NUM_LABELS)

def _fused_forward_kernel(*refs, B, S):
    Dh = HIDDEN // HEADS
    scale = 1.0 / math.sqrt(Dh)

    x_ref, mask_ref, emb_g_ref, emb_b_ref = refs[0], refs[1], refs[2], refs[3]
    layer_refs = [refs[4 + 12 * l: 4 + 12 * (l + 1)] for l in range(LAYERS)]
    base = 4 + 12 * LAYERS
    c1w_ref, c1b_ref, c2w_ref, c2b_ref = refs[base:base + 4]
    out_ref = refs[base + 4]

    # ----- embeddings layernorm -----
    x = _ln(x_ref[...], emb_g_ref[...], emb_b_ref[...])          # (B*S, H)
    mask_add = mask_ref[...]                                      # (B, S)

    # ----- encoder layers (statically unrolled) -----
    for l in range(LAYERS):
        (wqkv_ref, bqkv_ref, wo_ref, bo_ref, sa_g_ref, sa_b_ref,
         w1_ref, b1_ref, w2_ref, b2_ref, out_g_ref, out_b_ref) = layer_refs[l]

        # fused QKV projection: one (H, 3H) matmul, 96-lane output
        qkv = jnp.dot(x, wqkv_ref[...], preferred_element_type=jnp.float32) + bqkv_ref[...]
        q = qkv[:, 0:HIDDEN] * scale          # 1/sqrt(Dh) folded into Q
        k = qkv[:, HIDDEN:2 * HIDDEN]
        v = qkv[:, 2 * HIDDEN:3 * HIDDEN]
        wo = wo_ref[...]

        # per-(batch, head) attention on 2-D tiles; output projection fused as
        # a per-head (S, Dh) @ (Dh, H) accumulation (no concat of head outputs).
        attn_rows = []
        for b in range(B):
            r0 = b * S
            qb = q[r0:r0 + S, :]
            kb = k[r0:r0 + S, :]
            vb = v[r0:r0 + S, :]
            mb = mask_add[b:b + 1, :]                              # (1, S)
            acc = None
            for h in range(HEADS):
                c0 = h * Dh
                qh = qb[:, c0:c0 + Dh]
                kh = kb[:, c0:c0 + Dh]
                vh = vb[:, c0:c0 + Dh]
                s = jax.lax.dot_general(                           # q @ k^T  -> (S, S)
                    qh, kh, (((1,), (1,)), ((), ())),
                    preferred_element_type=jnp.float32)
                s = s + mb                                         # mask padded keys
                s = s - jnp.max(s, axis=-1, keepdims=True)         # stable softmax
                p = jnp.exp(s)
                p = p / jnp.sum(p, axis=-1, keepdims=True)
                ctx = jnp.dot(p, vh, preferred_element_type=jnp.float32)       # (S, Dh)
                contrib = jnp.dot(ctx, wo[c0:c0 + Dh, :],
                                  preferred_element_type=jnp.float32)          # (S, H)
                acc = contrib if acc is None else acc + contrib
            attn_rows.append(acc)
        attn = jnp.concatenate(attn_rows, axis=0) + bo_ref[...]    # (B*S, H)

        x = _ln(attn + x, sa_g_ref[...], sa_b_ref[...])            # sa_layer_norm

        # FFN: lin1 + GELU + lin2 fused, intermediate never leaves VMEM/vregs
        hmid = _gelu(jnp.dot(x, w1_ref[...], preferred_element_type=jnp.float32)
                     + b1_ref[...])
        ffn = jnp.dot(hmid, w2_ref[...], preferred_element_type=jnp.float32) + b2_ref[...]
        x = _ln(ffn + x, out_g_ref[...], out_b_ref[...])           # output_layer_norm

    # ----- classification head on the [CLS] rows (row 0 of each sequence) -----
    cls = jnp.concatenate([x[b * S:b * S + 1, :] for b in range(B)], axis=0)   # (B, H)
    h1 = jnp.dot(cls, c1w_ref[...], preferred_element_type=jnp.float32) + c1b_ref[...]
    h1 = jnp.maximum(h1, 0.0)                                                  # ReLU
    logits = jnp.dot(h1, c2w_ref[...], preferred_element_type=jnp.float32) + c2b_ref[...]
    out_ref[...] = logits.astype(out_ref.dtype)


# ----------------------------- parameter init (deterministic, synthetic) -----------------------------
# TODO(synk): original module loads pretrained DistilBERT weights via from_pretrained();
# here weights are synthetic (normal(0, 0.02), zero biases, identity layernorms).
# Biases / layernorm params are stored pre-shaped as (1, N) so no host-side reshapes
# appear in the traced graph.

def init_params(key):
    ks = jax.random.split(key, 4 + LAYERS)

    def dense(k, fan_in, fan_out):
        w = jax.random.normal(k, (fan_in, fan_out), jnp.float32) * 0.02
        b = jnp.zeros((1, fan_out), jnp.float32)
        return w, b

    def ln():
        return (jnp.ones((1, HIDDEN), jnp.float32), jnp.zeros((1, HIDDEN), jnp.float32))

    params = {
        "word_emb": jax.random.normal(ks[0], (VOCAB, HIDDEN), jnp.float32) * 0.02,
        "pos_emb": jax.random.normal(ks[1], (MAX_POS, HIDDEN), jnp.float32) * 0.02,
        "emb_ln": ln(),
        "layers": [],
        "cls1": dense(ks[2], HIDDEN, CLS_HIDDEN),
        "cls2": dense(ks[3], CLS_HIDDEN, NUM_LABELS),
    }
    for l in range(LAYERS):
        kk = jax.random.split(ks[4 + l], 6)
        wq, bq = dense(kk[0], HIDDEN, HIDDEN)
        wk, bk = dense(kk[1], HIDDEN, HIDDEN)
        wv, bv = dense(kk[2], HIDDEN, HIDDEN)
        wo, bo = dense(kk[3], HIDDEN, HIDDEN)
        w1, b1 = dense(kk[4], HIDDEN, FFN)
        w2, b2 = dense(kk[5], FFN, HIDDEN)
        sa_g, sa_b = ln()
        out_g, out_b = ln()
        params["layers"].append({
            "wqkv": jnp.concatenate([wq, wk, wv], axis=1),     # (H, 3H) fused QKV
            "bqkv": jnp.concatenate([bq, bk, bv], axis=1),     # (1, 3H)
            "wo": wo, "bo": bo,
            "sa_g": sa_g, "sa_b": sa_b,
            "w1": w1, "b1": b1, "w2": w2, "b2": b2,
            "out_g": out_g, "out_b": out_b,
        })
    return params


# ----------------------------- forward pass (one pallas_call) -----------------------------

def model_forward(params, input_ids, attention_mask):
    B, S = input_ids.shape

    # Embedding gather is plain-JAX glue (dynamic gather has no clean in-kernel path).
    x = params["word_emb"][input_ids] + params["pos_emb"][jnp.arange(S)][None, :, :]
    x = x.reshape(B * S, HIDDEN).astype(jnp.float32)

    # Additive key mask: 0 where attended, -1e9 where padded (matches masked_fill(-inf)).
    mask_add = (1.0 - attention_mask.astype(jnp.float32)) * (-1e9)   # (B, S)

    flat_inputs = [x, mask_add, params["emb_ln"][0], params["emb_ln"][1]]
    for layer in params["layers"]:
        flat_inputs += [layer["wqkv"], layer["bqkv"], layer["wo"], layer["bo"],
                        layer["sa_g"], layer["sa_b"],
                        layer["w1"], layer["b1"], layer["w2"], layer["b2"],
                        layer["out_g"], layer["out_b"]]
    flat_inputs += [params["cls1"][0], params["cls1"][1],
                    params["cls2"][0], params["cls2"][1]]

    # Everything is small; hold each array whole in VMEM (single grid step).
    in_specs = [pl.BlockSpec(a.shape, lambda i: (0, 0)) for a in flat_inputs]
    out_spec = pl.BlockSpec((B, NUM_LABELS), lambda i: (0, 0))

    return pl.pallas_call(
        functools.partial(_fused_forward_kernel, B=B, S=S),
        out_shape=jax.ShapeDtypeStruct((B, NUM_LABELS), jnp.float32),
        grid=(1,),
        in_specs=in_specs,
        out_specs=out_spec,
        compiler_params=pltpu.CompilerParams(
            dimension_semantics=("arbitrary",)),
    )(*flat_inputs)


# ----------------------------- main -----------------------------

if __name__ == "__main__":
    B, S = 2, 8
    params = init_params(jax.random.PRNGKey(42))

    key = jax.random.PRNGKey(0)
    k_ids, _ = jax.random.split(key)
    input_ids = jax.random.randint(k_ids, (B, S), 0, VOCAB, dtype=jnp.int32)
    attention_mask = jnp.array(
        [[1, 1, 1, 1, 1, 1, 1, 1],
         [1, 1, 1, 1, 1, 1, 0, 0]], dtype=jnp.int32)

    logits = jax.jit(model_forward)(params, input_ids, attention_mask)
    jax.block_until_ready(logits)
    assert logits.shape == (B, NUM_LABELS) and logits.dtype == jnp.float32
    print("KERNEL_OK")
</pallas_src>

<mosaic_0001>
module attributes {stable_mosaic.version = 11 : i64} {
  func.func @_fused_forward_kernel(%arg0: i32, %arg1: memref<16x32xf32, #tpu.memory_space<vmem>>, %arg2: memref<2x8xf32, #tpu.memory_space<vmem>>, %arg3: memref<1x32xf32, #tpu.memory_space<vmem>>, %arg4: memref<1x32xf32, #tpu.memory_space<vmem>>, %arg5: memref<32x96xf32, #tpu.memory_space<vmem>>, %arg6: memref<1x96xf32, #tpu.memory_space<vmem>>, %arg7: memref<32x32xf32, #tpu.memory_space<vmem>>, %arg8: memref<1x32xf32, #tpu.memory_space<vmem>>, %arg9: memref<1x32xf32, #tpu.memory_space<vmem>>, %arg10: memref<1x32xf32, #tpu.memory_space<vmem>>, %arg11: memref<32x64xf32, #tpu.memory_space<vmem>>, %arg12: memref<1x64xf32, #tpu.memory_space<vmem>>, %arg13: memref<64x32xf32, #tpu.memory_space<vmem>>, %arg14: memref<1x32xf32, #tpu.memory_space<vmem>>, %arg15: memref<1x32xf32, #tpu.memory_space<vmem>>, %arg16: memref<1x32xf32, #tpu.memory_space<vmem>>, %arg17: memref<32x96xf32, #tpu.memory_space<vmem>>, %arg18: memref<1x96xf32, #tpu.memory_space<vmem>>, %arg19: memref<32x32xf32, #tpu.memory_space<vmem>>, %arg20: memref<1x32xf32, #tpu.memory_space<vmem>>, %arg21: memref<1x32xf32, #tpu.memory_space<vmem>>, %arg22: memref<1x32xf32, #tpu.memory_space<vmem>>, %arg23: memref<32x64xf32, #tpu.memory_space<vmem>>, %arg24: memref<1x64xf32, #tpu.memory_space<vmem>>, %arg25: memref<64x32xf32, #tpu.memory_space<vmem>>, %arg26: memref<1x32xf32, #tpu.memory_space<vmem>>, %arg27: memref<1x32xf32, #tpu.memory_space<vmem>>, %arg28: memref<1x32xf32, #tpu.memory_space<vmem>>, %arg29: memref<32x128xf32, #tpu.memory_space<vmem>>, %arg30: memref<1x128xf32, #tpu.memory_space<vmem>>, %arg31: memref<128x3xf32, #tpu.memory_space<vmem>>, %arg32: memref<1x3xf32, #tpu.memory_space<vmem>>, %arg33: memref<2x3xf32, #tpu.memory_space<vmem>>) attributes {dimension_semantics = [#tpu.dimension_semantics<arbitrary>], iteration_bounds = array<i64: 1>, scalar_prefetch = 0 : i64, scratch_operands = 0 : i64, tpu.core_type = #tpu.core_type<tc>, window_params = [{pipeline_mode = #tpu.pipeline_mode<synchronous>, transform_indices = @transform_0, window_bounds = array<i64: 16, 32>}, {pipeline_mode = #tpu.pipeline_mode<synchronous>, transform_indices = @transform_1, window_bounds = array<i64: 2, 8>}, {pipeline_mode = #tpu.pipeline_mode<synchronous>, transform_indices = @transform_2, window_bounds = array<i64: 1, 32>}, {pipeline_mode = #tpu.pipeline_mode<synchronous>, transform_indices = @transform_3, window_bounds = array<i64: 1, 32>}, {pipeline_mode = #tpu.pipeline_mode<synchronous>, transform_indices = @transform_4, window_bounds = array<i64: 32, 96>}, {pipeline_mode = #tpu.pipeline_mode<synchronous>, transform_indices = @transform_5, window_bounds = array<i64: 1, 96>}, {pipeline_mode = #tpu.pipeline_mode<synchronous>, transform_indices = @transform_6, window_bounds = array<i64: 32, 32>}, {pipeline_mode = #tpu.pipeline_mode<synchronous>, transform_indices = @transform_7, window_bounds = array<i64: 1, 32>}, {pipeline_mode = #tpu.pipeline_mode<synchronous>, transform_indices = @transform_8, window_bounds = array<i64: 1, 32>}, {pipeline_mode = #tpu.pipeline_mode<synchronous>, transform_indices = @transform_9, window_bounds = array<i64: 1, 32>}, {pipeline_mode = #tpu.pipeline_mode<synchronous>, transform_indices = @transform_10, window_bounds = array<i64: 32, 64>}, {pipeline_mode = #tpu.pipeline_mode<synchronous>, transform_indices = @transform_11, window_bounds = array<i64: 1, 64>}, {pipeline_mode = #tpu.pipeline_mode<synchronous>, transform_indices = @transform_12, window_bounds = array<i64: 64, 32>}, {pipeline_mode = #tpu.pipeline_mode<synchronous>, transform_indices = @transform_13, window_bounds = array<i64: 1, 32>}, {pipeline_mode = #tpu.pipeline_mode<synchronous>, transform_indices = @transform_14, window_bounds = array<i64: 1, 32>}, {pipeline_mode = #tpu.pipeline_mode<synchronous>, transform_indices = @transform_15, window_bounds = array<i64: 1, 32>}, {pipeline_mode = #tpu.pipeline_mode<synchronous>, transform_indices = @transform_16, window_bounds = array<i64: 32, 96>}, {pipeline_mode = #tpu.pipeline_mode<synchronous>, transform_indices = @transform_17, window_bounds = array<i64: 1, 96>}, {pipeline_mode = #tpu.pipeline_mode<synchronous>, transform_indices = @transform_18, window_bounds = array<i64: 32, 32>}, {pipeline_mode = #tpu.pipeline_mode<synchronous>, transform_indices = @transform_19, window_bounds = array<i64: 1, 32>}, {pipeline_mode = #tpu.pipeline_mode<synchronous>, transform_indices = @transform_20, window_bounds = array<i64: 1, 32>}, {pipeline_mode = #tpu.pipeline_mode<synchronous>, transform_indices = @transform_21, window_bounds = array<i64: 1, 32>}, {pipeline_mode = #tpu.pipeline_mode<synchronous>, transform_indices = @transform_22, window_bounds = array<i64: 32, 64>}, {pipeline_mode = #tpu.pipeline_mode<synchronous>, transform_indices = @transform_23, window_bounds = array<i64: 1, 64>}, {pipeline_mode = #tpu.pipeline_mode<synchronous>, transform_indices = @transform_24, window_bounds = array<i64: 64, 32>}, {pipeline_mode = #tpu.pipeline_mode<synchronous>, transform_indices = @transform_25, window_bounds = array<i64: 1, 32>}, {pipeline_mode = #tpu.pipeline_mode<synchronous>, transform_indices = @transform_26, window_bounds = array<i64: 1, 32>}, {pipeline_mode = #tpu.pipeline_mode<synchronous>, transform_indices = @transform_27, window_bounds = array<i64: 1, 32>}, {pipeline_mode = #tpu.pipeline_mode<synchronous>, transform_indices = @transform_28, window_bounds = array<i64: 32, 128>}, {pipeline_mode = #tpu.pipeline_mode<synchronous>, transform_indices = @transform_29, window_bounds = array<i64: 1, 128>}, {pipeline_mode = #tpu.pipeline_mode<synchronous>, transform_indices = @transform_30, window_bounds = array<i64: 128, 3>}, {pipeline_mode = #tpu.pipeline_mode<synchronous>, transform_indices = @transform_31, window_bounds = array<i64: 1, 3>}, {pipeline_mode = #tpu.pipeline_mode<synchronous>, transform_indices = @transform_32, window_bounds = array<i64: 2, 3>}]} {
    %c0 = arith.constant 0 : index
    %c0_0 = arith.constant 0 : index
    %0 = vector.load %arg1[%c0, %c0_0] : memref<16x32xf32, #tpu.memory_space<vmem>>, vector<16x32xf32>
    %c0_1 = arith.constant 0 : index
    %c0_2 = arith.constant 0 : index
    %1 = vector.load %arg3[%c0_1, %c0_2] : memref<1x32xf32, #tpu.memory_space<vmem>>, vector<1x32xf32>
    %c0_3 = arith.constant 0 : index
    %c0_4 = arith.constant 0 : index
    %2 = vector.load %arg4[%c0_3, %c0_4] : memref<1x32xf32, #tpu.memory_space<vmem>>, vector<1x32xf32>
    %cst = arith.constant dense<0.000000e+00> : vector<16xf32>
    %3 = vector.multi_reduction <add>, %0, %cst [1] : vector<16x32xf32> to vector<16xf32>
    %4 = vector.shape_cast %3 : vector<16xf32> to vector<16x1xf32>
    %cst_5 = arith.constant 3.200000e+01 : f32
    %5 = vector.broadcast %cst_5 : f32 to vector<16x1xf32>
    %6 = arith.divf %4, %5 : vector<16x1xf32>
    %7 = vector.broadcast %6 : vector<16x1xf32> to vector<16x32xf32>
    %8 = arith.subf %0, %7 : vector<16x32xf32>
    %9 = arith.mulf %8, %8 : vector<16x32xf32>
    %cst_6 = arith.constant dense<0.000000e+00> : vector<16xf32>
    %10 = vector.multi_reduction <add>, %9, %cst_6 [1] : vector<16x32xf32> to vector<16xf32>
    %11 = vector.shape_cast %10 : vector<16xf32> to vector<16x1xf32>
    %cst_7 = arith.constant 3.200000e+01 : f32
    %12 = vector.broadcast %cst_7 : f32 to vector<16x1xf32>
    %13 = arith.divf %11, %12 : vector<16x1xf32>
    %cst_8 = arith.constant 9.99999996E-13 : f32
    %14 = vector.broadcast %cst_8 : f32 to vector<16x1xf32>
    %15 = arith.addf %13, %14 : vector<16x1xf32>
    %16 = math.rsqrt %15 : vector<16x1xf32>
    %17 = vector.broadcast %16 : vector<16x1xf32> to vector<16x32xf32>
    %18 = arith.mulf %8, %17 : vector<16x32xf32>
    %19 = vector.broadcast %1 : vector<1x32xf32> to vector<16x32xf32>
    %20 = arith.mulf %18, %19 : vector<16x32xf32>
    %21 = vector.broadcast %2 : vector<1x32xf32> to vector<16x32xf32>
    %22 = arith.addf %20, %21 : vector<16x32xf32>
    %c0_9 = arith.constant 0 : index
    %c0_10 = arith.constant 0 : index
    %23 = vector.load %arg2[%c0_9, %c0_10] : memref<2x8xf32, #tpu.memory_space<vmem>>, vector<2x8xf32>
    %c0_11 = arith.constant 0 : index
    %c0_12 = arith.constant 0 : index
    %24 = vector.load %arg5[%c0_11, %c0_12] : memref<32x96xf32, #tpu.memory_space<vmem>>, vector<32x96xf32>
    %cst_13 = arith.constant dense<0.000000e+00> : vector<16x96xf32>
    %25 = tpu.matmul %22, %24, %cst_13 {dimension_numbers = #tpu.dot_dimension_numbers<[1], [0], [0], [1], [0, 0, 1, 1], [], []>} : vector<16x32xf32>, vector<32x96xf32>, vector<16x96xf32> -> vector<16x96xf32>
    %c0_14 = arith.constant 0 : index
    %c0_15 = arith.constant 0 : index
    %26 = vector.load %arg6[%c0_14, %c0_15] : memref<1x96xf32, #tpu.memory_space<vmem>>, vector<1x96xf32>
    %27 = vector.broadcast %26 : vector<1x96xf32> to vector<16x96xf32>
    %28 = arith.addf %25, %27 : vector<16x96xf32>
    %29 = vector.extract_strided_slice %28 {offsets = [0, 0], sizes = [16, 32], strides = [1, 1]} : vector<16x96xf32> to vector<16x32xf32>
    %cst_16 = arith.constant 0.353553385 : f32
    %30 = vector.broadcast %cst_16 : f32 to vector<16x32xf32>
    %31 = arith.mulf %29, %30 : vector<16x32xf32>
    %32 = vector.extract_strided_slice %28 {offsets = [0, 32], sizes = [16, 32], strides = [1, 1]} : vector<16x96xf32> to vector<16x32xf32>
    %33 = vector.extract_strided_slice %28 {offsets = [0, 64], sizes = [16, 32], strides = [1, 1]} : vector<16x96xf32> to vector<16x32xf32>
    %c0_17 = arith.constant 0 : index
    %c0_18 = arith.constant 0 : index
    %34 = vector.load %arg7[%c0_17, %c0_18] : memref<32x32xf32, #tpu.memory_space<vmem>>, vector<32x32xf32>
    %35 = vector.extract_strided_slice %31 {offsets = [0, 0], sizes = [8, 32], strides = [1, 1]} : vector<16x32xf32> to vector<8x32xf32>
    %36 = vector.extract_strided_slice %32 {offsets = [0, 0], sizes = [8, 32], strides = [1, 1]} : vector<16x32xf32> to vector<8x32xf32>
    %37 = vector.extract_strided_slice %33 {offsets = [0, 0], sizes = [8, 32], strides = [1, 1]} : vector<16x32xf32> to vector<8x32xf32>
    %38 = vector.extract_strided_slice %23 {offsets = [0, 0], sizes = [1, 8], strides = [1, 1]} : vector<2x8xf32> to vector<1x8xf32>
    %39 = vector.extract_strided_slice %35 {offsets = [0, 0], sizes = [8, 8], strides = [1, 1]} : vector<8x32xf32> to vector<8x8xf32>
    %40 = vector.extract_strided_slice %36 {offsets = [0, 0], sizes = [8, 8], strides = [1, 1]} : vector<8x32xf32> to vector<8x8xf32>
    %41 = vector.extract_strided_slice %37 {offsets = [0, 0], sizes = [8, 8], strides = [1, 1]} : vector<8x32xf32> to vector<8x8xf32>
    %cst_19 = arith.constant dense<0.000000e+00> : vector<8x8xf32>
    %42 = tpu.matmul %39, %40, %cst_19 {dimension_numbers = #tpu.dot_dimension_numbers<[1], [1], [0], [0], [0, 0, 1, 0], [], []>} : vector<8x8xf32>, vector<8x8xf32>, vector<8x8xf32> -> vector<8x8xf32>
    %43 = vector.broadcast %38 : vector<1x8xf32> to vector<8x8xf32>
    %44 = arith.addf %42, %43 : vector<8x8xf32>
    %cst_20 = arith.constant dense<0xFF800000> : vector<8xf32>
    %45 = vector.multi_reduction <maximumf>, %44, %cst_20 [1] : vector<8x8xf32> to vector<8xf32>
    %46 = vector.shape_cast %45 : vector<8xf32> to vector<8x1xf32>
    %47 = vector.broadcast %46 : vector<8x1xf32> to vector<8x8xf32>
    %48 = arith.subf %44, %47 : vector<8x8xf32>
    %49 = math.exp %48 : vector<8x8xf32>
    %cst_21 = arith.constant dense<0.000000e+00> : vector<8xf32>
    %50 = vector.multi_reduction <add>, %49, %cst_21 [1] : vector<8x8xf32> to vector<8xf32>
    %51 = vector.shape_cast %50 : vector<8xf32> to vector<8x1xf32>
    %52 = vector.broadcast %51 : vector<8x1xf32> to vector<8x8xf32>
    %53 = arith.divf %49, %52 : vector<8x8xf32>
    %cst_22 = arith.constant dense<0.000000e+00> : vector<8x8xf32>
    %54 = tpu.matmul %53, %41, %cst_22 {dimension_numbers = #tpu.dot_dimension_numbers<[1], [0], [0], [1], [0, 0, 1, 1], [], []>} : vector<8x8xf32>, vector<8x8xf32>, vector<8x8xf32> -> vector<8x8xf32>
    %55 = vector.extract_strided_slice %34 {offsets = [0, 0], sizes = [8, 32], strides = [1, 1]} : vector<32x32xf32> to vector<8x32xf32>
    %cst_23 = arith.constant dense<0.000000e+00> : vector<8x32xf32>
    %56 = tpu.matmul %54, %55, %cst_23 {dimension_numbers = #tpu.dot_dimension_numbers<[1], [0], [0], [1], [0, 0, 1, 1], [], []>} : vector<8x8xf32>, vector<8x32xf32>, vector<8x32xf32> -> vector<8x32xf32>
    %57 = vector.extract_strided_slice %35 {offsets = [0, 8], sizes = [8, 8], strides = [1, 1]} : vector<8x32xf32> to vector<8x8xf32>
    %58 = vector.extract_strided_slice %36 {offsets = [0, 8], sizes = [8, 8], strides = [1, 1]} : vector<8x32xf32> to vector<8x8xf32>
    %59 = vector.extract_strided_slice %37 {offsets = [0, 8], sizes = [8, 8], strides = [1, 1]} : vector<8x32xf32> to vector<8x8xf32>
    %cst_24 = arith.constant dense<0.000000e+00> : vector<8x8xf32>
    %60 = tpu.matmul %57, %58, %cst_24 {dimension_numbers = #tpu.dot_dimension_numbers<[1], [1], [0], [0], [0, 0, 1, 0], [], []>} : vector<8x8xf32>, vector<8x8xf32>, vector<8x8xf32> -> vector<8x8xf32>
    %61 = vector.broadcast %38 : vector<1x8xf32> to vector<8x8xf32>
    %62 = arith.addf %60, %61 : vector<8x8xf32>
    %cst_25 = arith.constant dense<0xFF800000> : vector<8xf32>
    %63 = vector.multi_reduction <maximumf>, %62, %cst_25 [1] : vector<8x8xf32> to vector<8xf32>
    %64 = vector.shape_cast %63 : vector<8xf32> to vector<8x1xf32>
    %65 = vector.broadcast %64 : vector<8x1xf32> to vector<8x8xf32>
    %66 = arith.subf %62, %65 : vector<8x8xf32>
    %67 = math.exp %66 : vector<8x8xf32>
    %cst_26 = arith.constant dense<0.000000e+00> : vector<8xf32>
    %68 = vector.multi_reduction <add>, %67, %cst_26 [1] : vector<8x8xf32> to vector<8xf32>
    %69 = vector.shape_cast %68 : vector<8xf32> to vector<8x1xf32>
    %70 = vector.broadcast %69 : vector<8x1xf32> to vector<8x8xf32>
    %71 = arith.divf %67, %70 : vector<8x8xf32>
    %cst_27 = arith.constant dense<0.000000e+00> : vector<8x8xf32>
    %72 = tpu.matmul %71, %59, %cst_27 {dimension_numbers = #tpu.dot_dimension_numbers<[1], [0], [0], [1], [0, 0, 1, 1], [], []>} : vector<8x8xf32>, vector<8x8xf32>, vector<8x8xf32> -> vector<8x8xf32>
    %73 = vector.extract_strided_slice %34 {offsets = [8, 0], sizes = [8, 32], strides = [1, 1]} : vector<32x32xf32> to vector<8x32xf32>
    %cst_28 = arith.constant dense<0.000000e+00> : vector<8x32xf32>
    %74 = tpu.matmul %72, %73, %cst_28 {dimension_numbers = #tpu.dot_dimension_numbers<[1], [0], [0], [1], [0, 0, 1, 1], [], []>} : vector<8x8xf32>, vector<8x32xf32>, vector<8x32xf32> -> vector<8x32xf32>
    %75 = arith.addf %56, %74 : vector<8x32xf32>
    %76 = vector.extract_strided_slice %35 {offsets = [0, 16], sizes = [8, 8], strides = [1, 1]} : vector<8x32xf32> to vector<8x8xf32>
    %77 = vector.extract_strided_slice %36 {offsets = [0, 16], sizes = [8, 8], strides = [1, 1]} : vector<8x32xf32> to vector<8x8xf32>
    %78 = vector.extract_strided_slice %37 {offsets = [0, 16], sizes = [8, 8], strides = [1, 1]} : vector<8x32xf32> to vector<8x8xf32>
    %cst_29 = arith.constant dense<0.000000e+00> : vector<8x8xf32>
    %79 = tpu.matmul %76, %77, %cst_29 {dimension_numbers = #tpu.dot_dimension_numbers<[1], [1], [0], [0], [0, 0, 1, 0], [], []>} : vector<8x8xf32>, vector<8x8xf32>, vector<8x8xf32> -> vector<8x8xf32>
    %80 = vector.broadcast %38 : vector<1x8xf32> to vector<8x8xf32>
    %81 = arith.addf %79, %80 : vector<8x8xf32>
    %cst_30 = arith.constant dense<0xFF800000> : vector<8xf32>
    %82 = vector.multi_reduction <maximumf>, %81, %cst_30 [1] : vector<8x8xf32> to vector<8xf32>
    %83 = vector.shape_cast %82 : vector<8xf32> to vector<8x1xf32>
    %84 = vector.broadcast %83 : vector<8x1xf32> to vector<8x8xf32>
    %85 = arith.subf %81, %84 : vector<8x8xf32>
    %86 = math.exp %85 : vector<8x8xf32>
    %cst_31 = arith.constant dense<0.000000e+00> : vector<8xf32>
    %87 = vector.multi_reduction <add>, %86, %cst_31 [1] : vector<8x8xf32> to vector<8xf32>
    %88 = vector.shape_cast %87 : vector<8xf32> to vector<8x1xf32>
    %89 = vector.broadcast %88 : vector<8x1xf32> to vector<8x8xf32>
    %90 = arith.divf %86, %89 : vector<8x8xf32>
    %cst_32 = arith.constant dense<0.000000e+00> : vector<8x8xf32>
    %91 = tpu.matmul %90, %78, %cst_32 {dimension_numbers = #tpu.dot_dimension_numbers<[1], [0], [0], [1], [0, 0, 1, 1], [], []>} : vector<8x8xf32>, vector<8x8xf32>, vector<8x8xf32> -> vector<8x8xf32>
    %92 = vector.extract_strided_slice %34 {offsets = [16, 0], sizes = [8, 32], strides = [1, 1]} : vector<32x32xf32> to vector<8x32xf32>
    %cst_33 = arith.constant dense<0.000000e+00> : vector<8x32xf32>
    %93 = tpu.matmul %91, %92, %cst_33 {dimension_numbers = #tpu.dot_dimension_numbers<[1], [0], [0], [1], [0, 0, 1, 1], [], []>} : vector<8x8xf32>, vector<8x32xf32>, vector<8x32xf32> -> vector<8x32xf32>
    %94 = arith.addf %75, %93 : vector<8x32xf32>
    %95 = vector.extract_strided_slice %35 {offsets = [0, 24], sizes = [8, 8], strides = [1, 1]} : vector<8x32xf32> to vector<8x8xf32>
    %96 = vector.extract_strided_slice %36 {offsets = [0, 24], sizes = [8, 8], strides = [1, 1]} : vector<8x32xf32> to vector<8x8xf32>
    %97 = vector.extract_strided_slice %37 {offsets = [0, 24], sizes = [8, 8], strides = [1, 1]} : vector<8x32xf32> to vector<8x8xf32>
    %cst_34 = arith.constant dense<0.000000e+00> : vector<8x8xf32>
    %98 = tpu.matmul %95, %96, %cst_34 {dimension_numbers = #tpu.dot_dimension_numbers<[1], [1], [0], [0], [0, 0, 1, 0], [], []>} : vector<8x8xf32>, vector<8x8xf32>, vector<8x8xf32> -> vector<8x8xf32>
    %99 = vector.broadcast %38 : vector<1x8xf32> to vector<8x8xf32>
    %100 = arith.addf %98, %99 : vector<8x8xf32>
    %cst_35 = arith.constant dense<0xFF800000> : vector<8xf32>
    %101 = vector.multi_reduction <maximumf>, %100, %cst_35 [1] : vector<8x8xf32> to vector<8xf32>
    %102 = vector.shape_cast %101 : vector<8xf32> to vector<8x1xf32>
    %103 = vector.broadcast %102 : vector<8x1xf32> to vector<8x8xf32>
    %104 = arith.subf %100, %103 : vector<8x8xf32>
    %105 = math.exp %104 : vector<8x8xf32>
    %cst_36 = arith.constant dense<0.000000e+00> : vector<8xf32>
    %106 = vector.multi_reduction <add>, %105, %cst_36 [1] : vector<8x8xf32> to vector<8xf32>
    %107 = vector.shape_cast %106 : vector<8xf32> to vector<8x1xf32>
    %108 = vector.broadcast %107 : vector<8x1xf32> to vector<8x8xf32>
    %109 = arith.divf %105, %108 : vector<8x8xf32>
    %cst_37 = arith.constant dense<0.000000e+00> : vector<8x8xf32>
    %110 = tpu.matmul %109, %97, %cst_37 {dimension_numbers = #tpu.dot_dimension_numbers<[1], [0], [0], [1], [0, 0, 1, 1], [], []>} : vector<8x8xf32>, vector<8x8xf32>, vector<8x8xf32> -> vector<8x8xf32>
    %111 = vector.extract_strided_slice %34 {offsets = [24, 0], sizes = [8, 32], strides = [1, 1]} : vector<32x32xf32> to vector<8x32xf32>
    %cst_38 = arith.constant dense<0.000000e+00> : vector<8x32xf32>
    %112 = tpu.matmul %110, %111, %cst_38 {dimension_numbers = #tpu.dot_dimension_numbers<[1], [0], [0], [1], [0, 0, 1, 1], [], []>} : vector<8x8xf32>, vector<8x32xf32>, vector<8x32xf32> -> vector<8x32xf32>
    %113 = arith.addf %94, %112 : vector<8x32xf32>
    %114 = vector.extract_strided_slice %31 {offsets = [8, 0], sizes = [8, 32], strides = [1, 1]} : vector<16x32xf32> to vector<8x32xf32>
    %115 = vector.extract_strided_slice %32 {offsets = [8, 0], sizes = [8, 32], strides = [1, 1]} : vector<16x32xf32> to vector<8x32xf32>
    %116 = vector.extract_strided_slice %33 {offsets = [8, 0], sizes = [8, 32], strides = [1, 1]} : vector<16x32xf32> to vector<8x32xf32>
    %117 = vector.extract_strided_slice %23 {offsets = [1, 0], sizes = [1, 8], strides = [1, 1]} : vector<2x8xf32> to vector<1x8xf32>
    %118 = vector.extract_strided_slice %114 {offsets = [0, 0], sizes = [8, 8], strides = [1, 1]} : vector<8x32xf32> to vector<8x8xf32>
    %119 = vector.extract_strided_slice %115 {offsets = [0, 0], sizes = [8, 8], strides = [1, 1]} : vector<8x32xf32> to vector<8x8xf32>
    %120 = vector.extract_strided_slice %116 {offsets = [0, 0], sizes = [8, 8], strides = [1, 1]} : vector<8x32xf32> to vector<8x8xf32>
    %cst_39 = arith.constant dense<0.000000e+00> : vector<8x8xf32>
    %121 = tpu.matmul %118, %119, %cst_39 {dimension_numbers = #tpu.dot_dimension_numbers<[1], [1], [0], [0], [0, 0, 1, 0], [], []>} : vector<8x8xf32>, vector<8x8xf32>, vector<8x8xf32> -> vector<8x8xf32>
    %122 = vector.broadcast %117 : vector<1x8xf32> to vector<8x8xf32>
    %123 = arith.addf %121, %122 : vector<8x8xf32>
    %cst_40 = arith.constant dense<0xFF800000> : vector<8xf32>
    %124 = vector.multi_reduction <maximumf>, %123, %cst_40 [1] : vector<8x8xf32> to vector<8xf32>
    %125 = vector.shape_cast %124 : vector<8xf32> to vector<8x1xf32>
    %126 = vector.broadcast %125 : vector<8x1xf32> to vector<8x8xf32>
    %127 = arith.subf %123, %126 : vector<8x8xf32>
    %128 = math.exp %127 : vector<8x8xf32>
    %cst_41 = arith.constant dense<0.000000e+00> : vector<8xf32>
    %129 = vector.multi_reduction <add>, %128, %cst_41 [1] : vector<8x8xf32> to vector<8xf32>
    %130 = vector.shape_cast %129 : vector<8xf32> to vector<8x1xf32>
    %131 = vector.broadcast %130 : vector<8x1xf32> to vector<8x8xf32>
    %132 = arith.divf %128, %131 : vector<8x8xf32>
    %cst_42 = arith.constant dense<0.000000e+00> : vector<8x8xf32>
    %133 = tpu.matmul %132, %120, %cst_42 {dimension_numbers = #tpu.dot_dimension_numbers<[1], [0], [0], [1], [0, 0, 1, 1], [], []>} : vector<8x8xf32>, vector<8x8xf32>, vector<8x8xf32> -> vector<8x8xf32>
    %134 = vector.extract_strided_slice %34 {offsets = [0, 0], sizes = [8, 32], strides = [1, 1]} : vector<32x32xf32> to vector<8x32xf32>
    %cst_43 = arith.constant dense<0.000000e+00> : vector<8x32xf32>
    %135 = tpu.matmul %133, %134, %cst_43 {dimension_numbers = #tpu.dot_dimension_numbers<[1], [0], [0], [1], [0, 0, 1, 1], [], []>} : vector<8x8xf32>, vector<8x32xf32>, vector<8x32xf32> -> vector<8x32xf32>
    %136 = vector.extract_strided_slice %114 {offsets = [0, 8], sizes = [8, 8], strides = [1, 1]} : vector<8x32xf32> to vector<8x8xf32>
    %137 = vector.extract_strided_slice %115 {offsets = [0, 8], sizes = [8, 8], strides = [1, 1]} : vector<8x32xf32> to vector<8x8xf32>
    %138 = vector.extract_strided_slice %116 {offsets = [0, 8], sizes = [8, 8], strides = [1, 1]} : vector<8x32xf32> to vector<8x8xf32>
    %cst_44 = arith.constant dense<0.000000e+00> : vector<8x8xf32>
    %139 = tpu.matmul %136, %137, %cst_44 {dimension_numbers = #tpu.dot_dimension_numbers<[1], [1], [0], [0], [0, 0, 1, 0], [], []>} : vector<8x8xf32>, vector<8x8xf32>, vector<8x8xf32> -> vector<8x8xf32>
    %140 = vector.broadcast %117 : vector<1x8xf32> to vector<8x8xf32>
    %141 = arith.addf %139, %140 : vector<8x8xf32>
    %cst_45 = arith.constant dense<0xFF800000> : vector<8xf32>
    %142 = vector.multi_reduction <maximumf>, %141, %cst_45 [1] : vector<8x8xf32> to vector<8xf32>
    %143 = vector.shape_cast %142 : vector<8xf32> to vector<8x1xf32>
    %144 = vector.broadcast %143 : vector<8x1xf32> to vector<8x8xf32>
    %145 = arith.subf %141, %144 : vector<8x8xf32>
    %146 = math.exp %145 : vector<8x8xf32>
    %cst_46 = arith.constant dense<0.000000e+00> : vector<8xf32>
    %147 = vector.multi_reduction <add>, %146, %cst_46 [1] : vector<8x8xf32> to vector<8xf32>
    %148 = vector.shape_cast %147 : vector<8xf32> to vector<8x1xf32>
    %149 = vector.broadcast %148 : vector<8x1xf32> to vector<8x8xf32>
    %150 = arith.divf %146, %149 : vector<8x8xf32>
    %cst_47 = arith.constant dense<0.000000e+00> : vector<8x8xf32>
    %151 = tpu.matmul %150, %138, %cst_47 {dimension_numbers = #tpu.dot_dimension_numbers<[1], [0], [0], [1], [0, 0, 1, 1], [], []>} : vector<8x8xf32>, vector<8x8xf32>, vector<8x8xf32> -> vector<8x8xf32>
    %152 = vector.extract_strided_slice %34 {offsets = [8, 0], sizes = [8, 32], strides = [1, 1]} : vector<32x32xf32> to vector<8x32xf32>
    %cst_48 = arith.constant dense<0.000000e+00> : vector<8x32xf32>
    %153 = tpu.matmul %151, %152, %cst_48 {dimension_numbers = #tpu.dot_dimension_numbers<[1], [0], [0], [1], [0, 0, 1, 1], [], []>} : vector<8x8xf32>, vector<8x32xf32>, vector<8x32xf32> -> vector<8x32xf32>
    %154 = arith.addf %135, %153 : vector<8x32xf32>
    %155 = vector.extract_strided_slice %114 {offsets = [0, 16], sizes = [8, 8], strides = [1, 1]} : vector<8x32xf32> to vector<8x8xf32>
    %156 = vector.extract_strided_slice %115 {offsets = [0, 16], sizes = [8, 8], strides = [1, 1]} : vector<8x32xf32> to vector<8x8xf32>
    %157 = vector.extract_strided_slice %116 {offsets = [0, 16], sizes = [8, 8], strides = [1, 1]} : vector<8x32xf32> to vector<8x8xf32>
    %cst_49 = arith.constant dense<0.000000e+00> : vector<8x8xf32>
    %158 = tpu.matmul %155, %156, %cst_49 {dimension_numbers = #tpu.dot_dimension_numbers<[1], [1], [0], [0], [0, 0, 1, 0], [], []>} : vector<8x8xf32>, vector<8x8xf32>, vector<8x8xf32> -> vector<8x8xf32>
    %159 = vector.broadcast %117 : vector<1x8xf32> to vector<8x8xf32>
    %160 = arith.addf %158, %159 : vector<8x8xf32>
    %cst_50 = arith.constant dense<0xFF800000> : vector<8xf32>
    %161 = vector.multi_reduction <maximumf>, %160, %cst_50 [1] : vector<8x8xf32> to vector<8xf32>
    %162 = vector.shape_cast %161 : vector<8xf32> to vector<8x1xf32>
    %163 = vector.broadcast %162 : vector<8x1xf32> to vector<8x8xf32>
    %164 = arith.subf %160, %163 : vector<8x8xf32>
    %165 = math.exp %164 : vector<8x8xf32>
    %cst_51 = arith.constant dense<0.000000e+00> : vector<8xf32>
    %166 = vector.multi_reduction <add>, %165, %cst_51 [1] : vector<8x8xf32> to vector<8xf32>
    %167 = vector.shape_cast %166 : vector<8xf32> to vector<8x1xf32>
    %168 = vector.broadcast %167 : vector<8x1xf32> to vector<8x8xf32>
    %169 = arith.divf %165, %168 : vector<8x8xf32>
    %cst_52 = arith.constant dense<0.000000e+00> : vector<8x8xf32>
    %170 = tpu.matmul %169, %157, %cst_52 {dimension_numbers = #tpu.dot_dimension_numbers<[1], [0], [0], [1], [0, 0, 1, 1], [], []>} : vector<8x8xf32>, vector<8x8xf32>, vector<8x8xf32> -> vector<8x8xf32>
    %171 = vector.extract_strided_slice %34 {offsets = [16, 0], sizes = [8, 32], strides = [1, 1]} : vector<32x32xf32> to vector<8x32xf32>
    %cst_53 = arith.constant dense<0.000000e+00> : vector<8x32xf32>
    %172 = tpu.matmul %170, %171, %cst_53 {dimension_numbers = #tpu.dot_dimension_numbers<[1], [0], [0], [1], [0, 0, 1, 1], [], []>} : vector<8x8xf32>, vector<8x32xf32>, vector<8x32xf32> -> vector<8x32xf32>
    %173 = arith.addf %154, %172 : vector<8x32xf32>
    %174 = vector.extract_strided_slice %114 {offsets = [0, 24], sizes = [8, 8], strides = [1, 1]} : vector<8x32xf32> to vector<8x8xf32>
    %175 = vector.extract_strided_slice %115 {offsets = [0, 24], sizes = [8, 8], strides = [1, 1]} : vector<8x32xf32> to vector<8x8xf32>
    %176 = vector.extract_strided_slice %116 {offsets = [0, 24], sizes = [8, 8], strides = [1, 1]} : vector<8x32xf32> to vector<8x8xf32>
    %cst_54 = arith.constant dense<0.000000e+00> : vector<8x8xf32>
    %177 = tpu.matmul %174, %175, %cst_54 {dimension_numbers = #tpu.dot_dimension_numbers<[1], [1], [0], [0], [0, 0, 1, 0], [], []>} : vector<8x8xf32>, vector<8x8xf32>, vector<8x8xf32> -> vector<8x8xf32>
    %178 = vector.broadcast %117 : vector<1x8xf32> to vector<8x8xf32>
    %179 = arith.addf %177, %178 : vector<8x8xf32>
    %cst_55 = arith.constant dense<0xFF800000> : vector<8xf32>
    %180 = vector.multi_reduction <maximumf>, %179, %cst_55 [1] : vector<8x8xf32> to vector<8xf32>
    %181 = vector.shape_cast %180 : vector<8xf32> to vector<8x1xf32>
    %182 = vector.broadcast %181 : vector<8x1xf32> to vector<8x8xf32>
    %183 = arith.subf %179, %182 : vector<8x8xf32>
    %184 = math.exp %183 : vector<8x8xf32>
    %cst_56 = arith.constant dense<0.000000e+00> : vector<8xf32>
    %185 = vector.multi_reduction <add>, %184, %cst_56 [1] : vector<8x8xf32> to vector<8xf32>
    %186 = vector.shape_cast %185 : vector<8xf32> to vector<8x1xf32>
    %187 = vector.broadcast %186 : vector<8x1xf32> to vector<8x8xf32>
    %188 = arith.divf %184, %187 : vector<8x8xf32>
    %cst_57 = arith.constant dense<0.000000e+00> : vector<8x8xf32>
    %189 = tpu.matmul %188, %176, %cst_57 {dimension_numbers = #tpu.dot_dimension_numbers<[1], [0], [0], [1], [0, 0, 1, 1], [], []>} : vector<8x8xf32>, vector<8x8xf32>, vector<8x8xf32> -> vector<8x8xf32>
    %190 = vector.extract_strided_slice %34 {offsets = [24, 0], sizes = [8, 32], strides = [1, 1]} : vector<32x32xf32> to vector<8x32xf32>
    %cst_58 = arith.constant dense<0.000000e+00> : vector<8x32xf32>
    %191 = tpu.matmul %189, %190, %cst_58 {dimension_numbers = #tpu.dot_dimension_numbers<[1], [0], [0], [1], [0, 0, 1, 1], [], []>} : vector<8x8xf32>, vector<8x32xf32>, vector<8x32xf32> -> vector<8x32xf32>
    %192 = arith.addf %173, %191 : vector<8x32xf32>
    %193 = tpu.concatenate %113, %192 in 0 : vector<8x32xf32>, vector<8x32xf32> -> vector<16x32xf32>
    %c0_59 = arith.constant 0 : index
    %c0_60 = arith.constant 0 : index
    %194 = vector.load %arg8[%c0_59, %c0_60] : memref<1x32xf32, #tpu.memory_space<vmem>>, vector<1x32xf32>
    %195 = vector.broadcast %194 : vector<1x32xf32> to vector<16x32xf32>
    %196 = arith.addf %193, %195 : vector<16x32xf32>
    %197 = arith.addf %196, %22 : vector<16x32xf32>
    %c0_61 = arith.constant 0 : index
    %c0_62 = arith.constant 0 : index
    %198 = vector.load %arg9[%c0_61, %c0_62] : memref<1x32xf32, #tpu.memory_space<vmem>>, vector<1x32xf32>
    %c0_63 = arith.constant 0 : index
    %c0_64 = arith.constant 0 : index
    %199 = vector.load %arg10[%c0_63, %c0_64] : memref<1x32xf32, #tpu.memory_space<vmem>>, vector<1x32xf32>
    %cst_65 = arith.constant dense<0.000000e+00> : vector<16xf32>
    %200 = vector.multi_reduction <add>, %197, %cst_65 [1] : vector<16x32xf32> to vector<16xf32>
    %201 = vector.shape_cast %200 : vector<16xf32> to vector<16x1xf32>
    %cst_66 = arith.constant 3.200000e+01 : f32
    %202 = vector.broadcast %cst_66 : f32 to vector<16x1xf32>
    %203 = arith.divf %201, %202 : vector<16x1xf32>
    %204 = vector.broadcast %203 : vector<16x1xf32> to vector<16x32xf32>
    %205 = arith.subf %197, %204 : vector<16x32xf32>
    %206 = arith.mulf %205, %205 : vector<16x32xf32>
    %cst_67 = arith.constant dense<0.000000e+00> : vector<16xf32>
    %207 = vector.multi_reduction <add>, %206, %cst_67 [1] : vector<16x32xf32> to vector<16xf32>
    %208 = vector.shape_cast %207 : vector<16xf32> to vector<16x1xf32>
    %cst_68 = arith.constant 3.200000e+01 : f32
    %209 = vector.broadcast %cst_68 : f32 to vector<16x1xf32>
    %210 = arith.divf %208, %209 : vector<16x1xf32>
    %cst_69 = arith.constant 9.99999996E-13 : f32
    %211 = vector.broadcast %cst_69 : f32 to vector<16x1xf32>
    %212 = arith.addf %210, %211 : vector<16x1xf32>
    %213 = math.rsqrt %212 : vector<16x1xf32>
    %214 = vector.broadcast %213 : vector<16x1xf32> to vector<16x32xf32>
    %215 = arith.mulf %205, %214 : vector<16x32xf32>
    %216 = vector.broadcast %198 : vector<1x32xf32> to vector<16x32xf32>
    %217 = arith.mulf %215, %216 : vector<16x32xf32>
    %218 = vector.broadcast %199 : vector<1x32xf32> to vector<16x32xf32>
    %219 = arith.addf %217, %218 : vector<16x32xf32>
    %c0_70 = arith.constant 0 : index
    %c0_71 = arith.constant 0 : index
    %220 = vector.load %arg11[%c0_70, %c0_71] : memref<32x64xf32, #tpu.memory_space<vmem>>, vector<32x64xf32>
    %cst_72 = arith.constant dense<0.000000e+00> : vector<16x64xf32>
    %221 = tpu.matmul %219, %220, %cst_72 {dimension_numbers = #tpu.dot_dimension_numbers<[1], [0], [0], [1], [0, 0, 1, 1], [], []>} : vector<16x32xf32>, vector<32x64xf32>, vector<16x64xf32> -> vector<16x64xf32>
    %c0_73 = arith.constant 0 : index
    %c0_74 = arith.constant 0 : index
    %222 = vector.load %arg12[%c0_73, %c0_74] : memref<1x64xf32, #tpu.memory_space<vmem>>, vector<1x64xf32>
    %223 = vector.broadcast %222 : vector<1x64xf32> to vector<16x64xf32>
    %224 = arith.addf %221, %223 : vector<16x64xf32>
    %cst_75 = arith.constant 5.000000e-01 : f32
    %225 = vector.broadcast %cst_75 : f32 to vector<16x64xf32>
    %226 = arith.mulf %225, %224 : vector<16x64xf32>
    %cst_76 = arith.constant 4.471500e-02 : f32
    %227 = vector.broadcast %cst_76 : f32 to vector<16x64xf32>
    %228 = arith.mulf %227, %224 : vector<16x64xf32>
    %229 = arith.mulf %228, %224 : vector<16x64xf32>
    %230 = arith.mulf %229, %224 : vector<16x64xf32>
    %231 = arith.addf %224, %230 : vector<16x64xf32>
    %cst_77 = arith.constant 0.797884583 : f32
    %232 = vector.broadcast %cst_77 : f32 to vector<16x64xf32>
    %233 = arith.mulf %232, %231 : vector<16x64xf32>
    %234 = math.tanh %233 : vector<16x64xf32>
    %cst_78 = arith.constant 1.000000e+00 : f32
    %235 = vector.broadcast %cst_78 : f32 to vector<16x64xf32>
    %236 = arith.addf %235, %234 : vector<16x64xf32>
    %237 = arith.mulf %226, %236 : vector<16x64xf32>
    %c0_79 = arith.constant 0 : index
    %c0_80 = arith.constant 0 : index
    %238 = vector.load %arg13[%c0_79, %c0_80] : memref<64x32xf32, #tpu.memory_space<vmem>>, vector<64x32xf32>
    %cst_81 = arith.constant dense<0.000000e+00> : vector<16x32xf32>
    %239 = tpu.matmul %237, %238, %cst_81 {dimension_numbers = #tpu.dot_dimension_numbers<[1], [0], [0], [1], [0, 0, 1, 1], [], []>} : vector<16x64xf32>, vector<64x32xf32>, vector<16x32xf32> -> vector<16x32xf32>
    %c0_82 = arith.constant 0 : index
    %c0_83 = arith.constant 0 : index
    %240 = vector.load %arg14[%c0_82, %c0_83] : memref<1x32xf32, #tpu.memory_space<vmem>>, vector<1x32xf32>
    %241 = vector.broadcast %240 : vector<1x32xf32> to vector<16x32xf32>
    %242 = arith.addf %239, %241 : vector<16x32xf32>
    %243 = arith.addf %242, %219 : vector<16x32xf32>
    %c0_84 = arith.constant 0 : index
    %c0_85 = arith.constant 0 : index
    %244 = vector.load %arg15[%c0_84, %c0_85] : memref<1x32xf32, #tpu.memory_space<vmem>>, vector<1x32xf32>
    %c0_86 = arith.constant 0 : index
    %c0_87 = arith.constant 0 : index
    %245 = vector.load %arg16[%c0_86, %c0_87] : memref<1x32xf32, #tpu.memory_space<vmem>>, vector<1x32xf32>
    %cst_88 = arith.constant dense<0.000000e+00> : vector<16xf32>
    %246 = vector.multi_reduction <add>, %243, %cst_88 [1] : vector<16x32xf32> to vector<16xf32>
    %247 = vector.shape_cast %246 : vector<16xf32> to vector<16x1xf32>
    %cst_89 = arith.constant 3.200000e+01 : f32
    %248 = vector.broadcast %cst_89 : f32 to vector<16x1xf32>
    %249 = arith.divf %247, %248 : vector<16x1xf32>
    %250 = vector.broadcast %249 : vector<16x1xf32> to vector<16x32xf32>
    %251 = arith.subf %243, %250 : vector<16x32xf32>
    %252 = arith.mulf %251, %251 : vector<16x32xf32>
    %cst_90 = arith.constant dense<0.000000e+00> : vector<16xf32>
    %253 = vector.multi_reduction <add>, %252, %cst_90 [1] : vector<16x32xf32> to vector<16xf32>
    %254 = vector.shape_cast %253 : vector<16xf32> to vector<16x1xf32>
    %cst_91 = arith.constant 3.200000e+01 : f32
    %255 = vector.broadcast %cst_91 : f32 to vector<16x1xf32>
    %256 = arith.divf %254, %255 : vector<16x1xf32>
    %cst_92 = arith.constant 9.99999996E-13 : f32
    %257 = vector.broadcast %cst_92 : f32 to vector<16x1xf32>
    %258 = arith.addf %256, %257 : vector<16x1xf32>
    %259 = math.rsqrt %258 : vector<16x1xf32>
    %260 = vector.broadcast %259 : vector<16x1xf32> to vector<16x32xf32>
    %261 = arith.mulf %251, %260 : vector<16x32xf32>
    %262 = vector.broadcast %244 : vector<1x32xf32> to vector<16x32xf32>
    %263 = arith.mulf %261, %262 : vector<16x32xf32>
    %264 = vector.broadcast %245 : vector<1x32xf32> to vector<16x32xf32>
    %265 = arith.addf %263, %264 : vector<16x32xf32>
    %c0_93 = arith.constant 0 : index
    %c0_94 = arith.constant 0 : index
    %266 = vector.load %arg17[%c0_93, %c0_94] : memref<32x96xf32, #tpu.memory_space<vmem>>, vector<32x96xf32>
    %cst_95 = arith.constant dense<0.000000e+00> : vector<16x96xf32>
    %267 = tpu.matmul %265, %266, %cst_95 {dimension_numbers = #tpu.dot_dimension_numbers<[1], [0], [0], [1], [0, 0, 1, 1], [], []>} : vector<16x32xf32>, vector<32x96xf32>, vector<16x96xf32> -> vector<16x96xf32>
    %c0_96 = arith.constant 0 : index
    %c0_97 = arith.constant 0 : index
    %268 = vector.load %arg18[%c0_96, %c0_97] : memref<1x96xf32, #tpu.memory_space<vmem>>, vector<1x96xf32>
    %269 = vector.broadcast %268 : vector<1x96xf32> to vector<16x96xf32>
    %270 = arith.addf %267, %269 : vector<16x96xf32>
    %271 = vector.extract_strided_slice %270 {offsets = [0, 0], sizes = [16, 32], strides = [1, 1]} : vector<16x96xf32> to vector<16x32xf32>
    %cst_98 = arith.constant 0.353553385 : f32
    %272 = vector.broadcast %cst_98 : f32 to vector<16x32xf32>
    %273 = arith.mulf %271, %272 : vector<16x32xf32>
    %274 = vector.extract_strided_slice %270 {offsets = [0, 32], sizes = [16, 32], strides = [1, 1]} : vector<16x96xf32> to vector<16x32xf32>
    %275 = vector.extract_strided_slice %270 {offsets = [0, 64], sizes = [16, 32], strides = [1, 1]} : vector<16x96xf32> to vector<16x32xf32>
    %c0_99 = arith.constant 0 : index
    %c0_100 = arith.constant 0 : index
    %276 = vector.load %arg19[%c0_99, %c0_100] : memref<32x32xf32, #tpu.memory_space<vmem>>, vector<32x32xf32>
    %277 = vector.extract_strided_slice %273 {offsets = [0, 0], sizes = [8, 32], strides = [1, 1]} : vector<16x32xf32> to vector<8x32xf32>
    %278 = vector.extract_strided_slice %274 {offsets = [0, 0], sizes = [8, 32], strides = [1, 1]} : vector<16x32xf32> to vector<8x32xf32>
    %279 = vector.extract_strided_slice %275 {offsets = [0, 0], sizes = [8, 32], strides = [1, 1]} : vector<16x32xf32> to vector<8x32xf32>
    %280 = vector.extract_strided_slice %23 {offsets = [0, 0], sizes = [1, 8], strides = [1, 1]} : vector<2x8xf32> to vector<1x8xf32>
    %281 = vector.extract_strided_slice %277 {offsets = [0, 0], sizes = [8, 8], strides = [1, 1]} : vector<8x32xf32> to vector<8x8xf32>
    %282 = vector.extract_strided_slice %278 {offsets = [0, 0], sizes = [8, 8], strides = [1, 1]} : vector<8x32xf32> to vector<8x8xf32>
    %283 = vector.extract_strided_slice %279 {offsets = [0, 0], sizes = [8, 8], strides = [1, 1]} : vector<8x32xf32> to vector<8x8xf32>
    %cst_101 = arith.constant dense<0.000000e+00> : vector<8x8xf32>
    %284 = tpu.matmul %281, %282, %cst_101 {dimension_numbers = #tpu.dot_dimension_numbers<[1], [1], [0], [0], [0, 0, 1, 0], [], []>} : vector<8x8xf32>, vector<8x8xf32>, vector<8x8xf32> -> vector<8x8xf32>
    %285 = vector.broadcast %280 : vector<1x8xf32> to vector<8x8xf32>
    %286 = arith.addf %284, %285 : vector<8x8xf32>
    %cst_102 = arith.constant dense<0xFF800000> : vector<8xf32>
    %287 = vector.multi_reduction <maximumf>, %286, %cst_102 [1] : vector<8x8xf32> to vector<8xf32>
    %288 = vector.shape_cast %287 : vector<8xf32> to vector<8x1xf32>
    %289 = vector.broadcast %288 : vector<8x1xf32> to vector<8x8xf32>
    %290 = arith.subf %286, %289 : vector<8x8xf32>
    %291 = math.exp %290 : vector<8x8xf32>
    %cst_103 = arith.constant dense<0.000000e+00> : vector<8xf32>
    %292 = vector.multi_reduction <add>, %291, %cst_103 [1] : vector<8x8xf32> to vector<8xf32>
    %293 = vector.shape_cast %292 : vector<8xf32> to vector<8x1xf32>
    %294 = vector.broadcast %293 : vector<8x1xf32> to vector<8x8xf32>
    %295 = arith.divf %291, %294 : vector<8x8xf32>
    %cst_104 = arith.constant dense<0.000000e+00> : vector<8x8xf32>
    %296 = tpu.matmul %295, %283, %cst_104 {dimension_numbers = #tpu.dot_dimension_numbers<[1], [0], [0], [1], [0, 0, 1, 1], [], []>} : vector<8x8xf32>, vector<8x8xf32>, vector<8x8xf32> -> vector<8x8xf32>
    %297 = vector.extract_strided_slice %276 {offsets = [0, 0], sizes = [8, 32], strides = [1, 1]} : vector<32x32xf32> to vector<8x32xf32>
    %cst_105 = arith.constant dense<0.000000e+00> : vector<8x32xf32>
    %298 = tpu.matmul %296, %297, %cst_105 {dimension_numbers = #tpu.dot_dimension_numbers<[1], [0], [0], [1], [0, 0, 1, 1], [], []>} : vector<8x8xf32>, vector<8x32xf32>, vector<8x32xf32> -> vector<8x32xf32>
    %299 = vector.extract_strided_slice %277 {offsets = [0, 8], sizes = [8, 8], strides = [1, 1]} : vector<8x32xf32> to vector<8x8xf32>
    %300 = vector.extract_strided_slice %278 {offsets = [0, 8], sizes = [8, 8], strides = [1, 1]} : vector<8x32xf32> to vector<8x8xf32>
    %301 = vector.extract_strided_slice %279 {offsets = [0, 8], sizes = [8, 8], strides = [1, 1]} : vector<8x32xf32> to vector<8x8xf32>
    %cst_106 = arith.constant dense<0.000000e+00> : vector<8x8xf32>
    %302 = tpu.matmul %299, %300, %cst_106 {dimension_numbers = #tpu.dot_dimension_numbers<[1], [1], [0], [0], [0, 0, 1, 0], [], []>} : vector<8x8xf32>, vector<8x8xf32>, vector<8x8xf32> -> vector<8x8xf32>
    %303 = vector.broadcast %280 : vector<1x8xf32> to vector<8x8xf32>
    %304 = arith.addf %302, %303 : vector<8x8xf32>
    %cst_107 = arith.constant dense<0xFF800000> : vector<8xf32>
    %305 = vector.multi_reduction <maximumf>, %304, %cst_107 [1] : vector<8x8xf32> to vector<8xf32>
    %306 = vector.shape_cast %305 : vector<8xf32> to vector<8x1xf32>
    %307 = vector.broadcast %306 : vector<8x1xf32> to vector<8x8xf32>
    %308 = arith.subf %304, %307 : vector<8x8xf32>
    %309 = math.exp %308 : vector<8x8xf32>
    %cst_108 = arith.constant dense<0.000000e+00> : vector<8xf32>
    %310 = vector.multi_reduction <add>, %309, %cst_108 [1] : vector<8x8xf32> to vector<8xf32>
    %311 = vector.shape_cast %310 : vector<8xf32> to vector<8x1xf32>
    %312 = vector.broadcast %311 : vector<8x1xf32> to vector<8x8xf32>
    %313 = arith.divf %309, %312 : vector<8x8xf32>
    %cst_109 = arith.constant dense<0.000000e+00> : vector<8x8xf32>
    %314 = tpu.matmul %313, %301, %cst_109 {dimension_numbers = #tpu.dot_dimension_numbers<[1], [0], [0], [1], [0, 0, 1, 1], [], []>} : vector<8x8xf32>, vector<8x8xf32>, vector<8x8xf32> -> vector<8x8xf32>
    %315 = vector.extract_strided_slice %276 {offsets = [8, 0], sizes = [8, 32], strides = [1, 1]} : vector<32x32xf32> to vector<8x32xf32>
    %cst_110 = arith.constant dense<0.000000e+00> : vector<8x32xf32>
    %316 = tpu.matmul %314, %315, %cst_110 {dimension_numbers = #tpu.dot_dimension_numbers<[1], [0], [0], [1], [0, 0, 1, 1], [], []>} : vector<8x8xf32>, vector<8x32xf32>, vector<8x32xf32> -> vector<8x32xf32>
    %317 = arith.addf %298, %316 : vector<8x32xf32>
    %318 = vector.extract_strided_slice %277 {offsets = [0, 16], sizes = [8, 8], strides = [1, 1]} : vector<8x32xf32> to vector<8x8xf32>
    %319 = vector.extract_strided_slice %278 {offsets = [0, 16], sizes = [8, 8], strides = [1, 1]} : vector<8x32xf32> to vector<8x8xf32>
    %320 = vector.extract_strided_slice %279 {offsets = [0, 16], sizes = [8, 8], strides = [1, 1]} : vector<8x32xf32> to vector<8x8xf32>
    %cst_111 = arith.constant dense<0.000000e+00> : vector<8x8xf32>
    %321 = tpu.matmul %318, %319, %cst_111 {dimension_numbers = #tpu.dot_dimension_numbers<[1], [1], [0], [0], [0, 0, 1, 0], [], []>} : vector<8x8xf32>, vector<8x8xf32>, vector<8x8xf32> -> vector<8x8xf32>
    %322 = vector.broadcast %280 : vector<1x8xf32> to vector<8x8xf32>
    %323 = arith.addf %321, %322 : vector<8x8xf32>
    %cst_112 = arith.constant dense<0xFF800000> : vector<8xf32>
    %324 = vector.multi_reduction <maximumf>, %323, %cst_112 [1] : vector<8x8xf32> to vector<8xf32>
    %325 = vector.shape_cast %324 : vector<8xf32> to vector<8x1xf32>
    %326 = vector.broadcast %325 : vector<8x1xf32> to vector<8x8xf32>
    %327 = arith.subf %323, %326 : vector<8x8xf32>
    %328 = math.exp %327 : vector<8x8xf32>
    %cst_113 = arith.constant dense<0.000000e+00> : vector<8xf32>
    %329 = vector.multi_reduction <add>, %328, %cst_113 [1] : vector<8x8xf32> to vector<8xf32>
    %330 = vector.shape_cast %329 : vector<8xf32> to vector<8x1xf32>
    %331 = vector.broadcast %330 : vector<8x1xf32> to vector<8x8xf32>
    %332 = arith.divf %328, %331 : vector<8x8xf32>
    %cst_114 = arith.constant dense<0.000000e+00> : vector<8x8xf32>
    %333 = tpu.matmul %332, %320, %cst_114 {dimension_numbers = #tpu.dot_dimension_numbers<[1], [0], [0], [1], [0, 0, 1, 1], [], []>} : vector<8x8xf32>, vector<8x8xf32>, vector<8x8xf32> -> vector<8x8xf32>
    %334 = vector.extract_strided_slice %276 {offsets = [16, 0], sizes = [8, 32], strides = [1, 1]} : vector<32x32xf32> to vector<8x32xf32>
    %cst_115 = arith.constant dense<0.000000e+00> : vector<8x32xf32>
    %335 = tpu.matmul %333, %334, %cst_115 {dimension_numbers = #tpu.dot_dimension_numbers<[1], [0], [0], [1], [0, 0, 1, 1], [], []>} : vector<8x8xf32>, vector<8x32xf32>, vector<8x32xf32> -> vector<8x32xf32>
    %336 = arith.addf %317, %335 : vector<8x32xf32>
    %337 = vector.extract_strided_slice %277 {offsets = [0, 24], sizes = [8, 8], strides = [1, 1]} : vector<8x32xf32> to vector<8x8xf32>
    %338 = vector.extract_strided_slice %278 {offsets = [0, 24], sizes = [8, 8], strides = [1, 1]} : vector<8x32xf32> to vector<8x8xf32>
    %339 = vector.extract_strided_slice %279 {offsets = [0, 24], sizes = [8, 8], strides = [1, 1]} : vector<8x32xf32> to vector<8x8xf32>
    %cst_116 = arith.constant dense<0.000000e+00> : vector<8x8xf32>
    %340 = tpu.matmul %337, %338, %cst_116 {dimension_numbers = #tpu.dot_dimension_numbers<[1], [1], [0], [0], [0, 0, 1, 0], [], []>} : vector<8x8xf32>, vector<8x8xf32>, vector<8x8xf32> -> vector<8x8xf32>
    %341 = vector.broadcast %280 : vector<1x8xf32> to vector<8x8xf32>
    %342 = arith.addf %340, %341 : vector<8x8xf32>
    %cst_117 = arith.constant dense<0xFF800000> : vector<8xf32>
    %343 = vector.multi_reduction <maximumf>, %342, %cst_117 [1] : vector<8x8xf32> to vector<8xf32>
    %344 = vector.shape_cast %343 : vector<8xf32> to vector<8x1xf32>
    %345 = vector.broadcast %344 : vector<8x1xf32> to vector<8x8xf32>
    %346 = arith.subf %342, %345 : vector<8x8xf32>
    %347 = math.exp %346 : vector<8x8xf32>
    %cst_118 = arith.constant dense<0.000000e+00> : vector<8xf32>
    %348 = vector.multi_reduction <add>, %347, %cst_118 [1] : vector<8x8xf32> to vector<8xf32>
    %349 = vector.shape_cast %348 : vector<8xf32> to vector<8x1xf32>
    %350 = vector.broadcast %349 : vector<8x1xf32> to vector<8x8xf32>
    %351 = arith.divf %347, %350 : vector<8x8xf32>
    %cst_119 = arith.constant dense<0.000000e+00> : vector<8x8xf32>
    %352 = tpu.matmul %351, %339, %cst_119 {dimension_numbers = #tpu.dot_dimension_numbers<[1], [0], [0], [1], [0, 0, 1, 1], [], []>} : vector<8x8xf32>, vector<8x8xf32>, vector<8x8xf32> -> vector<8x8xf32>
    %353 = vector.extract_strided_slice %276 {offsets = [24, 0], sizes = [8, 32], strides = [1, 1]} : vector<32x32xf32> to vector<8x32xf32>
    %cst_120 = arith.constant dense<0.000000e+00> : vector<8x32xf32>
    %354 = tpu.matmul %352, %353, %cst_120 {dimension_numbers = #tpu.dot_dimension_numbers<[1], [0], [0], [1], [0, 0, 1, 1], [], []>} : vector<8x8xf32>, vector<8x32xf32>, vector<8x32xf32> -> vector<8x32xf32>
    %355 = arith.addf %336, %354 : vector<8x32xf32>
    %356 = vector.extract_strided_slice %273 {offsets = [8, 0], sizes = [8, 32], strides = [1, 1]} : vector<16x32xf32> to vector<8x32xf32>
    %357 = vector.extract_strided_slice %274 {offsets = [8, 0], sizes = [8, 32], strides = [1, 1]} : vector<16x32xf32> to vector<8x32xf32>
    %358 = vector.extract_strided_slice %275 {offsets = [8, 0], sizes = [8, 32], strides = [1, 1]} : vector<16x32xf32> to vector<8x32xf32>
    %359 = vector.extract_strided_slice %23 {offsets = [1, 0], sizes = [1, 8], strides = [1, 1]} : vector<2x8xf32> to vector<1x8xf32>
    %360 = vector.extract_strided_slice %356 {offsets = [0, 0], sizes = [8, 8], strides = [1, 1]} : vector<8x32xf32> to vector<8x8xf32>
    %361 = vector.extract_strided_slice %357 {offsets = [0, 0], sizes = [8, 8], strides = [1, 1]} : vector<8x32xf32> to vector<8x8xf32>
    %362 = vector.extract_strided_slice %358 {offsets = [0, 0], sizes = [8, 8], strides = [1, 1]} : vector<8x32xf32> to vector<8x8xf32>
    %cst_121 = arith.constant dense<0.000000e+00> : vector<8x8xf32>
    %363 = tpu.matmul %360, %361, %cst_121 {dimension_numbers = #tpu.dot_dimension_numbers<[1], [1], [0], [0], [0, 0, 1, 0], [], []>} : vector<8x8xf32>, vector<8x8xf32>, vector<8x8xf32> -> vector<8x8xf32>
    %364 = vector.broadcast %359 : vector<1x8xf32> to vector<8x8xf32>
    %365 = arith.addf %363, %364 : vector<8x8xf32>
    %cst_122 = arith.constant dense<0xFF800000> : vector<8xf32>
    %366 = vector.multi_reduction <maximumf>, %365, %cst_122 [1] : vector<8x8xf32> to vector<8xf32>
    %367 = vector.shape_cast %366 : vector<8xf32> to vector<8x1xf32>
    %368 = vector.broadcast %367 : vector<8x1xf32> to vector<8x8xf32>
    %369 = arith.subf %365, %368 : vector<8x8xf32>
    %370 = math.exp %369 : vector<8x8xf32>
    %cst_123 = arith.constant dense<0.000000e+00> : vector<8xf32>
    %371 = vector.multi_reduction <add>, %370, %cst_123 [1] : vector<8x8xf32> to vector<8xf32>
    %372 = vector.shape_cast %371 : vector<8xf32> to vector<8x1xf32>
    %373 = vector.broadcast %372 : vector<8x1xf32> to vector<8x8xf32>
    %374 = arith.divf %370, %373 : vector<8x8xf32>
    %cst_124 = arith.constant dense<0.000000e+00> : vector<8x8xf32>
    %375 = tpu.matmul %374, %362, %cst_124 {dimension_numbers = #tpu.dot_dimension_numbers<[1], [0], [0], [1], [0, 0, 1, 1], [], []>} : vector<8x8xf32>, vector<8x8xf32>, vector<8x8xf32> -> vector<8x8xf32>
    %376 = vector.extract_strided_slice %276 {offsets = [0, 0], sizes = [8, 32], strides = [1, 1]} : vector<32x32xf32> to vector<8x32xf32>
    %cst_125 = arith.constant dense<0.000000e+00> : vector<8x32xf32>
    %377 = tpu.matmul %375, %376, %cst_125 {dimension_numbers = #tpu.dot_dimension_numbers<[1], [0], [0], [1], [0, 0, 1, 1], [], []>} : vector<8x8xf32>, vector<8x32xf32>, vector<8x32xf32> -> vector<8x32xf32>
    %378 = vector.extract_strided_slice %356 {offsets = [0, 8], sizes = [8, 8], strides = [1, 1]} : vector<8x32xf32> to vector<8x8xf32>
    %379 = vector.extract_strided_slice %357 {offsets = [0, 8], sizes = [8, 8], strides = [1, 1]} : vector<8x32xf32> to vector<8x8xf32>
    %380 = vector.extract_strided_slice %358 {offsets = [0, 8], sizes = [8, 8], strides = [1, 1]} : vector<8x32xf32> to vector<8x8xf32>
    %cst_126 = arith.constant dense<0.000000e+00> : vector<8x8xf32>
    %381 = tpu.matmul %378, %379, %cst_126 {dimension_numbers = #tpu.dot_dimension_numbers<[1], [1], [0], [0], [0, 0, 1, 0], [], []>} : vector<8x8xf32>, vector<8x8xf32>, vector<8x8xf32> -> vector<8x8xf32>
    %382 = vector.broadcast %359 : vector<1x8xf32> to vector<8x8xf32>
    %383 = arith.addf %381, %382 : vector<8x8xf32>
    %cst_127 = arith.constant dense<0xFF800000> : vector<8xf32>
    %384 = vector.multi_reduction <maximumf>, %383, %cst_127 [1] : vector<8x8xf32> to vector<8xf32>
    %385 = vector.shape_cast %384 : vector<8xf32> to vector<8x1xf32>
    %386 = vector.broadcast %385 : vector<8x1xf32> to vector<8x8xf32>
    %387 = arith.subf %383, %386 : vector<8x8xf32>
    %388 = math.exp %387 : vector<8x8xf32>
    %cst_128 = arith.constant dense<0.000000e+00> : vector<8xf32>
    %389 = vector.multi_reduction <add>, %388, %cst_128 [1] : vector<8x8xf32> to vector<8xf32>
    %390 = vector.shape_cast %389 : vector<8xf32> to vector<8x1xf32>
    %391 = vector.broadcast %390 : vector<8x1xf32> to vector<8x8xf32>
    %392 = arith.divf %388, %391 : vector<8x8xf32>
    %cst_129 = arith.constant dense<0.000000e+00> : vector<8x8xf32>
    %393 = tpu.matmul %392, %380, %cst_129 {dimension_numbers = #tpu.dot_dimension_numbers<[1], [0], [0], [1], [0, 0, 1, 1], [], []>} : vector<8x8xf32>, vector<8x8xf32>, vector<8x8xf32> -> vector<8x8xf32>
    %394 = vector.extract_strided_slice %276 {offsets = [8, 0], sizes = [8, 32], strides = [1, 1]} : vector<32x32xf32> to vector<8x32xf32>
    %cst_130 = arith.constant dense<0.000000e+00> : vector<8x32xf32>
    %395 = tpu.matmul %393, %394, %cst_130 {dimension_numbers = #tpu.dot_dimension_numbers<[1], [0], [0], [1], [0, 0, 1, 1], [], []>} : vector<8x8xf32>, vector<8x32xf32>, vector<8x32xf32> -> vector<8x32xf32>
    %396 = arith.addf %377, %395 : vector<8x32xf32>
    %397 = vector.extract_strided_slice %356 {offsets = [0, 16], sizes = [8, 8], strides = [1, 1]} : vector<8x32xf32> to vector<8x8xf32>
    %398 = vector.extract_strided_slice %357 {offsets = [0, 16], sizes = [8, 8], strides = [1, 1]} : vector<8x32xf32> to vector<8x8xf32>
    %399 = vector.extract_strided_slice %358 {offsets = [0, 16], sizes = [8, 8], strides = [1, 1]} : vector<8x32xf32> to vector<8x8xf32>
    %cst_131 = arith.constant dense<0.000000e+00> : vector<8x8xf32>
    %400 = tpu.matmul %397, %398, %cst_131 {dimension_numbers = #tpu.dot_dimension_numbers<[1], [1], [0], [0], [0, 0, 1, 0], [], []>} : vector<8x8xf32>, vector<8x8xf32>, vector<8x8xf32> -> vector<8x8xf32>
    %401 = vector.broadcast %359 : vector<1x8xf32> to vector<8x8xf32>
    %402 = arith.addf %400, %401 : vector<8x8xf32>
    %cst_132 = arith.constant dense<0xFF800000> : vector<8xf32>
    %403 = vector.multi_reduction <maximumf>, %402, %cst_132 [1] : vector<8x8xf32> to vector<8xf32>
    %404 = vector.shape_cast %403 : vector<8xf32> to vector<8x1xf32>
    %405 = vector.broadcast %404 : vector<8x1xf32> to vector<8x8xf32>
    %406 = arith.subf %402, %405 : vector<8x8xf32>
    %407 = math.exp %406 : vector<8x8xf32>
    %cst_133 = arith.constant dense<0.000000e+00> : vector<8xf32>
    %408 = vector.multi_reduction <add>, %407, %cst_133 [1] : vector<8x8xf32> to vector<8xf32>
    %409 = vector.shape_cast %408 : vector<8xf32> to vector<8x1xf32>
    %410 = vector.broadcast %409 : vector<8x1xf32> to vector<8x8xf32>
    %411 = arith.divf %407, %410 : vector<8x8xf32>
    %cst_134 = arith.constant dense<0.000000e+00> : vector<8x8xf32>
    %412 = tpu.matmul %411, %399, %cst_134 {dimension_numbers = #tpu.dot_dimension_numbers<[1], [0], [0], [1], [0, 0, 1, 1], [], []>} : vector<8x8xf32>, vector<8x8xf32>, vector<8x8xf32> -> vector<8x8xf32>
    %413 = vector.extract_strided_slice %276 {offsets = [16, 0], sizes = [8, 32], strides = [1, 1]} : vector<32x32xf32> to vector<8x32xf32>
    %cst_135 = arith.constant dense<0.000000e+00> : vector<8x32xf32>
    %414 = tpu.matmul %412, %413, %cst_135 {dimension_numbers = #tpu.dot_dimension_numbers<[1], [0], [0], [1], [0, 0, 1, 1], [], []>} : vector<8x8xf32>, vector<8x32xf32>, vector<8x32xf32> -> vector<8x32xf32>
    %415 = arith.addf %396, %414 : vector<8x32xf32>
    %416 = vector.extract_strided_slice %356 {offsets = [0, 24], sizes = [8, 8], strides = [1, 1]} : vector<8x32xf32> to vector<8x8xf32>
    %417 = vector.extract_strided_slice %357 {offsets = [0, 24], sizes = [8, 8], strides = [1, 1]} : vector<8x32xf32> to vector<8x8xf32>
    %418 = vector.extract_strided_slice %358 {offsets = [0, 24], sizes = [8, 8], strides = [1, 1]} : vector<8x32xf32> to vector<8x8xf32>
    %cst_136 = arith.constant dense<0.000000e+00> : vector<8x8xf32>
    %419 = tpu.matmul %416, %417, %cst_136 {dimension_numbers = #tpu.dot_dimension_numbers<[1], [1], [0], [0], [0, 0, 1, 0], [], []>} : vector<8x8xf32>, vector<8x8xf32>, vector<8x8xf32> -> vector<8x8xf32>
    %420 = vector.broadcast %359 : vector<1x8xf32> to vector<8x8xf32>
    %421 = arith.addf %419, %420 : vector<8x8xf32>
    %cst_137 = arith.constant dense<0xFF800000> : vector<8xf32>
    %422 = vector.multi_reduction <maximumf>, %421, %cst_137 [1] : vector<8x8xf32> to vector<8xf32>
    %423 = vector.shape_cast %422 : vector<8xf32> to vector<8x1xf32>
    %424 = vector.broadcast %423 : vector<8x1xf32> to vector<8x8xf32>
    %425 = arith.subf %421, %424 : vector<8x8xf32>
    %426 = math.exp %425 : vector<8x8xf32>
    %cst_138 = arith.constant dense<0.000000e+00> : vector<8xf32>
    %427 = vector.multi_reduction <add>, %426, %cst_138 [1] : vector<8x8xf32> to vector<8xf32>
    %428 = vector.shape_cast %427 : vector<8xf32> to vector<8x1xf32>
    %429 = vector.broadcast %428 : vector<8x1xf32> to vector<8x8xf32>
    %430 = arith.divf %426, %429 : vector<8x8xf32>
    %cst_139 = arith.constant dense<0.000000e+00> : vector<8x8xf32>
    %431 = tpu.matmul %430, %418, %cst_139 {dimension_numbers = #tpu.dot_dimension_numbers<[1], [0], [0], [1], [0, 0, 1, 1], [], []>} : vector<8x8xf32>, vector<8x8xf32>, vector<8x8xf32> -> vector<8x8xf32>
    %432 = vector.extract_strided_slice %276 {offsets = [24, 0], sizes = [8, 32], strides = [1, 1]} : vector<32x32xf32> to vector<8x32xf32>
    %cst_140 = arith.constant dense<0.000000e+00> : vector<8x32xf32>
    %433 = tpu.matmul %431, %432, %cst_140 {dimension_numbers = #tpu.dot_dimension_numbers<[1], [0], [0], [1], [0, 0, 1, 1], [], []>} : vector<8x8xf32>, vector<8x32xf32>, vector<8x32xf32> -> vector<8x32xf32>
    %434 = arith.addf %415, %433 : vector<8x32xf32>
    %435 = tpu.concatenate %355, %434 in 0 : vector<8x32xf32>, vector<8x32xf32> -> vector<16x32xf32>
    %c0_141 = arith.constant 0 : index
    %c0_142 = arith.constant 0 : index
    %436 = vector.load %arg20[%c0_141, %c0_142] : memref<1x32xf32, #tpu.memory_space<vmem>>, vector<1x32xf32>
    %437 = vector.broadcast %436 : vector<1x32xf32> to vector<16x32xf32>
    %438 = arith.addf %435, %437 : vector<16x32xf32>
    %439 = arith.addf %438, %265 : vector<16x32xf32>
    %c0_143 = arith.constant 0 : index
    %c0_144 = arith.constant 0 : index
    %440 = vector.load %arg21[%c0_143, %c0_144] : memref<1x32xf32, #tpu.memory_space<vmem>>, vector<1x32xf32>
    %c0_145 = arith.constant 0 : index
    %c0_146 = arith.constant 0 : index
    %441 = vector.load %arg22[%c0_145, %c0_146] : memref<1x32xf32, #tpu.memory_space<vmem>>, vector<1x32xf32>
    %cst_147 = arith.constant dense<0.000000e+00> : vector<16xf32>
    %442 = vector.multi_reduction <add>, %439, %cst_147 [1] : vector<16x32xf32> to vector<16xf32>
    %443 = vector.shape_cast %442 : vector<16xf32> to vector<16x1xf32>
    %cst_148 = arith.constant 3.200000e+01 : f32
    %444 = vector.broadcast %cst_148 : f32 to vector<16x1xf32>
    %445 = arith.divf %443, %444 : vector<16x1xf32>
    %446 = vector.broadcast %445 : vector<16x1xf32> to vector<16x32xf32>
    %447 = arith.subf %439, %446 : vector<16x32xf32>
    %448 = arith.mulf %447, %447 : vector<16x32xf32>
    %cst_149 = arith.constant dense<0.000000e+00> : vector<16xf32>
    %449 = vector.multi_reduction <add>, %448, %cst_149 [1] : vector<16x32xf32> to vector<16xf32>
    %450 = vector.shape_cast %449 : vector<16xf32> to vector<16x1xf32>
    %cst_150 = arith.constant 3.200000e+01 : f32
    %451 = vector.broadcast %cst_150 : f32 to vector<16x1xf32>
    %452 = arith.divf %450, %451 : vector<16x1xf32>
    %cst_151 = arith.constant 9.99999996E-13 : f32
    %453 = vector.broadcast %cst_151 : f32 to vector<16x1xf32>
    %454 = arith.addf %452, %453 : vector<16x1xf32>
    %455 = math.rsqrt %454 : vector<16x1xf32>
    %456 = vector.broadcast %455 : vector<16x1xf32> to vector<16x32xf32>
    %457 = arith.mulf %447, %456 : vector<16x32xf32>
    %458 = vector.broadcast %440 : vector<1x32xf32> to vector<16x32xf32>
    %459 = arith.mulf %457, %458 : vector<16x32xf32>
    %460 = vector.broadcast %441 : vector<1x32xf32> to vector<16x32xf32>
    %461 = arith.addf %459, %460 : vector<16x32xf32>
    %c0_152 = arith.constant 0 : index
    %c0_153 = arith.constant 0 : index
    %462 = vector.load %arg23[%c0_152, %c0_153] : memref<32x64xf32, #tpu.memory_space<vmem>>, vector<32x64xf32>
    %cst_154 = arith.constant dense<0.000000e+00> : vector<16x64xf32>
    %463 = tpu.matmul %461, %462, %cst_154 {dimension_numbers = #tpu.dot_dimension_numbers<[1], [0], [0], [1], [0, 0, 1, 1], [], []>} : vector<16x32xf32>, vector<32x64xf32>, vector<16x64xf32> -> vector<16x64xf32>
    %c0_155 = arith.constant 0 : index
    %c0_156 = arith.constant 0 : index
    %464 = vector.load %arg24[%c0_155, %c0_156] : memref<1x64xf32, #tpu.memory_space<vmem>>, vector<1x64xf32>
    %465 = vector.broadcast %464 : vector<1x64xf32> to vector<16x64xf32>
    %466 = arith.addf %463, %465 : vector<16x64xf32>
    %cst_157 = arith.constant 5.000000e-01 : f32
    %467 = vector.broadcast %cst_157 : f32 to vector<16x64xf32>
    %468 = arith.mulf %467, %466 : vector<16x64xf32>
    %cst_158 = arith.constant 4.471500e-02 : f32
    %469 = vector.broadcast %cst_158 : f32 to vector<16x64xf32>
    %470 = arith.mulf %469, %466 : vector<16x64xf32>
    %471 = arith.mulf %470, %466 : vector<16x64xf32>
    %472 = arith.mulf %471, %466 : vector<16x64xf32>
    %473 = arith.addf %466, %472 : vector<16x64xf32>
    %cst_159 = arith.constant 0.797884583 : f32
    %474 = vector.broadcast %cst_159 : f32 to vector<16x64xf32>
    %475 = arith.mulf %474, %473 : vector<16x64xf32>
    %476 = math.tanh %475 : vector<16x64xf32>
    %cst_160 = arith.constant 1.000000e+00 : f32
    %477 = vector.broadcast %cst_160 : f32 to vector<16x64xf32>
    %478 = arith.addf %477, %476 : vector<16x64xf32>
    %479 = arith.mulf %468, %478 : vector<16x64xf32>
    %c0_161 = arith.constant 0 : index
    %c0_162 = arith.constant 0 : index
    %480 = vector.load %arg25[%c0_161, %c0_162] : memref<64x32xf32, #tpu.memory_space<vmem>>, vector<64x32xf32>
    %cst_163 = arith.constant dense<0.000000e+00> : vector<16x32xf32>
    %481 = tpu.matmul %479, %480, %cst_163 {dimension_numbers = #tpu.dot_dimension_numbers<[1], [0], [0], [1], [0, 0, 1, 1], [], []>} : vector<16x64xf32>, vector<64x32xf32>, vector<16x32xf32> -> vector<16x32xf32>
    %c0_164 = arith.constant 0 : index
    %c0_165 = arith.constant 0 : index
    %482 = vector.load %arg26[%c0_164, %c0_165] : memref<1x32xf32, #tpu.memory_space<vmem>>, vector<1x32xf32>
    %483 = vector.broadcast %482 : vector<1x32xf32> to vector<16x32xf32>
    %484 = arith.addf %481, %483 : vector<16x32xf32>
    %485 = arith.addf %484, %461 : vector<16x32xf32>
    %c0_166 = arith.constant 0 : index
    %c0_167 = arith.constant 0 : index
    %486 = vector.load %arg27[%c0_166, %c0_167] : memref<1x32xf32, #tpu.memory_space<vmem>>, vector<1x32xf32>
    %c0_168 = arith.constant 0 : index
    %c0_169 = arith.constant 0 : index
    %487 = vector.load %arg28[%c0_168, %c0_169] : memref<1x32xf32, #tpu.memory_space<vmem>>, vector<1x32xf32>
    %cst_170 = arith.constant dense<0.000000e+00> : vector<16xf32>
    %488 = vector.multi_reduction <add>, %485, %cst_170 [1] : vector<16x32xf32> to vector<16xf32>
    %489 = vector.shape_cast %488 : vector<16xf32> to vector<16x1xf32>
    %cst_171 = arith.constant 3.200000e+01 : f32
    %490 = vector.broadcast %cst_171 : f32 to vector<16x1xf32>
    %491 = arith.divf %489, %490 : vector<16x1xf32>
    %492 = vector.broadcast %491 : vector<16x1xf32> to vector<16x32xf32>
    %493 = arith.subf %485, %492 : vector<16x32xf32>
    %494 = arith.mulf %493, %493 : vector<16x32xf32>
    %cst_172 = arith.constant dense<0.000000e+00> : vector<16xf32>
    %495 = vector.multi_reduction <add>, %494, %cst_172 [1] : vector<16x32xf32> to vector<16xf32>
    %496 = vector.shape_cast %495 : vector<16xf32> to vector<16x1xf32>
    %cst_173 = arith.constant 3.200000e+01 : f32
    %497 = vector.broadcast %cst_173 : f32 to vector<16x1xf32>
    %498 = arith.divf %496, %497 : vector<16x1xf32>
    %cst_174 = arith.constant 9.99999996E-13 : f32
    %499 = vector.broadcast %cst_174 : f32 to vector<16x1xf32>
    %500 = arith.addf %498, %499 : vector<16x1xf32>
    %501 = math.rsqrt %500 : vector<16x1xf32>
    %502 = vector.broadcast %501 : vector<16x1xf32> to vector<16x32xf32>
    %503 = arith.mulf %493, %502 : vector<16x32xf32>
    %504 = vector.broadcast %486 : vector<1x32xf32> to vector<16x32xf32>
    %505 = arith.mulf %503, %504 : vector<16x32xf32>
    %506 = vector.broadcast %487 : vector<1x32xf32> to vector<16x32xf32>
    %507 = arith.addf %505, %506 : vector<16x32xf32>
    %508 = vector.extract_strided_slice %507 {offsets = [0, 0], sizes = [1, 32], strides = [1, 1]} : vector<16x32xf32> to vector<1x32xf32>
    %509 = vector.extract_strided_slice %507 {offsets = [8, 0], sizes = [1, 32], strides = [1, 1]} : vector<16x32xf32> to vector<1x32xf32>
    %510 = tpu.concatenate %508, %509 in 0 : vector<1x32xf32>, vector<1x32xf32> -> vector<2x32xf32>
    %c0_175 = arith.constant 0 : index
    %c0_176 = arith.constant 0 : index
    %511 = vector.load %arg29[%c0_175, %c0_176] : memref<32x128xf32, #tpu.memory_space<vmem>>, vector<32x128xf32>
    %cst_177 = arith.constant dense<0.000000e+00> : vector<2x128xf32>
    %512 = tpu.matmul %510, %511, %cst_177 {dimension_numbers = #tpu.dot_dimension_numbers<[1], [0], [0], [1], [0, 0, 1, 1], [], []>} : vector<2x32xf32>, vector<32x128xf32>, vector<2x128xf32> -> vector<2x128xf32>
    %c0_178 = arith.constant 0 : index
    %c0_179 = arith.constant 0 : index
    %513 = vector.load %arg30[%c0_178, %c0_179] : memref<1x128xf32, #tpu.memory_space<vmem>>, vector<1x128xf32>
    %514 = vector.broadcast %513 : vector<1x128xf32> to vector<2x128xf32>
    %515 = arith.addf %512, %514 : vector<2x128xf32>
    %cst_180 = arith.constant 0.000000e+00 : f32
    %516 = vector.broadcast %cst_180 : f32 to vector<2x128xf32>
    %517 = arith.maximumf %515, %516 : vector<2x128xf32>
    %c0_181 = arith.constant 0 : index
    %c0_182 = arith.constant 0 : index
    %518 = vector.load %arg31[%c0_181, %c0_182] : memref<128x3xf32, #tpu.memory_space<vmem>>, vector<128x3xf32>
    %cst_183 = arith.constant dense<0.000000e+00> : vector<2x3xf32>
    %519 = tpu.matmul %517, %518, %cst_183 {dimension_numbers = #tpu.dot_dimension_numbers<[1], [0], [0], [1], [0, 0, 1, 1], [], []>} : vector<2x128xf32>, vector<128x3xf32>, vector<2x3xf32> -> vector<2x3xf32>
    %c0_184 = arith.constant 0 : index
    %c0_185 = arith.constant 0 : index
    %520 = vector.load %arg32[%c0_184, %c0_185] : memref<1x3xf32, #tpu.memory_space<vmem>>, vector<1x3xf32>
    %521 = vector.broadcast %520 : vector<1x3xf32> to vector<2x3xf32>
    %522 = arith.addf %519, %521 : vector<2x3xf32>
    %c0_186 = arith.constant 0 : index
    %c0_187 = arith.constant 0 : index
    %523 = vector.load %arg33[%c0_186, %c0_187] : memref<2x3xf32, #tpu.memory_space<vmem>>, vector<2x3xf32>
    tpu.vector_store %arg33[%c0_186, %c0_187], %522 {strides = array<i32>} : memref<2x3xf32, #tpu.memory_space<vmem>>, vector<2x3xf32>,
    return
  }
  func.func @transform_0(%arg0: i32) -> (i32, i32) {
    %c0_i32 = arith.constant 0 : i32
    %c0_i32_0 = arith.constant 0 : i32
    %c0_i32_1 = arith.constant 0 : i32
    return %c0_i32, %c0_i32_0 : i32, i32
  }
  func.func @transform_1(%arg0: i32) -> (i32, i32) {
    %c0_i32 = arith.constant 0 : i32
    %c0_i32_0 = arith.constant 0 : i32
    %c0_i32_1 = arith.constant 0 : i32
    return %c0_i32, %c0_i32_0 : i32, i32
  }
  func.func @transform_2(%arg0: i32) -> (i32, i32) {
    %c0_i32 = arith.constant 0 : i32
    %c0_i32_0 = arith.constant 0 : i32
    %c0_i32_1 = arith.constant 0 : i32
    return %c0_i32, %c0_i32_0 : i32, i32
  }
  func.func @transform_3(%arg0: i32) -> (i32, i32) {
    %c0_i32 = arith.constant 0 : i32
    %c0_i32_0 = arith.constant 0 : i32
    %c0_i32_1 = arith.constant 0 : i32
    return %c0_i32, %c0_i32_0 : i32, i32
  }
  func.func @transform_4(%arg0: i32) -> (i32, i32) {
    %c0_i32 = arith.constant 0 : i32
    %c0_i32_0 = arith.constant 0 : i32
    %c0_i32_1 = arith.constant 0 : i32
    return %c0_i32, %c0_i32_0 : i32, i32
  }
  func.func @transform_5(%arg0: i32) -> (i32, i32) {
    %c0_i32 = arith.constant 0 : i32
    %c0_i32_0 = arith.constant 0 : i32
    %c0_i32_1 = arith.constant 0 : i32
    return %c0_i32, %c0_i32_0 : i32, i32
  }
  func.func @transform_6(%arg0: i32) -> (i32, i32) {
    %c0_i32 = arith.constant 0 : i32
    %c0_i32_0 = arith.constant 0 : i32
    %c0_i32_1 = arith.constant 0 : i32
    return %c0_i32, %c0_i32_0 : i32, i32
  }
  func.func @transform_7(%arg0: i32) -> (i32, i32) {
    %c0_i32 = arith.constant 0 : i32
    %c0_i32_0 = arith.constant 0 : i32
    %c0_i32_1 = arith.constant 0 : i32
    return %c0_i32, %c0_i32_0 : i32, i32
  }
  func.func @transform_8(%arg0: i32) -> (i32, i32) {
    %c0_i32 = arith.constant 0 : i32
    %c0_i32_0 = arith.constant 0 : i32
    %c0_i32_1 = arith.constant 0 : i32
    return %c0_i32, %c0_i32_0 : i32, i32
  }
  func.func @transform_9(%arg0: i32) -> (i32, i32) {
    %c0_i32 = arith.constant 0 : i32
    %c0_i32_0 = arith.constant 0 : i32
    %c0_i32_1 = arith.constant 0 : i32
    return %c0_i32, %c0_i32_0 : i32, i32
  }
  func.func @transform_10(%arg0: i32) -> (i32, i32) {
    %c0_i32 = arith.constant 0 : i32
    %c0_i32_0 = arith.constant 0 : i32
    %c0_i32_1 = arith.constant 0 : i32
    return %c0_i32, %c0_i32_0 : i32, i32
  }
  func.func @transform_11(%arg0: i32) -> (i32, i32) {
    %c0_i32 = arith.constant 0 : i32
    %c0_i32_0 = arith.constant 0 : i32
    %c0_i32_1 = arith.constant 0 : i32
    return %c0_i32, %c0_i32_0 : i32, i32
  }
  func.func @transform_12(%arg0: i32) -> (i32, i32) {
    %c0_i32 = arith.constant 0 : i32
    %c0_i32_0 = arith.constant 0 : i32
    %c0_i32_1 = arith.constant 0 : i32
    return %c0_i32, %c0_i32_0 : i32, i32
  }
  func.func @transform_13(%arg0: i32) -> (i32, i32) {
    %c0_i32 = arith.constant 0 : i32
    %c0_i32_0 = arith.constant 0 : i32
    %c0_i32_1 = arith.constant 0 : i32
    return %c0_i32, %c0_i32_0 : i32, i32
  }
  func.func @transform_14(%arg0: i32) -> (i32, i32) {
    %c0_i32 = arith.constant 0 : i32
    %c0_i32_0 = arith.constant 0 : i32
    %c0_i32_1 = arith.constant 0 : i32
    return %c0_i32, %c0_i32_0 : i32, i32
  }
  func.func @transform_15(%arg0: i32) -> (i32, i32) {
    %c0_i32 = arith.constant 0 : i32
    %c0_i32_0 = arith.constant 0 : i32
    %c0_i32_1 = arith.constant 0 : i32
    return %c0_i32, %c0_i32_0 : i32, i32
  }
  func.func @transform_16(%arg0: i32) -> (i32, i32) {
    %c0_i32 = arith.constant 0 : i32
    %c0_i32_0 = arith.constant 0 : i32
    %c0_i32_1 = arith.constant 0 : i32
    return %c0_i32, %c0_i32_0 : i32, i32
  }
  func.func @transform_17(%arg0: i32) -> (i32, i32) {
    %c0_i32 = arith.constant 0 : i32
    %c0_i32_0 = arith.constant 0 : i32
    %c0_i32_1 = arith.constant 0 : i32
    return %c0_i32, %c0_i32_0 : i32, i32
  }
  func.func @transform_18(%arg0: i32) -> (i32, i32) {
    %c0_i32 = arith.constant 0 : i32
    %c0_i32_0 = arith.constant 0 : i32
    %c0_i32_1 = arith.constant 0 : i32
    return %c0_i32, %c0_i32_0 : i32, i32
  }
  func.func @transform_19(%arg0: i32) -> (i32, i32) {
    %c0_i32 = arith.constant 0 : i32
    %c0_i32_0 = arith.constant 0 : i32
    %c0_i32_1 = arith.constant 0 : i32
    return %c0_i32, %c0_i32_0 : i32, i32
  }
  func.func @transform_20(%arg0: i32) -> (i32, i32) {
    %c0_i32 = arith.constant 0 : i32
    %c0_i32_0 = arith.constant 0 : i32
    %c0_i32_1 = arith.constant 0 : i32
    return %c0_i32, %c0_i32_0 : i32, i32
  }
  func.func @transform_21(%arg0: i32) -> (i32, i32) {
    %c0_i32 = arith.constant 0 : i32
    %c0_i32_0 = arith.constant 0 : i32
    %c0_i32_1 = arith.constant 0 : i32
    return %c0_i32, %c0_i32_0 : i32, i32
  }
  func.func @transform_22(%arg0: i32) -> (i32, i32) {
    %c0_i32 = arith.constant 0 : i32
    %c0_i32_0 = arith.constant 0 : i32
    %c0_i32_1 = arith.constant 0 : i32
    return %c0_i32, %c0_i32_0 : i32, i32
  }
  func.func @transform_23(%arg0: i32) -> (i32, i32) {
    %c0_i32 = arith.constant 0 : i32
    %c0_i32_0 = arith.constant 0 : i32
    %c0_i32_1 = arith.constant 0 : i32
    return %c0_i32, %c0_i32_0 : i32, i32
  }
  func.func @transform_24(%arg0: i32) -> (i32, i32) {
    %c0_i32 = arith.constant 0 : i32
    %c0_i32_0 = arith.constant 0 : i32
    %c0_i32_1 = arith.constant 0 : i32
    return %c0_i32, %c0_i32_0 : i32, i32
  }
  func.func @transform_25(%arg0: i32) -> (i32, i32) {
    %c0_i32 = arith.constant 0 : i32
    %c0_i32_0 = arith.constant 0 : i32
    %c0_i32_1 = arith.constant 0 : i32
    return %c0_i32, %c0_i32_0 : i32, i32
  }
  func.func @transform_26(%arg0: i32) -> (i32, i32) {
    %c0_i32 = arith.constant 0 : i32
    %c0_i32_0 = arith.constant 0 : i32
    %c0_i32_1 = arith.constant 0 : i32
    return %c0_i32, %c0_i32_0 : i32, i32
  }
  func.func @transform_27(%arg0: i32) -> (i32, i32) {
    %c0_i32 = arith.constant 0 : i32
    %c0_i32_0 = arith.constant 0 : i32
    %c0_i32_1 = arith.constant 0 : i32
    return %c0_i32, %c0_i32_0 : i32, i32
  }
  func.func @transform_28(%arg0: i32) -> (i32, i32) {
    %c0_i32 = arith.constant 0 : i32
    %c0_i32_0 = arith.constant 0 : i32
    %c0_i32_1 = arith.constant 0 : i32
    return %c0_i32, %c0_i32_0 : i32, i32
  }
  func.func @transform_29(%arg0: i32) -> (i32, i32) {
    %c0_i32 = arith.constant 0 : i32
    %c0_i32_0 = arith.constant 0 : i32
    %c0_i32_1 = arith.constant 0 : i32
    return %c0_i32, %c0_i32_0 : i32, i32
  }
  func.func @transform_30(%arg0: i32) -> (i32, i32) {
    %c0_i32 = arith.constant 0 : i32
    %c0_i32_0 = arith.constant 0 : i32
    %c0_i32_1 = arith.constant 0 : i32
    return %c0_i32, %c0_i32_0 : i32, i32
  }
  func.func @transform_31(%arg0: i32) -> (i32, i32) {
    %c0_i32 = arith.constant 0 : i32
    %c0_i32_0 = arith.constant 0 : i32
    %c0_i32_1 = arith.constant 0 : i32
    return %c0_i32, %c0_i32_0 : i32, i32
  }
  func.func @transform_32(%arg0: i32) -> (i32, i32) {
    %c0_i32 = arith.constant 0 : i32
    %c0_i32_0 = arith.constant 0 : i32
    %c0_i32_1 = arith.constant 0 : i32
    return %c0_i32, %c0_i32_0 : i32, i32
  }
}

</mosaic_0001>

<llo_original>
// kernel: model_forward.1
$region0: #{model_forward.1}
  #allocation0 [shape = 'u32[]', space=smem, size = 0x4, offset = 0x4, fixed_abs, tag = 'smem constant byte address 0x4 - core index']
  #allocation1 [shape = 'u32[144,128]{1,0:T(1,128)}', space=vmem, size = 0x12000, scoped, tag = 'internal scratch']
  %s0 = inlined_call_operand.smem [shape: u32[33], index: -1, kind: input, shape index: {}]
  %s1 = sld [smem:[%s0]]
  %s2 = scalar_lea.smem %s0, 1
  %s3 = sld [smem:[%s2]]
  %s4 = scalar_lea.smem %s0, 2
  %s5 = sld [smem:[%s4]]
  %s6 = scalar_lea.smem %s0, 3
  %s7 = sld [smem:[%s6]]
  %s8 = scalar_lea.smem %s0, 4
  %s9 = sld [smem:[%s8]]
  %s10 = scalar_lea.smem %s0, 5
  %s11 = sld [smem:[%s10]]
  %s12 = scalar_lea.smem %s0, 6
  %s13 = sld [smem:[%s12]]
  %s14 = scalar_lea.smem %s0, 7
  %s15 = sld [smem:[%s14]]
  %s16 = scalar_lea.smem %s0, 8
  %s17 = sld [smem:[%s16]]
  %s18 = scalar_lea.smem %s0, 9
  %s19 = sld [smem:[%s18]]
  %s20 = scalar_lea.smem %s0, 10
  %s21 = sld [smem:[%s20]]
  %s22 = scalar_lea.smem %s0, 11
  %s23 = sld [smem:[%s22]]
  %s24 = scalar_lea.smem %s0, 12
  %s25 = sld [smem:[%s24]]
  %s26 = scalar_lea.smem %s0, 13
  %s27 = sld [smem:[%s26]]
  %s28 = scalar_lea.smem %s0, 14
  %s29 = sld [smem:[%s28]]
  %s30 = scalar_lea.smem %s0, 15
  %s31 = sld [smem:[%s30]]
  %s32 = scalar_lea.smem %s0, 16
  %s33 = sld [smem:[%s32]]
  %s34 = scalar_lea.smem %s0, 17
  %s35 = sld [smem:[%s34]]
  %s36 = scalar_lea.smem %s0, 18
  %s37 = sld [smem:[%s36]]
  %s38 = scalar_lea.smem %s0, 19
  %s39 = sld [smem:[%s38]]
  %s40 = scalar_lea.smem %s0, 20
  %s41 = sld [smem:[%s40]]
  %s42 = scalar_lea.smem %s0, 21
  %s43 = sld [smem:[%s42]]
  %s44 = scalar_lea.smem %s0, 22
  %s45 = sld [smem:[%s44]]
  %s46 = scalar_lea.smem %s0, 23
  %s47 = sld [smem:[%s46]]
  %s48 = scalar_lea.smem %s0, 24
  %s49 = sld [smem:[%s48]]
  %s50 = scalar_lea.smem %s0, 25
  %s51 = sld [smem:[%s50]]
  %s52 = scalar_lea.smem %s0, 26
  %s53 = sld [smem:[%s52]]
  %s54 = scalar_lea.smem %s0, 27
  %s55 = sld [smem:[%s54]]
  %s56 = scalar_lea.smem %s0, 28
  %s57 = sld [smem:[%s56]]
  %s58 = scalar_lea.smem %s0, 29
  %s59 = sld [smem:[%s58]]
  %s60 = scalar_lea.smem %s0, 30
  %s61 = sld [smem:[%s60]]
  %s62 = scalar_lea.smem %s0, 31
  %s63 = sld [smem:[%s62]]
  %s64 = scalar_lea.smem %s0, 32
  %s65 = sld [smem:[%s64]]
  %s66 = sld [smem:[#allocation0]]
  $region138: #{model_forward.1} parent=0
    _
  %s68 = ssub.s32 1, %s66
  %s69 = scalar_select 0, %s68, %s66
  $region1: #{model_forward.1} parent=0
    #allocation2 [shape = 'u8[1024]{0}', space=vmem, size = 0x400, scoped, tag = 'output window, operand 0, single buffered']
    #allocation3 [shape = 's32[1]{0}', space=sflag, size = 0x4, scoped, tag = 'scoped memory for model_forward.1']
    %70 = vsyncpa [#allocation3], 0
    // Predicated region
    $region2: #{model_forward.1} parent=1 // pred_check
      _
    $region3: #{model_forward.1} parent=1 // pred_check_branch
      %72 = sbr.rel (0) target = $region5
    $region4: #{model_forward.1} parent=1 // pred_region
      _
    $region5: #{model_forward.1} parent=1 // pred_fallthru
      _
    // Predicated region
    $region6: #{model_forward.1} parent=1 // pred_check
      _
    $region7: #{model_forward.1} parent=1 // pred_check_branch
      %74 = sbr.rel (0) target = $region9
    $region8: #{model_forward.1} parent=1 // pred_region
      _
    $region9: #{model_forward.1} parent=1 // pred_fallthru
      _
    // Predicated region
    $region10: #{model_forward.1} parent=1 // pred_check
      _
    $region11: #{model_forward.1} parent=1 // pred_check_branch
      %76 = sbr.rel (0) target = $region13
    $region12: #{model_forward.1} parent=1 // pred_region
      _
    $region13: #{model_forward.1} parent=1 // pred_fallthru
      _
    // Predicated region
    $region14: #{model_forward.1} parent=1 // pred_check
      _
    $region15: #{model_forward.1} parent=1 // pred_check_branch
      %78 = sbr.rel (0) target = $region17
    $region16: #{model_forward.1} parent=1 // pred_region
      _
    $region17: #{model_forward.1} parent=1 // pred_fallthru
      _
    // Predicated region
    $region18: #{model_forward.1} parent=1 // pred_check
      _
    $region19: #{model_forward.1} parent=1 // pred_check_branch
      %80 = sbr.rel (0) target = $region21
    $region20: #{model_forward.1} parent=1 // pred_region
      _
    $region21: #{model_forward.1} parent=1 // pred_fallthru
      _
    // Predicated region
    $region22: #{model_forward.1} parent=1 // pred_check
      _
    $region23: #{model_forward.1} parent=1 // pred_check_branch
      %82 = sbr.rel (0) target = $region25
    $region24: #{model_forward.1} parent=1 // pred_region
      _
    $region25: #{model_forward.1} parent=1 // pred_fallthru
      _
    // Predicated region
    $region26: #{model_forward.1} parent=1 // pred_check
      _
    $region27: #{model_forward.1} parent=1 // pred_check_branch
      %84 = sbr.rel (0) target = $region29
    $region28: #{model_forward.1} parent=1 // pred_region
      _
    $region29: #{model_forward.1} parent=1 // pred_fallthru
      _
    // Predicated region
    $region30: #{model_forward.1} parent=1 // pred_check
      _
    $region31: #{model_forward.1} parent=1 // pred_check_branch
      %86 = sbr.rel (0) target = $region33
    $region32: #{model_forward.1} parent=1 // pred_region
      _
    $region33: #{model_forward.1} parent=1 // pred_fallthru
      _
    // Predicated region
    $region34: #{model_forward.1} parent=1 // pred_check
      _
    $region35: #{model_forward.1} parent=1 // pred_check_branch
      %88 = sbr.rel (0) target = $region37
    $region36: #{model_forward.1} parent=1 // pred_region
      _
    $region37: #{model_forward.1} parent=1 // pred_fallthru
      _
    // Predicated region
    $region38: #{model_forward.1} parent=1 // pred_check
      _
    $region39: #{model_forward.1} parent=1 // pred_check_branch
      %90 = sbr.rel (0) target = $region41
    $region40: #{model_forward.1} parent=1 // pred_region
      _
    $region41: #{model_forward.1} parent=1 // pred_fallthru
      _
    // Predicated region
    $region42: #{model_forward.1} parent=1 // pred_check
      _
    $region43: #{model_forward.1} parent=1 // pred_check_branch
      %92 = sbr.rel (0) target = $region45
    $region44: #{model_forward.1} parent=1 // pred_region
      _
    $region45: #{model_forward.1} parent=1 // pred_fallthru
      _
    // Predicated region
    $region46: #{model_forward.1} parent=1 // pred_check
      _
    $region47: #{model_forward.1} parent=1 // pred_check_branch
      %94 = sbr.rel (0) target = $region49
    $region48: #{model_forward.1} parent=1 // pred_region
      _
    $region49: #{model_forward.1} parent=1 // pred_fallthru
      _
    // Predicated region
    $region50: #{model_forward.1} parent=1 // pred_check
      _
    $region51: #{model_forward.1} parent=1 // pred_check_branch
      %96 = sbr.rel (0) target = $region53
    $region52: #{model_forward.1} parent=1 // pred_region
      _
    $region53: #{model_forward.1} parent=1 // pred_fallthru
      _
    // Predicated region
    $region54: #{model_forward.1} parent=1 // pred_check
      _
    $region55: #{model_forward.1} parent=1 // pred_check_branch
      %98 = sbr.rel (0) target = $region57
    $region56: #{model_forward.1} parent=1 // pred_region
      _
    $region57: #{model_forward.1} parent=1 // pred_fallthru
      _
    // Predicated region
    $region58: #{model_forward.1} parent=1 // pred_check
      _
    $region59: #{model_forward.1} parent=1 // pred_check_branch
      %100 = sbr.rel (0) target = $region61
    $region60: #{model_forward.1} parent=1 // pred_region
      _
    $region61: #{model_forward.1} parent=1 // pred_fallthru
      _
    // Predicated region
    $region62: #{model_forward.1} parent=1 // pred_check
      _
    $region63: #{model_forward.1} parent=1 // pred_check_branch
      %102 = sbr.rel (0) target = $region65
    $region64: #{model_forward.1} parent=1 // pred_region
      _
    $region65: #{model_forward.1} parent=1 // pred_fallthru
      _
    // Predicated region
    $region66: #{model_forward.1} parent=1 // pred_check
      _
    $region67: #{model_forward.1} parent=1 // pred_check_branch
      %104 = sbr.rel (0) target = $region69
    $region68: #{model_forward.1} parent=1 // pred_region
      _
    $region69: #{model_forward.1} parent=1 // pred_fallthru
      _
    // Predicated region
    $region70: #{model_forward.1} parent=1 // pred_check
      _
    $region71: #{model_forward.1} parent=1 // pred_check_branch
      %106 = sbr.rel (0) target = $region73
    $region72: #{model_forward.1} parent=1 // pred_region
      _
    $region73: #{model_forward.1} parent=1 // pred_fallthru
      _
    // Predicated region
    $region74: #{model_forward.1} parent=1 // pred_check
      _
    $region75: #{model_forward.1} parent=1 // pred_check_branch
      %108 = sbr.rel (0) target = $region77
    $region76: #{model_forward.1} parent=1 // pred_region
      _
    $region77: #{model_forward.1} parent=1 // pred_fallthru
      _
    // Predicated region
    $region78: #{model_forward.1} parent=1 // pred_check
      _
    $region79: #{model_forward.1} parent=1 // pred_check_branch
      %110 = sbr.rel (0) target = $region81
    $region80: #{model_forward.1} parent=1 // pred_region
      _
    $region81: #{model_forward.1} parent=1 // pred_fallthru
      _
    // Predicated region
    $region82: #{model_forward.1} parent=1 // pred_check
      _
    $region83: #{model_forward.1} parent=1 // pred_check_branch
      %112 = sbr.rel (0) target = $region85
    $region84: #{model_forward.1} parent=1 // pred_region
      _
    $region85: #{model_forward.1} parent=1 // pred_fallthru
      _
    // Predicated region
    $region86: #{model_forward.1} parent=1 // pred_check
      _
    $region87: #{model_forward.1} parent=1 // pred_check_branch
      %114 = sbr.rel (0) target = $region89
    $region88: #{model_forward.1} parent=1 // pred_region
      _
    $region89: #{model_forward.1} parent=1 // pred_fallthru
      _
    // Predicated region
    $region90: #{model_forward.1} parent=1 // pred_check
      _
    $region91: #{model_forward.1} parent=1 // pred_check_branch
      %116 = sbr.rel (0) target = $region93
    $region92: #{model_forward.1} parent=1 // pred_region
      _
    $region93: #{model_forward.1} parent=1 // pred_fallthru
      _
    // Predicated region
    $region94: #{model_forward.1} parent=1 // pred_check
      _
    $region95: #{model_forward.1} parent=1 // pred_check_branch
      %118 = sbr.rel (0) target = $region97
    $region96: #{model_forward.1} parent=1 // pred_region
      _
    $region97: #{model_forward.1} parent=1 // pred_fallthru
      _
    // Predicated region
    $region98: #{model_forward.1} parent=1 // pred_check
      _
    $region99: #{model_forward.1} parent=1 // pred_check_branch
      %120 = sbr.rel (0) target = $region101
    $region100: #{model_forward.1} parent=1 // pred_region
      _
    $region101: #{model_forward.1} parent=1 // pred_fallthru
      _
    // Predicated region
    $region102: #{model_forward.1} parent=1 // pred_check
      _
    $region103: #{model_forward.1} parent=1 // pred_check_branch
      %122 = sbr.rel (0) target = $region105
    $region104: #{model_forward.1} parent=1 // pred_region
      _
    $region105: #{model_forward.1} parent=1 // pred_fallthru
      _
    // Predicated region
    $region106: #{model_forward.1} parent=1 // pred_check
      _
    $region107: #{model_forward.1} parent=1 // pred_check_branch
      %124 = sbr.rel (0) target = $region109
    $region108: #{model_forward.1} parent=1 // pred_region
      _
    $region109: #{model_forward.1} parent=1 // pred_fallthru
      _
    // Predicated region
    $region110: #{model_forward.1} parent=1 // pred_check
      _
    $region111: #{model_forward.1} parent=1 // pred_check_branch
      %126 = sbr.rel (0) target = $region113
    $region112: #{model_forward.1} parent=1 // pred_region
      _
    $region113: #{model_forward.1} parent=1 // pred_fallthru
      _
    // Predicated region
    $region114: #{model_forward.1} parent=1 // pred_check
      _
    $region115: #{model_forward.1} parent=1 // pred_check_branch
      %128 = sbr.rel (0) target = $region117
    $region116: #{model_forward.1} parent=1 // pred_region
      _
    $region117: #{model_forward.1} parent=1 // pred_fallthru
      _
    // Predicated region
    $region118: #{model_forward.1} parent=1 // pred_check
      _
    $region119: #{model_forward.1} parent=1 // pred_check_branch
      %130 = sbr.rel (0) target = $region121
    $region120: #{model_forward.1} parent=1 // pred_region
      _
    $region121: #{model_forward.1} parent=1 // pred_fallthru
      _
    // Predicated region
    $region122: #{model_forward.1} parent=1 // pred_check
      _
    $region123: #{model_forward.1} parent=1 // pred_check_branch
      %132 = sbr.rel (0) target = $region125
    $region124: #{model_forward.1} parent=1 // pred_region
      _
    $region125: #{model_forward.1} parent=1 // pred_fallthru
      _
    // Predicated region
    $region126: #{model_forward.1} parent=1 // pred_check
      _
    $region127: #{model_forward.1} parent=1 // pred_check_branch
      %134 = sbr.rel (0) target = $region129
    $region128: #{model_forward.1} parent=1 // pred_region
      _
    $region129: #{model_forward.1} parent=1 // pred_fallthru
      _
    %v135 = vld [vmem:[%s1] sm:$0xff]
    %v136 = vld [vmem:[%s1 + $0x8] sm:$0xff]
    %v137 = vld [vmem:[%s5] sm:$0x1]
    %v138 = vld [vmem:[%s7] sm:$0x1]
    %vm139 = vcmask 261120
    %v140 = vsel %vm139, %v135, 0.0
    %141 = vadd.xlane.f32.xlu0 %v140
    %v142 = vpop.xlane.xlu0 %141
    %v143 = vsel %vm139, %v136, 0.0
    %144 = vadd.xlane.f32.xlu0 %v143
    %v145 = vpop.xlane.xlu0 %144
    %v146 = vrcp.pop 32.0
    %v147 = vmul.f32 %v142, %v146
    %v148 = vmul.f32 %v145, %v146
    %v149 = vsub.f32 %v135, %v147
    %v150 = vsub.f32 %v136, %v148
    %v151 = vmul.f32 %v149, %v149
    %v152 = vmul.f32 %v150, %v150
    %v153 = vsel %vm139, %v151, 0.0
    %154 = vadd.xlane.f32.xlu0 %v153
    %v155 = vpop.xlane.xlu0 %154
    %v156 = vsel %vm139, %v152, 0.0
    %157 = vadd.xlane.f32.xlu0 %v156
    %v158 = vpop.xlane.xlu0 %157
    %v159 = vmul.f32 %v155, %v146
    %v160 = vmul.f32 %v158, %v146
    %v161 = vadd.f32 %v159, 1e-12
    %v162 = vadd.f32 %v160, 1e-12
    %v163 = vrsqrt.pop %v161
    %v164 = vrsqrt.pop %v162
    %v165 = vmul.f32 %v149, %v163
    %v166 = vmul.f32 %v150, %v164
    %v168 = vlaneseq
    %v169 = vshrl.u32 %v168, 7
    %v170 = vsub.s32 0, %v169
    %v171 = vrot.slane %v137, %v170
    %v173 = vmul.f32 %v165, %v171
    %v174 = vmul.f32 %v166, %v171
    %v176 = vlaneseq
    %v177 = vshrl.u32 %v176, 7
    %v178 = vsub.s32 0, %v177
    %v179 = vrot.slane %v138, %v178
    %v181 = vadd.f32 %v173, %v179
    %v182 = vadd.f32 %v174, %v179
    %v183 = vld [vmem:[%s3] sm:$0x3]
    %v184 = vld [vmem:[%s9] sm:$0xff]
    %v185 = vld [vmem:[%s9 + $0x8] sm:$0xff]
    %v186 = vld [vmem:[%s9 + $0x10] sm:$0xff]
    %v187 = vld [vmem:[%s9 + $0x18] sm:$0xff]
    %v188 = vld [vmem:[%s11] sm:$0x1]
    %v190 = vlaneseq
    %v191 = vshrl.u32 %v190, 7
    %v192 = vsub.s32 0, %v191
    %v193 = vrot.slane %v188, %v192
    %v196 = vsel %vm139, %v181, 0
    %v199 = vsel %vm139, %v182, 0
    %201 = vmatprep.subr.mxu0 0.0
    %202 = vmatpush1.msra.mxu0 %v184
    %203 = vmatprep.subr.mxu0 0.0
    %204 = vmatpush1.msra.mxu0 %v185
    %205 = vmatprep.subr.mxu0 0.0
    %206 = vmatpush1.msra.mxu0 %v186
    %207 = vmatprep.subr.mxu0 0.0
    %208 = vmatpush1.msra.mxu0 %v187
    %209 = vmatprep.subr.mxu0 0.0
    %210 = vmatpush1.msra.mxu0 0.0
    %211 = vmatprep.subr.mxu0 0.0
    %212 = vmatpush1.msra.mxu0 0.0
    %213 = vmatprep.subr.mxu0 0.0
    %214 = vmatpush1.msra.mxu0 0.0
    %215 = vmatprep.subr.mxu0 0.0
    %216 = vmatpush1.msra.mxu0 0.0
    %217 = vmatprep.subr.mxu0 0.0
    %218 = vmatpush1.msra.mxu0 0.0
    %219 = vmatprep.subr.mxu0 0.0
    %220 = vmatpush1.msra.mxu0 0.0
    %221 = vmatprep.subr.mxu0 0.0
    %222 = vmatpush1.msra.mxu0 0.0
    %223 = vmatprep.subr.mxu0 0.0
    %224 = vmatpush1.msra.mxu0 0.0
    %225 = vmatprep.subr.mxu0 0.0
    %226 = vmatpush1.msra.mxu0 0.0
    %227 = vmatprep.subr.mxu0 0.0
    %228 = vmatpush1.msra.mxu0 0.0
    %229 = vmatprep.subr.mxu0 0.0
    %230 = vmatpush1.msra.mxu0 0.0
    %231 = vmatprep.subr.mxu0 0.0
    %232 = vmatpush1.msra.mxu0 0.0
    %233 = vmatprep.subr.mxu0 0.0
    %234 = vmatpush1.msra.mxu0 0.0
    %235 = vmatprep.subr.mxu0 0.0
    %236 = vmatpush1.msra.mxu0 0.0
    %237 = vmatprep.subr.mxu0 0.0
    %238 = vmatpush1.msra.mxu0 0.0
    %239 = vmatprep.subr.mxu0 0.0
    %240 = vmatpush1.msra.mxu0 0.0
    %241 = vmatprep.subr.mxu0 0.0
    %242 = vmatpush1.msra.mxu0 0.0
    %243 = vmatprep.subr.mxu0 0.0
    %244 = vmatpush1.msra.mxu0 0.0
    %245 = vmatprep.subr.mxu0 0.0
    %246 = vmatpush1.msra.mxu0 0.0
    %247 = vmatprep.subr.mxu0 0.0
    %248 = vmatpush1.msra.mxu0 0.0
    %249 = vmatprep.subr.mxu0 0.0
    %250 = vmatpush1.msra.mxu0 0.0
    %251 = vmatprep.subr.mxu0 0.0
    %252 = vmatpush1.msra.mxu0 0.0
    %253 = vmatprep.subr.mxu0 0.0
    %254 = vmatpush1.msra.mxu0 0.0
    %255 = vmatprep.subr.mxu0 0.0
    %256 = vmatpush1.msra.mxu0 0.0
    %257 = vmatprep.subr.mxu0 0.0
    %258 = vmatpush1.msra.mxu0 0.0
    %259 = vmatprep.subr.mxu0 0.0
    %260 = vmatpush1.msra.mxu0 0.0
    %261 = vmatprep.subr.mxu0 0.0
    %262 = vmatpush1.msra.mxu0 0.0
    %263 = vmatprep.subr.mxu0 0.0
    %264 = vmatpush1.msra.mxu0 0.0
    %265 = vmatprep.mubr.f32.mxu0 0.0
    %266 = vmatmul.mubr.f32.gmra.mrb[0].mxu0 %v196
    %v267 = vpop.f32.mrb[0].mxu0
    %v268 = vadd.f32 %v193, %v267
    %v269 = vpop.f32.mrb[0].mxu0
    %270 = vmatprep.mubr.f32.mxu0 0.0
    %271 = vmatmul.mubr.f32.gmra.mrb[0].mxu0 %v199
    %v272 = vpop.f32.mrb[0].mxu0
    %v273 = vadd.f32 %v193, %v272
    %v274 = vpop.f32.mrb[0].mxu0
    %275 = vdwg.mxu0
    %v276 = vmul.f32 %v268, 0.35355338
    %v277 = vmul.f32 %v273, 0.35355338
    %v278 = vld [vmem:[%s13] sm:$0xff]
    %v279 = vld [vmem:[%s13 + $0x8] sm:$0xff]
    %v280 = vld [vmem:[%s13 + $0x10] sm:$0xff]
    %v281 = vld [vmem:[%s13 + $0x18] sm:$0xff]
    %v282 = vlaneseq
    %v283 = vshrl.u32 %v282, 7
    %v284 = vsub.s32 0, %v283
    %v285 = vrot.slane %v183, %v284
    %287 = vrot.lane.b32.xlu0 %v268, 96
    %v288 = vpop.permute.xlu0 %287
    %vm289 = vcmask 64512
    %v291 = vsel %vm289, %v276, 0
    %v293 = vsel %vm289, %v288, 0
    %295 = vmatprep.subr.mxu0 0.0
    %296 = vmatpush1.xpose.msra.mxu0 %v293
    %297 = vmatprep.subr.mxu0 0.0
    %298 = vmatpush1.xpose.msra.mxu0 0.0
    %299 = vmatprep.subr.mxu0 0.0
    %300 = vmatpush1.xpose.msra.mxu0 0.0
    %301 = vmatprep.subr.mxu0 0.0
    %302 = vmatpush1.xpose.msra.mxu0 0.0
    %303 = vmatprep.subr.mxu0 0.0
    %304 = vmatpush1.xpose.msra.mxu0 0.0
    %305 = vmatprep.subr.mxu0 0.0
    %306 = vmatpush1.xpose.msra.mxu0 0.0
    %307 = vmatprep.subr.mxu0 0.0
    %308 = vmatpush1.xpose.msra.mxu0 0.0
    %309 = vmatprep.subr.mxu0 0.0
    %310 = vmatpush1.xpose.msra.mxu0 0.0
    %311 = vmatprep.subr.mxu0 0.0
    %312 = vmatpush1.xpose.msra.mxu0 0.0
    %313 = vmatprep.subr.mxu0 0.0
    %314 = vmatpush1.xpose.msra.mxu0 0.0
    %315 = vmatprep.subr.mxu0 0.0
    %316 = vmatpush1.xpose.msra.mxu0 0.0
    %317 = vmatprep.subr.mxu0 0.0
    %318 = vmatpush1.xpose.msra.mxu0 0.0
    %319 = vmatprep.subr.mxu0 0.0
    %320 = vmatpush1.xpose.msra.mxu0 0.0
    %321 = vmatprep.subr.mxu0 0.0
    %322 = vmatpush1.xpose.msra.mxu0 0.0
    %323 = vmatprep.subr.mxu0 0.0
    %324 = vmatpush1.xpose.msra.mxu0 0.0
    %325 = vmatprep.subr.mxu0 0.0
    %326 = vmatpush1.xpose.msra.mxu0 0.0
    %327 = vmatprep.subr.mxu0 0.0
    %328 = vmatpush1.xpose.msra.mxu0 0.0
    %329 = vmatprep.subr.mxu0 0.0
    %330 = vmatpush1.xpose.msra.mxu0 0.0
    %331 = vmatprep.subr.mxu0 0.0
    %332 = vmatpush1.xpose.msra.mxu0 0.0
    %333 = vmatprep.subr.mxu0 0.0
    %334 = vmatpush1.xpose.msra.mxu0 0.0
    %335 = vmatprep.subr.mxu0 0.0
    %336 = vmatpush1.xpose.msra.mxu0 0.0
    %337 = vmatprep.subr.mxu0 0.0
    %338 = vmatpush1.xpose.msra.mxu0 0.0
    %339 = vmatprep.subr.mxu0 0.0
    %340 = vmatpush1.xpose.msra.mxu0 0.0
    %341 = vmatprep.subr.mxu0 0.0
    %342 = vmatpush1.xpose.msra.mxu0 0.0
    %343 = vmatprep.subr.mxu0 0.0
    %344 = vmatpush1.xpose.msra.mxu0 0.0
    %345 = vmatprep.subr.mxu0 0.0
    %346 = vmatpush1.xpose.msra.mxu0 0.0
    %347 = vmatprep.subr.mxu0 0.0
    %348 = vmatpush1.xpose.msra.mxu0 0.0
    %349 = vmatprep.subr.mxu0 0.0
    %350 = vmatpush1.xpose.msra.mxu0 0.0
    %351 = vmatprep.subr.mxu0 0.0
    %352 = vmatpush1.xpose.msra.mxu0 0.0
    %353 = vmatprep.subr.mxu0 0.0
    %354 = vmatpush1.xpose.msra.mxu0 0.0
    %355 = vmatprep.subr.mxu0 0.0
    %356 = vmatpush1.xpose.msra.mxu0 0.0
    %357 = vmatprep.subr.mxu0 0.0
    %358 = vmatpush1.xpose.msra.mxu0 0.0
    %359 = vmatprep.mubr.f32.mxu0 0.0
    %360 = vmatmul.mubr.f32.gmra.mrb[0].mxu0 %v291
    %v361 = vpop.f32.mrb[0].mxu0
    %v362 = vadd.f32 %v285, %v361
    %v363 = vpop.f32.mrb[0].mxu0
    %364 = vdwg.mxu0
    %v365 = vsel %vm289, %v362, -inf
    %366 = vmax.xlane.f32.xlu0 %v365
    %v367 = vpop.xlane.xlu0 %366
    %v368 = vsub.f32 %v362, %v367
    %v369 = vmul.f32 %v368, 1.442695
    %v370 = vpow.pop %v369
    %v371 = vsel %vm289, %v370, 0.0
    %372 = vadd.xlane.f32.xlu0 %v371
    %v373 = vpop.xlane.xlu0 %372
    %v374 = vrcp.pop %v373
    %v375 = vmul.f32 %v370, %v374
    %376 = vrot.lane.b32.xlu0 %v268, 64
    %v377 = vpop.permute.xlu0 %376
    %v380 = vsel %vm289, %v375, 0
    %382 = vmatprep.subr.mxu0 0.0
    %383 = vmatpush1.msra.mxu0 %v377
    %384 = vmatprep.subr.mxu0 0.0
    %385 = vmatpush1.msra.mxu0 0.0
    %386 = vmatprep.subr.mxu0 0.0
    %387 = vmatpush1.msra.mxu0 0.0
    %388 = vmatprep.subr.mxu0 0.0
    %389 = vmatpush1.msra.mxu0 0.0
    %390 = vmatprep.subr.mxu0 0.0
    %391 = vmatpush1.msra.mxu0 0.0
    %392 = vmatprep.subr.mxu0 0.0
    %393 = vmatpush1.msra.mxu0 0.0
    %394 = vmatprep.subr.mxu0 0.0
    %395 = vmatpush1.msra.mxu0 0.0
    %396 = vmatprep.subr.mxu0 0.0
    %397 = vmatpush1.msra.mxu0 0.0
    %398 = vmatprep.subr.mxu0 0.0
    %399 = vmatpush1.msra.mxu0 0.0
    %400 = vmatprep.subr.mxu0 0.0
    %401 = vmatpush1.msra.mxu0 0.0
    %402 = vmatprep.subr.mxu0 0.0
    %403 = vmatpush1.msra.mxu0 0.0
    %404 = vmatprep.subr.mxu0 0.0
    %405 = vmatpush1.msra.mxu0 0.0
    %406 = vmatprep.subr.mxu0 0.0
    %407 = vmatpush1.msra.mxu0 0.0
    %408 = vmatprep.subr.mxu0 0.0
    %409 = vmatpush1.msra.mxu0 0.0
    %410 = vmatprep.subr.mxu0 0.0
    %411 = vmatpush1.msra.mxu0 0.0
    %412 = vmatprep.subr.mxu0 0.0
    %413 = vmatpush1.msra.mxu0 0.0
    %414 = vmatprep.subr.mxu0 0.0
    %415 = vmatpush1.msra.mxu0 0.0
    %416 = vmatprep.subr.mxu0 0.0
    %417 = vmatpush1.msra.mxu0 0.0
    %418 = vmatprep.subr.mxu0 0.0
    %419 = vmatpush1.msra.mxu0 0.0
    %420 = vmatprep.subr.mxu0 0.0
    %421 = vmatpush1.msra.mxu0 0.0
    %422 = vmatprep.subr.mxu0 0.0
    %423 = vmatpush1.msra.mxu0 0.0
    %424 = vmatprep.subr.mxu0 0.0
    %425 = vmatpush1.msra.mxu0 0.0
    %426 = vmatprep.subr.mxu0 0.0
    %427 = vmatpush1.msra.mxu0 0.0
    %428 = vmatprep.subr.mxu0 0.0
    %429 = vmatpush1.msra.mxu0 0.0
    %430 = vmatprep.subr.mxu0 0.0
    %431 = vmatpush1.msra.mxu0 0.0
    %432 = vmatprep.subr.mxu0 0.0
    %433 = vmatpush1.msra.mxu0 0.0
    %434 = vmatprep.subr.mxu0 0.0
    %435 = vmatpush1.msra.mxu0 0.0
    %436 = vmatprep.subr.mxu0 0.0
    %437 = vmatpush1.msra.mxu0 0.0
    %438 = vmatprep.subr.mxu0 0.0
    %439 = vmatpush1.msra.mxu0 0.0
    %440 = vmatprep.subr.mxu0 0.0
    %441 = vmatpush1.msra.mxu0 0.0
    %442 = vmatprep.subr.mxu0 0.0
    %443 = vmatpush1.msra.mxu0 0.0
    %444 = vmatprep.subr.mxu0 0.0
    %445 = vmatpush1.msra.mxu0 0.0
    %446 = vmatprep.mubr.f32.mxu0 0.0
    %447 = vmatmul.mubr.f32.gmra.mrb[0].mxu0 %v380
    %v448 = vpop.f32.mrb[0].mxu0
    %v449 = vadd.f32 0.0, %v448
    %v450 = vpop.f32.mrb[0].mxu0
    %451 = vdwg.mxu0
    %452 = vrot.lane.b32.xlu0 %v276, 120
    %v453 = vpop.permute.xlu0 %452
    %454 = vrot.lane.b32.xlu0 %v268, 88
    %v455 = vpop.permute.xlu0 %454
    %v456 = vsel %vm289, %v453, 0
    %v458 = vsel %vm289, %v455, 0
    %460 = vmatprep.subr.mxu0 0.0
    %461 = vmatpush1.xpose.msra.mxu0 %v458
    %462 = vmatprep.subr.mxu0 0.0
    %463 = vmatpush1.xpose.msra.mxu0 0.0
    %464 = vmatprep.subr.mxu0 0.0
    %465 = vmatpush1.xpose.msra.mxu0 0.0
    %466 = vmatprep.subr.mxu0 0.0
    %467 = vmatpush1.xpose.msra.mxu0 0.0
    %468 = vmatprep.subr.mxu0 0.0
    %469 = vmatpush1.xpose.msra.mxu0 0.0
    %470 = vmatprep.subr.mxu0 0.0
    %471 = vmatpush1.xpose.msra.mxu0 0.0
    %472 = vmatprep.subr.mxu0 0.0
    %473 = vmatpush1.xpose.msra.mxu0 0.0
    %474 = vmatprep.subr.mxu0 0.0
    %475 = vmatpush1.xpose.msra.mxu0 0.0
    %476 = vmatprep.subr.mxu0 0.0
    %477 = vmatpush1.xpose.msra.mxu0 0.0
    %478 = vmatprep.subr.mxu0 0.0
    %479 = vmatpush1.xpose.msra.mxu0 0.0
    %480 = vmatprep.subr.mxu0 0.0
    %481 = vmatpush1.xpose.msra.mxu0 0.0
    %482 = vmatprep.subr.mxu0 0.0
    %483 = vmatpush1.xpose.msra.mxu0 0.0
    %484 = vmatprep.subr.mxu0 0.0
    %485 = vmatpush1.xpose.msra.mxu0 0.0
    %486 = vmatprep.subr.mxu0 0.0
    %487 = vmatpush1.xpose.msra.mxu0 0.0
    %488 = vmatprep.subr.mxu0 0.0
    %489 = vmatpush1.xpose.msra.mxu0 0.0
    %490 = vmatprep.subr.mxu0 0.0
    %491 = vmatpush1.xpose.msra.mxu0 0.0
    %492 = vmatprep.subr.mxu0 0.0
    %493 = vmatpush1.xpose.msra.mxu0 0.0
    %494 = vmatprep.subr.mxu0 0.0
    %495 = vmatpush1.xpose.msra.mxu0 0.0
    %496 = vmatprep.subr.mxu0 0.0
    %497 = vmatpush1.xpose.msra.mxu0 0.0
    %498 = vmatprep.subr.mxu0 0.0
    %499 = vmatpush1.xpose.msra.mxu0 0.0
    %500 = vmatprep.subr.mxu0 0.0
    %501 = vmatpush1.xpose.msra.mxu0 0.0
    %502 = vmatprep.subr.mxu0 0.0
    %503 = vmatpush1.xpose.msra.mxu0 0.0
    %504 = vmatprep.subr.mxu0 0.0
    %505 = vmatpush1.xpose.msra.mxu0 0.0
    %506 = vmatprep.subr.mxu0 0.0
    %507 = vmatpush1.xpose.msra.mxu0 0.0
    %508 = vmatprep.subr.mxu0 0.0
    %509 = vmatpush1.xpose.msra.mxu0 0.0
    %510 = vmatprep.subr.mxu0 0.0
    %511 = vmatpush1.xpose.msra.mxu0 0.0
    %512 = vmatprep.subr.mxu0 0.0
    %513 = vmatpush1.xpose.msra.mxu0 0.0
    %514 = vmatprep.subr.mxu0 0.0
    %515 = vmatpush1.xpose.msra.mxu0 0.0
    %516 = vmatprep.subr.mxu0 0.0
    %517 = vmatpush1.xpose.msra.mxu0 0.0
    %518 = vmatprep.subr.mxu0 0.0
    %519 = vmatpush1.xpose.msra.mxu0 0.0
    %520 = vmatprep.subr.mxu0 0.0
    %521 = vmatpush1.xpose.msra.mxu0 0.0
    %522 = vmatprep.subr.mxu0 0.0
    %523 = vmatpush1.xpose.msra.mxu0 0.0
    %524 = vmatprep.mubr.f32.mxu0 0.0
    %525 = vmatmul.mubr.f32.gmra.mrb[0].mxu0 %v456
    %v526 = vpop.f32.mrb[0].mxu0
    %v527 = vadd.f32 %v285, %v526
    %v528 = vpop.f32.mrb[0].mxu0
    %529 = vdwg.mxu0
    %v530 = vsel %vm289, %v527, -inf
    %531 = vmax.xlane.f32.xlu0 %v530
    %v532 = vpop.xlane.xlu0 %531
    %v533 = vsub.f32 %v527, %v532
    %v534 = vmul.f32 %v533, 1.442695
    %v535 = vpow.pop %v534
    %v536 = vsel %vm289, %v535, 0.0
    %537 = vadd.xlane.f32.xlu0 %v536
    %v538 = vpop.xlane.xlu0 %537
    %v539 = vrcp.pop %v538
    %v540 = vmul.f32 %v535, %v539
    %541 = vrot.lane.b32.xlu0 %v268, 56
    %v542 = vpop.permute.xlu0 %541
    %v545 = vsel %vm289, %v540, 0
    %547 = vmatprep.subr.mxu0 0.0
    %548 = vmatpush1.msra.mxu0 %v542
    %549 = vmatprep.subr.mxu0 0.0
    %550 = vmatpush1.msra.mxu0 0.0
    %551 = vmatprep.subr.mxu0 0.0
    %552 = vmatpush1.msra.mxu0 0.0
    %553 = vmatprep.subr.mxu0 0.0
    %554 = vmatpush1.msra.mxu0 0.0
    %555 = vmatprep.subr.mxu0 0.0
    %556 = vmatpush1.msra.mxu0 0.0
    %557 = vmatprep.subr.mxu0 0.0
    %558 = vmatpush1.msra.mxu0 0.0
    %559 = vmatprep.subr.mxu0 0.0
    %560 = vmatpush1.msra.mxu0 0.0
    %561 = vmatprep.subr.mxu0 0.0
    %562 = vmatpush1.msra.mxu0 0.0
    %563 = vmatprep.subr.mxu0 0.0
    %564 = vmatpush1.msra.mxu0 0.0
    %565 = vmatprep.subr.mxu0 0.0
    %566 = vmatpush1.msra.mxu0 0.0
    %567 = vmatprep.subr.mxu0 0.0
    %568 = vmatpush1.msra.mxu0 0.0
    %569 = vmatprep.subr.mxu0 0.0
    %570 = vmatpush1.msra.mxu0 0.0
    %571 = vmatprep.subr.mxu0 0.0
    %572 = vmatpush1.msra.mxu0 0.0
    %573 = vmatprep.subr.mxu0 0.0
    %574 = vmatpush1.msra.mxu0 0.0
    %575 = vmatprep.subr.mxu0 0.0
    %576 = vmatpush1.msra.mxu0 0.0
    %577 = vmatprep.subr.mxu0 0.0
    %578 = vmatpush1.msra.mxu0 0.0
    %579 = vmatprep.subr.mxu0 0.0
    %580 = vmatpush1.msra.mxu0 0.0
    %581 = vmatprep.subr.mxu0 0.0
    %582 = vmatpush1.msra.mxu0 0.0
    %583 = vmatprep.subr.mxu0 0.0
    %584 = vmatpush1.msra.mxu0 0.0
    %585 = vmatprep.subr.mxu0 0.0
    %586 = vmatpush1.msra.mxu0 0.0
    %587 = vmatprep.subr.mxu0 0.0
    %588 = vmatpush1.msra.mxu0 0.0
    %589 = vmatprep.subr.mxu0 0.0
    %590 = vmatpush1.msra.mxu0 0.0
    %591 = vmatprep.subr.mxu0 0.0
    %592 = vmatpush1.msra.mxu0 0.0
    %593 = vmatprep.subr.mxu0 0.0
    %594 = vmatpush1.msra.mxu0 0.0
    %595 = vmatprep.subr.mxu0 0.0
    %596 = vmatpush1.msra.mxu0 0.0
    %597 = vmatprep.subr.mxu0 0.0
    %598 = vmatpush1.msra.mxu0 0.0
    %599 = vmatprep.subr.mxu0 0.0
    %600 = vmatpush1.msra.mxu0 0.0
    %601 = vmatprep.subr.mxu0 0.0
    %602 = vmatpush1.msra.mxu0 0.0
    %603 = vmatprep.subr.mxu0 0.0
    %604 = vmatpush1.msra.mxu0 0.0
    %605 = vmatprep.subr.mxu0 0.0
    %606 = vmatpush1.msra.mxu0 0.0
    %607 = vmatprep.subr.mxu0 0.0
    %608 = vmatpush1.msra.mxu0 0.0
    %609 = vmatprep.subr.mxu0 0.0
    %610 = vmatpush1.msra.mxu0 0.0
    %611 = vmatprep.mubr.f32.mxu0 0.0
    %612 = vmatmul.mubr.f32.gmra.mrb[0].mxu0 %v545
    %v613 = vpop.f32.mrb[0].mxu0
    %v614 = vadd.f32 0.0, %v613
    %v615 = vpop.f32.mrb[0].mxu0
    %616 = vdwg.mxu0
    %v618 = vsel %vm289, %v614, 0
    %620 = vmatprep.subr.mxu0 0.0
    %621 = vmatpush1.msra.mxu0 %v279
    %622 = vmatprep.subr.mxu0 0.0
    %623 = vmatpush1.msra.mxu0 0.0
    %624 = vmatprep.subr.mxu0 0.0
    %625 = vmatpush1.msra.mxu0 0.0
    %626 = vmatprep.subr.mxu0 0.0
    %627 = vmatpush1.msra.mxu0 0.0
    %628 = vmatprep.subr.mxu0 0.0
    %629 = vmatpush1.msra.mxu0 0.0
    %630 = vmatprep.subr.mxu0 0.0
    %631 = vmatpush1.msra.mxu0 0.0
    %632 = vmatprep.subr.mxu0 0.0
    %633 = vmatpush1.msra.mxu0 0.0
    %634 = vmatprep.subr.mxu0 0.0
    %635 = vmatpush1.msra.mxu0 0.0
    %636 = vmatprep.subr.mxu0 0.0
    %637 = vmatpush1.msra.mxu0 0.0
    %638 = vmatprep.subr.mxu0 0.0
    %639 = vmatpush1.msra.mxu0 0.0
    %640 = vmatprep.subr.mxu0 0.0
    %641 = vmatpush1.msra.mxu0 0.0
    %642 = vmatprep.subr.mxu0 0.0
    %643 = vmatpush1.msra.mxu0 0.0
    %644 = vmatprep.subr.mxu0 0.0
    %645 = vmatpush1.msra.mxu0 0.0
    %646 = vmatprep.subr.mxu0 0.0
    %647 = vmatpush1.msra.mxu0 0.0
    %648 = vmatprep.subr.mxu0 0.0
    %649 = vmatpush1.msra.mxu0 0.0
    %650 = vmatprep.subr.mxu0 0.0
    %651 = vmatpush1.msra.mxu0 0.0
    %652 = vmatprep.subr.mxu0 0.0
    %653 = vmatpush1.msra.mxu0 0.0
    %654 = vmatprep.subr.mxu0 0.0
    %655 = vmatpush1.msra.mxu0 0.0
    %656 = vmatprep.subr.mxu0 0.0
    %657 = vmatpush1.msra.mxu0 0.0
    %658 = vmatprep.subr.mxu0 0.0
    %659 = vmatpush1.msra.mxu0 0.0
    %660 = vmatprep.subr.mxu0 0.0
    %661 = vmatpush1.msra.mxu0 0.0
    %662 = vmatprep.subr.mxu0 0.0
    %663 = vmatpush1.msra.mxu0 0.0
    %664 = vmatprep.subr.mxu0 0.0
    %665 = vmatpush1.msra.mxu0 0.0
    %666 = vmatprep.subr.mxu0 0.0
    %667 = vmatpush1.msra.mxu0 0.0
    %668 = vmatprep.subr.mxu0 0.0
    %669 = vmatpush1.msra.mxu0 0.0
    %670 = vmatprep.subr.mxu0 0.0
    %671 = vmatpush1.msra.mxu0 0.0
    %672 = vmatprep.subr.mxu0 0.0
    %673 = vmatpush1.msra.mxu0 0.0
    %674 = vmatprep.subr.mxu0 0.0
    %675 = vmatpush1.msra.mxu0 0.0
    %676 = vmatprep.subr.mxu0 0.0
    %677 = vmatpush1.msra.mxu0 0.0
    %678 = vmatprep.subr.mxu0 0.0
    %679 = vmatpush1.msra.mxu0 0.0
    %680 = vmatprep.subr.mxu0 0.0
    %681 = vmatpush1.msra.mxu0 0.0
    %682 = vmatprep.subr.mxu0 0.0
    %683 = vmatpush1.msra.mxu0 0.0
    %684 = vmatprep.mubr.f32.mxu0 0.0
    %685 = vmatmul.mubr.f32.gmra.mrb[0].mxu0 %v618
    %v686 = vpop.f32.mrb[0].mxu0
    %v687 = vadd.f32 0.0, %v686
    %v688 = vpop.f32.mrb[0].mxu0
    %689 = vdwg.mxu0
    %v691 = vsel %vm289, %v449, 0
    %693 = vmatprep.subr.mxu0 0.0
    %694 = vmatpush1.msra.mxu0 %v278
    %695 = vmatprep.subr.mxu0 0.0
    %696 = vmatpush1.msra.mxu0 0.0
    %697 = vmatprep.subr.mxu0 0.0
    %698 = vmatpush1.msra.mxu0 0.0
    %699 = vmatprep.subr.mxu0 0.0
    %700 = vmatpush1.msra.mxu0 0.0
    %701 = vmatprep.subr.mxu0 0.0
    %702 = vmatpush1.msra.mxu0 0.0
    %703 = vmatprep.subr.mxu0 0.0
    %704 = vmatpush1.msra.mxu0 0.0
    %705 = vmatprep.subr.mxu0 0.0
    %706 = vmatpush1.msra.mxu0 0.0
    %707 = vmatprep.subr.mxu0 0.0
    %708 = vmatpush1.msra.mxu0 0.0
    %709 = vmatprep.subr.mxu0 0.0
    %710 = vmatpush1.msra.mxu0 0.0
    %711 = vmatprep.subr.mxu0 0.0
    %712 = vmatpush1.msra.mxu0 0.0
    %713 = vmatprep.subr.mxu0 0.0
    %714 = vmatpush1.msra.mxu0 0.0
    %715 = vmatprep.subr.mxu0 0.0
    %716 = vmatpush1.msra.mxu0 0.0
    %717 = vmatprep.subr.mxu0 0.0
    %718 = vmatpush1.msra.mxu0 0.0
    %719 = vmatprep.subr.mxu0 0.0
    %720 = vmatpush1.msra.mxu0 0.0
    %721 = vmatprep.subr.mxu0 0.0
    %722 = vmatpush1.msra.mxu0 0.0
    %723 = vmatprep.subr.mxu0 0.0
    %724 = vmatpush1.msra.mxu0 0.0
    %725 = vmatprep.subr.mxu0 0.0
    %726 = vmatpush1.msra.mxu0 0.0
    %727 = vmatprep.subr.mxu0 0.0
    %728 = vmatpush1.msra.mxu0 0.0
    %729 = vmatprep.subr.mxu0 0.0
    %730 = vmatpush1.msra.mxu0 0.0
    %731 = vmatprep.subr.mxu0 0.0
    %732 = vmatpush1.msra.mxu0 0.0
    %733 = vmatprep.subr.mxu0 0.0
    %734 = vmatpush1.msra.mxu0 0.0
    %735 = vmatprep.subr.mxu0 0.0
    %736 = vmatpush1.msra.mxu0 0.0
    %737 = vmatprep.subr.mxu0 0.0
    %738 = vmatpush1.msra.mxu0 0.0
    %739 = vmatprep.subr.mxu0 0.0
    %740 = vmatpush1.msra.mxu0 0.0
    %741 = vmatprep.subr.mxu0 0.0
    %742 = vmatpush1.msra.mxu0 0.0
    %743 = vmatprep.subr.mxu0 0.0
    %744 = vmatpush1.msra.mxu0 0.0
    %745 = vmatprep.subr.mxu0 0.0
    %746 = vmatpush1.msra.mxu0 0.0
    %747 = vmatprep.subr.mxu0 0.0
    %748 = vmatpush1.msra.mxu0 0.0
    %749 = vmatprep.subr.mxu0 0.0
    %750 = vmatpush1.msra.mxu0 0.0
    %751 = vmatprep.subr.mxu0 0.0
    %752 = vmatpush1.msra.mxu0 0.0
    %753 = vmatprep.subr.mxu0 0.0
    %754 = vmatpush1.msra.mxu0 0.0
    %755 = vmatprep.subr.mxu0 0.0
    %756 = vmatpush1.msra.mxu0 0.0
    %757 = vmatprep.mubr.f32.mxu0 0.0
    %758 = vmatmul.mubr.f32.gmra.mrb[0].mxu0 %v691
    %v759 = vpop.f32.mrb[0].mxu0
    %v760 = vadd.f32 %v687, %v759
    %v761 = vpop.f32.mrb[0].mxu0
    %762 = vdwg.mxu0
    %763 = vrot.lane.b32.xlu0 %v276, 112
    %v764 = vpop.permute.xlu0 %763
    %765 = vrot.lane.b32.xlu0 %v268, 80
    %v766 = vpop.permute.xlu0 %765
    %v767 = vsel %vm289, %v764, 0
    %v769 = vsel %vm289, %v766, 0
    %771 = vmatprep.subr.mxu0 0.0
    %772 = vmatpush1.xpose.msra.mxu0 %v769
    %773 = vmatprep.subr.mxu0 0.0
    %774 = vmatpush1.xpose.msra.mxu0 0.0
    %775 = vmatprep.subr.mxu0 0.0
    %776 = vmatpush1.xpose.msra.mxu0 0.0
    %777 = vmatprep.subr.mxu0 0.0
    %778 = vmatpush1.xpose.msra.mxu0 0.0
    %779 = vmatprep.subr.mxu0 0.0
    %780 = vmatpush1.xpose.msra.mxu0 0.0
    %781 = vmatprep.subr.mxu0 0.0
    %782 = vmatpush1.xpose.msra.mxu0 0.0
    %783 = vmatprep.subr.mxu0 0.0
    %784 = vmatpush1.xpose.msra.mxu0 0.0
    %785 = vmatprep.subr.mxu0 0.0
    %786 = vmatpush1.xpose.msra.mxu0 0.0
    %787 = vmatprep.subr.mxu0 0.0
    %788 = vmatpush1.xpose.msra.mxu0 0.0
    %789 = vmatprep.subr.mxu0 0.0
    %790 = vmatpush1.xpose.msra.mxu0 0.0
    %791 = vmatprep.subr.mxu0 0.0
    %792 = vmatpush1.xpose.msra.mxu0 0.0
    %793 = vmatprep.subr.mxu0 0.0
    %794 = vmatpush1.xpose.msra.mxu0 0.0
    %795 = vmatprep.subr.mxu0 0.0
    %796 = vmatpush1.xpose.msra.mxu0 0.0
    %797 = vmatprep.subr.mxu0 0.0
    %798 = vmatpush1.xpose.msra.mxu0 0.0
    %799 = vmatprep.subr.mxu0 0.0
    %800 = vmatpush1.xpose.msra.mxu0 0.0
    %801 = vmatprep.subr.mxu0 0.0
    %802 = vmatpush1.xpose.msra.mxu0 0.0
    %803 = vmatprep.subr.mxu0 0.0
    %804 = vmatpush1.xpose.msra.mxu0 0.0
    %805 = vmatprep.subr.mxu0 0.0
    %806 = vmatpush1.xpose.msra.mxu0 0.0
    %807 = vmatprep.subr.mxu0 0.0
    %808 = vmatpush1.xpose.msra.mxu0 0.0
    %809 = vmatprep.subr.mxu0 0.0
    %810 = vmatpush1.xpose.msra.mxu0 0.0
    %811 = vmatprep.subr.mxu0 0.0
    %812 = vmatpush1.xpose.msra.mxu0 0.0
    %813 = vmatprep.subr.mxu0 0.0
    %814 = vmatpush1.xpose.msra.mxu0 0.0
    %815 = vmatprep.subr.mxu0 0.0
    %816 = vmatpush1.xpose.msra.mxu0 0.0
    %817 = vmatprep.subr.mxu0 0.0
    %818 = vmatpush1.xpose.msra.mxu0 0.0
    %819 = vmatprep.subr.mxu0 0.0
    %820 = vmatpush1.xpose.msra.mxu0 0.0
    %821 = vmatprep.subr.mxu0 0.0
    %822 = vmatpush1.xpose.msra.mxu0 0.0
    %823 = vmatprep.subr.mxu0 0.0
    %824 = vmatpush1.xpose.msra.mxu0 0.0
    %825 = vmatprep.subr.mxu0 0.0
    %826 = vmatpush1.xpose.msra.mxu0 0.0
    %827 = vmatprep.subr.mxu0 0.0
    %828 = vmatpush1.xpose.msra.mxu0 0.0
    %829 = vmatprep.subr.mxu0 0.0
    %830 = vmatpush1.xpose.msra.mxu0 0.0
    %831 = vmatprep.subr.mxu0 0.0
    %832 = vmatpush1.xpose.msra.mxu0 0.0
    %833 = vmatprep.subr.mxu0 0.0
    %834 = vmatpush1.xpose.msra.mxu0 0.0
    %835 = vmatprep.mubr.f32.mxu0 0.0
    %836 = vmatmul.mubr.f32.gmra.mrb[0].mxu0 %v767
    %v837 = vpop.f32.mrb[0].mxu0
    %v838 = vadd.f32 %v285, %v837
    %v839 = vpop.f32.mrb[0].mxu0
    %840 = vdwg.mxu0
    %v841 = vsel %vm289, %v838, -inf
    %842 = vmax.xlane.f32.xlu0 %v841
    %v843 = vpop.xlane.xlu0 %842
    %v844 = vsub.f32 %v838, %v843
    %v845 = vmul.f32 %v844, 1.442695
    %v846 = vpow.pop %v845
    %v847 = vsel %vm289, %v846, 0.0
    %848 = vadd.xlane.f32.xlu0 %v847
    %v849 = vpop.xlane.xlu0 %848
    %v850 = vrcp.pop %v849
    %v851 = vmul.f32 %v846, %v850
    %852 = vrot.lane.b32.xlu0 %v268, 48
    %v853 = vpop.permute.xlu0 %852
    %v856 = vsel %vm289, %v851, 0
    %858 = vmatprep.subr.mxu0 0.0
    %859 = vmatpush1.msra.mxu0 %v853
    %860 = vmatprep.subr.mxu0 0.0
    %861 = vmatpush1.msra.mxu0 0.0
    %862 = vmatprep.subr.mxu0 0.0
    %863 = vmatpush1.msra.mxu0 0.0
    %864 = vmatprep.subr.mxu0 0.0
    %865 = vmatpush1.msra.mxu0 0.0
    %866 = vmatprep.subr.mxu0 0.0
    %867 = vmatpush1.msra.mxu0 0.0
    %868 = vmatprep.subr.mxu0 0.0
    %869 = vmatpush1.msra.mxu0 0.0
    %870 = vmatprep.subr.mxu0 0.0
    %871 = vmatpush1.msra.mxu0 0.0
    %872 = vmatprep.subr.mxu0 0.0
    %873 = vmatpush1.msra.mxu0 0.0
    %874 = vmatprep.subr.mxu0 0.0
    %875 = vmatpush1.msra.mxu0 0.0
    %876 = vmatprep.subr.mxu0 0.0
    %877 = vmatpush1.msra.mxu0 0.0
    %878 = vmatprep.subr.mxu0 0.0
    %879 = vmatpush1.msra.mxu0 0.0
    %880 = vmatprep.subr.mxu0 0.0
    %881 = vmatpush1.msra.mxu0 0.0
    %882 = vmatprep.subr.mxu0 0.0
    %883 = vmatpush1.msra.mxu0 0.0
    %884 = vmatprep.subr.mxu0 0.0
    %885 = vmatpush1.msra.mxu0 0.0
    %886 = vmatprep.subr.mxu0 0.0
    %887 = vmatpush1.msra.mxu0 0.0
    %888 = vmatprep.subr.mxu0 0.0
    %889 = vmatpush1.msra.mxu0 0.0
    %890 = vmatprep.subr.mxu0 0.0
    %891 = vmatpush1.msra.mxu0 0.0
    %892 = vmatprep.subr.mxu0 0.0
    %893 = vmatpush1.msra.mxu0 0.0
    %894 = vmatprep.subr.mxu0 0.0
    %895 = vmatpush1.msra.mxu0 0.0
    %896 = vmatprep.subr.mxu0 0.0
    %897 = vmatpush1.msra.mxu0 0.0
    %898 = vmatprep.subr.mxu0 0.0
    %899 = vmatpush1.msra.mxu0 0.0
    %900 = vmatprep.subr.mxu0 0.0
    %901 = vmatpush1.msra.mxu0 0.0
    %902 = vmatprep.subr.mxu0 0.0
    %903 = vmatpush1.msra.mxu0 0.0
    %904 = vmatprep.subr.mxu0 0.0
    %905 = vmatpush1.msra.mxu0 0.0
    %906 = vmatprep.subr.mxu0 0.0
    %907 = vmatpush1.msra.mxu0 0.0
    %908 = vmatprep.subr.mxu0 0.0
    %909 = vmatpush1.msra.mxu0 0.0
    %910 = vmatprep.subr.mxu0 0.0
    %911 = vmatpush1.msra.mxu0 0.0
    %912 = vmatprep.subr.mxu0 0.0
    %913 = vmatpush1.msra.mxu0 0.0
    %914 = vmatprep.subr.mxu0 0.0
    %915 = vmatpush1.msra.mxu0 0.0
    %916 = vmatprep.subr.mxu0 0.0
    %917 = vmatpush1.msra.mxu0 0.0
    %918 = vmatprep.subr.mxu0 0.0
    %919 = vmatpush1.msra.mxu0 0.0
    %920 = vmatprep.subr.mxu0 0.0
    %921 = vmatpush1.msra.mxu0 0.0
    %922 = vmatprep.mubr.f32.mxu0 0.0
    %923 = vmatmul.mubr.f32.gmra.mrb[0].mxu0 %v856
    %v924 = vpop.f32.mrb[0].mxu0
    %v925 = vadd.f32 0.0, %v924
    %v926 = vpop.f32.mrb[0].mxu0
    %927 = vdwg.mxu0
    %v929 = vsel %vm289, %v925, 0
    %931 = vmatprep.subr.mxu0 0.0
    %932 = vmatpush1.msra.mxu0 %v280
    %933 = vmatprep.subr.mxu0 0.0
    %934 = vmatpush1.msra.mxu0 0.0
    %935 = vmatprep.subr.mxu0 0.0
    %936 = vmatpush1.msra.mxu0 0.0
    %937 = vmatprep.subr.mxu0 0.0
    %938 = vmatpush1.msra.mxu0 0.0
    %939 = vmatprep.subr.mxu0 0.0
    %940 = vmatpush1.msra.mxu0 0.0
    %941 = vmatprep.subr.mxu0 0.0
    %942 = vmatpush1.msra.mxu0 0.0
    %943 = vmatprep.subr.mxu0 0.0
    %944 = vmatpush1.msra.mxu0 0.0
    %945 = vmatprep.subr.mxu0 0.0
    %946 = vmatpush1.msra.mxu0 0.0
    %947 = vmatprep.subr.mxu0 0.0
    %948 = vmatpush1.msra.mxu0 0.0
    %949 = vmatprep.subr.mxu0 0.0
    %950 = vmatpush1.msra.mxu0 0.0
    %951 = vmatprep.subr.mxu0 0.0
    %952 = vmatpush1.msra.mxu0 0.0
    %953 = vmatprep.subr.mxu0 0.0
    %954 = vmatpush1.msra.mxu0 0.0
    %955 = vmatprep.subr.mxu0 0.0
    %956 = vmatpush1.msra.mxu0 0.0
    %957 = vmatprep.subr.mxu0 0.0
    %958 = vmatpush1.msra.mxu0 0.0
    %959 = vmatprep.subr.mxu0 0.0
    %960 = vmatpush1.msra.mxu0 0.0
    %961 = vmatprep.subr.mxu0 0.0
    %962 = vmatpush1.msra.mxu0 0.0
    %963 = vmatprep.subr.mxu0 0.0
    %964 = vmatpush1.msra.mxu0 0.0
    %965 = vmatprep.subr.mxu0 0.0
    %966 = vmatpush1.msra.mxu0 0.0
    %967 = vmatprep.subr.mxu0 0.0
    %968 = vmatpush1.msra.mxu0 0.0
    %969 = vmatprep.subr.mxu0 0.0
    %970 = vmatpush1.msra.mxu0 0.0
    %971 = vmatprep.subr.mxu0 0.0
    %972 = vmatpush1.msra.mxu0 0.0
    %973 = vmatprep.subr.mxu0 0.0
    %974 = vmatpush1.msra.mxu0 0.0
    %975 = vmatprep.subr.mxu0 0.0
    %976 = vmatpush1.msra.mxu0 0.0
    %977 = vmatprep.subr.mxu0 0.0
    %978 = vmatpush1.msra.mxu0 0.0
    %979 = vmatprep.subr.mxu0 0.0
    %980 = vmatpush1.msra.mxu0 0.0
    %981 = vmatprep.subr.mxu0 0.0
    %982 = vmatpush1.msra.mxu0 0.0
    %983 = vmatprep.subr.mxu0 0.0
    %984 = vmatpush1.msra.mxu0 0.0
    %985 = vmatprep.subr.mxu0 0.0
    %986 = vmatpush1.msra.mxu0 0.0
    %987 = vmatprep.subr.mxu0 0.0
    %988 = vmatpush1.msra.mxu0 0.0
    %989 = vmatprep.subr.mxu0 0.0
    %990 = vmatpush1.msra.mxu0 0.0
    %991 = vmatprep.subr.mxu0 0.0
    %992 = vmatpush1.msra.mxu0 0.0
    %993 = vmatprep.subr.mxu0 0.0
    %994 = vmatpush1.msra.mxu0 0.0
    %995 = vmatprep.mubr.f32.mxu0 0.0
    %996 = vmatmul.mubr.f32.gmra.mrb[0].mxu0 %v929
    %v997 = vpop.f32.mrb[0].mxu0
    %v998 = vadd.f32 0.0, %v997
    %v999 = vpop.f32.mrb[0].mxu0
    %1000 = vdwg.mxu0
    %v1001 = vadd.f32 %v760, %v998
    %1002 = vrot.lane.b32.xlu0 %v276, 104
    %v1003 = vpop.permute.xlu0 %1002
    %1004 = vrot.lane.b32.xlu0 %v268, 72
    %v1005 = vpop.permute.xlu0 %1004
    %v1006 = vsel %vm289, %v1003, 0
    %v1008 = vsel %vm289, %v1005, 0
    %1010 = vmatprep.subr.mxu0 0.0
    %1011 = vmatpush1.xpose.msra.mxu0 %v1008
    %1012 = vmatprep.subr.mxu0 0.0
    %1013 = vmatpush1.xpose.msra.mxu0 0.0
    %1014 = vmatprep.subr.mxu0 0.0
    %1015 = vmatpush1.xpose.msra.mxu0 0.0
    %1016 = vmatprep.subr.mxu0 0.0
    %1017 = vmatpush1.xpose.msra.mxu0 0.0
    %1018 = vmatprep.subr.mxu0 0.0
    %1019 = vmatpush1.xpose.msra.mxu0 0.0
    %1020 = vmatprep.subr.mxu0 0.0
    %1021 = vmatpush1.xpose.msra.mxu0 0.0
    %1022 = vmatprep.subr.mxu0 0.0
    %1023 = vmatpush1.xpose.msra.mxu0 0.0
    %1024 = vmatprep.subr.mxu0 0.0
    %1025 = vmatpush1.xpose.msra.mxu0 0.0
    %1026 = vmatprep.subr.mxu0 0.0
    %1027 = vmatpush1.xpose.msra.mxu0 0.0
    %1028 = vmatprep.subr.mxu0 0.0
    %1029 = vmatpush1.xpose.msra.mxu0 0.0
    %1030 = vmatprep.subr.mxu0 0.0
    %1031 = vmatpush1.xpose.msra.mxu0 0.0
    %1032 = vmatprep.subr.mxu0 0.0
    %1033 = vmatpush1.xpose.msra.mxu0 0.0
    %1034 = vmatprep.subr.mxu0 0.0
    %1035 = vmatpush1.xpose.msra.mxu0 0.0
    %1036 = vmatprep.subr.mxu0 0.0
    %1037 = vmatpush1.xpose.msra.mxu0 0.0
    %1038 = vmatprep.subr.mxu0 0.0
    %1039 = vmatpush1.xpose.msra.mxu0 0.0
    %1040 = vmatprep.subr.mxu0 0.0
    %1041 = vmatpush1.xpose.msra.mxu0 0.0
    %1042 = vmatprep.subr.mxu0 0.0
    %1043 = vmatpush1.xpose.msra.mxu0 0.0
    %1044 = vmatprep.subr.mxu0 0.0
    %1045 = vmatpush1.xpose.msra.mxu0 0.0
    %1046 = vmatprep.subr.mxu0 0.0
    %1047 = vmatpush1.xpose.msra.mxu0 0.0
    %1048 = vmatprep.subr.mxu0 0.0
    %1049 = vmatpush1.xpose.msra.mxu0 0.0
    %1050 = vmatprep.subr.mxu0 0.0
    %1051 = vmatpush1.xpose.msra.mxu0 0.0
    %1052 = vmatprep.subr.mxu0 0.0
    %1053 = vmatpush1.xpose.msra.mxu0 0.0
    %1054 = vmatprep.subr.mxu0 0.0
    %1055 = vmatpush1.xpose.msra.mxu0 0.0
    %1056 = vmatprep.subr.mxu0 0.0
    %1057 = vmatpush1.xpose.msra.mxu0 0.0
    %1058 = vmatprep.subr.mxu0 0.0
    %1059 = vmatpush1.xpose.msra.mxu0 0.0
    %1060 = vmatprep.subr.mxu0 0.0
    %1061 = vmatpush1.xpose.msra.mxu0 0.0
    %1062 = vmatprep.subr.mxu0 0.0
    %1063 = vmatpush1.xpose.msra.mxu0 0.0
    %1064 = vmatprep.subr.mxu0 0.0
    %1065 = vmatpush1.xpose.msra.mxu0 0.0
    %1066 = vmatprep.subr.mxu0 0.0
    %1067 = vmatpush1.xpose.msra.mxu0 0.0
    %1068 = vmatprep.subr.mxu0 0.0
    %1069 = vmatpush1.xpose.msra.mxu0 0.0
    %1070 = vmatprep.subr.mxu0 0.0
    %1071 = vmatpush1.xpose.msra.mxu0 0.0
    %1072 = vmatprep.subr.mxu0 0.0
    %1073 = vmatpush1.xpose.msra.mxu0 0.0
    %1074 = vmatprep.mubr.f32.mxu0 0.0
    %1075 = vmatmul.mubr.f32.gmra.mrb[0].mxu0 %v1006
    %v1076 = vpop.f32.mrb[0].mxu0
    %v1077 = vadd.f32 %v285, %v1076
    %v1078 = vpop.f32.mrb[0].mxu0
    %1079 = vdwg.mxu0
    %v1080 = vsel %vm289, %v1077, -inf
    %1081 = vmax.xlane.f32.xlu0 %v1080
    %v1082 = vpop.xlane.xlu0 %1081
    %v1083 = vsub.f32 %v1077, %v1082
    %v1084 = vmul.f32 %v1083, 1.442695
    %v1085 = vpow.pop %v1084
    %v1086 = vsel %vm289, %v1085, 0.0
    %1087 = vadd.xlane.f32.xlu0 %v1086
    %v1088 = vpop.xlane.xlu0 %1087
    %v1089 = vrcp.pop %v1088
    %v1090 = vmul.f32 %v1085, %v1089
    %1091 = vrot.lane.b32.xlu0 %v268, 40
    %v1092 = vpop.permute.xlu0 %1091
    %v1095 = vsel %vm289, %v1090, 0
    %1097 = vmatprep.subr.mxu0 0.0
    %1098 = vmatpush1.msra.mxu0 %v1092
    %1099 = vmatprep.subr.mxu0 0.0
    %1100 = vmatpush1.msra.mxu0 0.0
    %1101 = vmatprep.subr.mxu0 0.0
    %1102 = vmatpush1.msra.mxu0 0.0
    %1103 = vmatprep.subr.mxu0 0.0
    %1104 = vmatpush1.msra.mxu0 0.0
    %1105 = vmatprep.subr.mxu0 0.0
    %1106 = vmatpush1.msra.mxu0 0.0
    %1107 = vmatprep.subr.mxu0 0.0
    %1108 = vmatpush1.msra.mxu0 0.0
    %1109 = vmatprep.subr.mxu0 0.0
    %1110 = vmatpush1.msra.mxu0 0.0
    %1111 = vmatprep.subr.mxu0 0.0
    %1112 = vmatpush1.msra.mxu0 0.0
    %1113 = vmatprep.subr.mxu0 0.0
    %1114 = vmatpush1.msra.mxu0 0.0
    %1115 = vmatprep.subr.mxu0 0.0
    %1116 = vmatpush1.msra.mxu0 0.0
    %1117 = vmatprep.subr.mxu0 0.0
    %1118 = vmatpush1.msra.mxu0 0.0
    %1119 = vmatprep.subr.mxu0 0.0
    %1120 = vmatpush1.msra.mxu0 0.0
    %1121 = vmatprep.subr.mxu0 0.0
    %1122 = vmatpush1.msra.mxu0 0.0
    %1123 = vmatprep.subr.mxu0 0.0
    %1124 = vmatpush1.msra.mxu0 0.0
    %1125 = vmatprep.subr.mxu0 0.0
    %1126 = vmatpush1.msra.mxu0 0.0
    %1127 = vmatprep.subr.mxu0 0.0
    %1128 = vmatpush1.msra.mxu0 0.0
    %1129 = vmatprep.subr.mxu0 0.0
    %1130 = vmatpush1.msra.mxu0 0.0
    %1131 = vmatprep.subr.mxu0 0.0
    %1132 = vmatpush1.msra.mxu0 0.0
    %1133 = vmatprep.subr.mxu0 0.0
    %1134 = vmatpush1.msra.mxu0 0.0
    %1135 = vmatprep.subr.mxu0 0.0
    %1136 = vmatpush1.msra.mxu0 0.0
    %1137 = vmatprep.subr.mxu0 0.0
    %1138 = vmatpush1.msra.mxu0 0.0
    %1139 = vmatprep.subr.mxu0 0.0
    %1140 = vmatpush1.msra.mxu0 0.0
    %1141 = vmatprep.subr.mxu0 0.0
    %1142 = vmatpush1.msra.mxu0 0.0
    %1143 = vmatprep.subr.mxu0 0.0
    %1144 = vmatpush1.msra.mxu0 0.0
    %1145 = vmatprep.subr.mxu0 0.0
    %1146 = vmatpush1.msra.mxu0 0.0
    %1147 = vmatprep.subr.mxu0 0.0
    %1148 = vmatpush1.msra.mxu0 0.0
    %1149 = vmatprep.subr.mxu0 0.0
    %1150 = vmatpush1.msra.mxu0 0.0
    %1151 = vmatprep.subr.mxu0 0.0
    %1152 = vmatpush1.msra.mxu0 0.0
    %1153 = vmatprep.subr.mxu0 0.0
    %1154 = vmatpush1.msra.mxu0 0.0
    %1155 = vmatprep.subr.mxu0 0.0
    %1156 = vmatpush1.msra.mxu0 0.0
    %1157 = vmatprep.subr.mxu0 0.0
    %1158 = vmatpush1.msra.mxu0 0.0
    %1159 = vmatprep.subr.mxu0 0.0
    %1160 = vmatpush1.msra.mxu0 0.0
    %1161 = vmatprep.mubr.f32.mxu0 0.0
    %1162 = vmatmul.mubr.f32.gmra.mrb[0].mxu0 %v1095
    %v1163 = vpop.f32.mrb[0].mxu0
    %v1164 = vadd.f32 0.0, %v1163
    %v1165 = vpop.f32.mrb[0].mxu0
    %1166 = vdwg.mxu0
    %v1168 = vsel %vm289, %v1164, 0
    %1170 = vmatprep.subr.mxu0 0.0
    %1171 = vmatpush1.msra.mxu0 %v281
    %1172 = vmatprep.subr.mxu0 0.0
    %1173 = vmatpush1.msra.mxu0 0.0
    %1174 = vmatprep.subr.mxu0 0.0
    %1175 = vmatpush1.msra.mxu0 0.0
    %1176 = vmatprep.subr.mxu0 0.0
    %1177 = vmatpush1.msra.mxu0 0.0
    %1178 = vmatprep.subr.mxu0 0.0
    %1179 = vmatpush1.msra.mxu0 0.0
    %1180 = vmatprep.subr.mxu0 0.0
    %1181 = vmatpush1.msra.mxu0 0.0
    %1182 = vmatprep.subr.mxu0 0.0
    %1183 = vmatpush1.msra.mxu0 0.0
    %1184 = vmatprep.subr.mxu0 0.0
    %1185 = vmatpush1.msra.mxu0 0.0
    %1186 = vmatprep.subr.mxu0 0.0
    %1187 = vmatpush1.msra.mxu0 0.0
    %1188 = vmatprep.subr.mxu0 0.0
    %1189 = vmatpush1.msra.mxu0 0.0
    %1190 = vmatprep.subr.mxu0 0.0
    %1191 = vmatpush1.msra.mxu0 0.0
    %1192 = vmatprep.subr.mxu0 0.0
    %1193 = vmatpush1.msra.mxu0 0.0
    %1194 = vmatprep.subr.mxu0 0.0
    %1195 = vmatpush1.msra.mxu0 0.0
    %1196 = vmatprep.subr.mxu0 0.0
    %1197 = vmatpush1.msra.mxu0 0.0
    %1198 = vmatprep.subr.mxu0 0.0
    %1199 = vmatpush1.msra.mxu0 0.0
    %1200 = vmatprep.subr.mxu0 0.0
    %1201 = vmatpush1.msra.mxu0 0.0
    %1202 = vmatprep.subr.mxu0 0.0
    %1203 = vmatpush1.msra.mxu0 0.0
    %1204 = vmatprep.subr.mxu0 0.0
    %1205 = vmatpush1.msra.mxu0 0.0
    %1206 = vmatprep.subr.mxu0 0.0
    %1207 = vmatpush1.msra.mxu0 0.0
    %1208 = vmatprep.subr.mxu0 0.0
    %1209 = vmatpush1.msra.mxu0 0.0
    %1210 = vmatprep.subr.mxu0 0.0
    %1211 = vmatpush1.msra.mxu0 0.0
    %1212 = vmatprep.subr.mxu0 0.0
    %1213 = vmatpush1.msra.mxu0 0.0
    %1214 = vmatprep.subr.mxu0 0.0
    %1215 = vmatpush1.msra.mxu0 0.0
    %1216 = vmatprep.subr.mxu0 0.0
    %1217 = vmatpush1.msra.mxu0 0.0
    %1218 = vmatprep.subr.mxu0 0.0
    %1219 = vmatpush1.msra.mxu0 0.0
    %1220 = vmatprep.subr.mxu0 0.0
    %1221 = vmatpush1.msra.mxu0 0.0
    %1222 = vmatprep.subr.mxu0 0.0
    %1223 = vmatpush1.msra.mxu0 0.0
    %1224 = vmatprep.subr.mxu0 0.0
    %1225 = vmatpush1.msra.mxu0 0.0
    %1226 = vmatprep.subr.mxu0 0.0
    %1227 = vmatpush1.msra.mxu0 0.0
    %1228 = vmatprep.subr.mxu0 0.0
    %1229 = vmatpush1.msra.mxu0 0.0
    %1230 = vmatprep.subr.mxu0 0.0
    %1231 = vmatpush1.msra.mxu0 0.0
    %1232 = vmatprep.subr.mxu0 0.0
    %1233 = vmatpush1.msra.mxu0 0.0
    %1234 = vmatprep.mubr.f32.mxu0 0.0
    %1235 = vmatmul.mubr.f32.gmra.mrb[0].mxu0 %v1168
    %v1236 = vpop.f32.mrb[0].mxu0
    %v1237 = vadd.f32 0.0, %v1236
    %v1238 = vpop.f32.mrb[0].mxu0
    %1239 = vdwg.mxu0
    %v1240 = vadd.f32 %v1001, %v1237
    %v1241 = vlaneseq
    %v1242 = vshrl.u32 %v1241, 7
    %v1243 = vsub.s32 1, %v1242
    %v1244 = vrot.slane %v183, %v1243
    %1246 = vrot.lane.b32.xlu0 %v273, 96
    %v1247 = vpop.permute.xlu0 %1246
    %v1249 = vsel %vm289, %v277, 0
    %v1251 = vsel %vm289, %v1247, 0
    %1253 = vmatprep.subr.mxu0 0.0
    %1254 = vmatpush1.xpose.msra.mxu0 %v1251
    %1255 = vmatprep.subr.mxu0 0.0
    %1256 = vmatpush1.xpose.msra.mxu0 0.0
    %1257 = vmatprep.subr.mxu0 0.0
    %1258 = vmatpush1.xpose.msra.mxu0 0.0
    %1259 = vmatprep.subr.mxu0 0.0
    %1260 = vmatpush1.xpose.msra.mxu0 0.0
    %1261 = vmatprep.subr.mxu0 0.0
    %1262 = vmatpush1.xpose.msra.mxu0 0.0
    %1263 = vmatprep.subr.mxu0 0.0
    %1264 = vmatpush1.xpose.msra.mxu0 0.0
    %1265 = vmatprep.subr.mxu0 0.0
    %1266 = vmatpush1.xpose.msra.mxu0 0.0
    %1267 = vmatprep.subr.mxu0 0.0
    %1268 = vmatpush1.xpose.msra.mxu0 0.0
    %1269 = vmatprep.subr.mxu0 0.0
    %1270 = vmatpush1.xpose.msra.mxu0 0.0
    %1271 = vmatprep.subr.mxu0 0.0
    %1272 = vmatpush1.xpose.msra.mxu0 0.0
    %1273 = vmatprep.subr.mxu0 0.0
    %1274 = vmatpush1.xpose.msra.mxu0 0.0
    %1275 = vmatprep.subr.mxu0 0.0
    %1276 = vmatpush1.xpose.msra.mxu0 0.0
    %1277 = vmatprep.subr.mxu0 0.0
    %1278 = vmatpush1.xpose.msra.mxu0 0.0
    %1279 = vmatprep.subr.mxu0 0.0
    %1280 = vmatpush1.xpose.msra.mxu0 0.0
    %1281 = vmatprep.subr.mxu0 0.0
    %1282 = vmatpush1.xpose.msra.mxu0 0.0
    %1283 = vmatprep.subr.mxu0 0.0
    %1284 = vmatpush1.xpose.msra.mxu0 0.0
    %1285 = vmatprep.subr.mxu0 0.0
    %1286 = vmatpush1.xpose.msra.mxu0 0.0
    %1287 = vmatprep.subr.mxu0 0.0
    %1288 = vmatpush1.xpose.msra.mxu0 0.0
    %1289 = vmatprep.subr.mxu0 0.0
    %1290 = vmatpush1.xpose.msra.mxu0 0.0
    %1291 = vmatprep.subr.mxu0 0.0
    %1292 = vmatpush1.xpose.msra.mxu0 0.0
    %1293 = vmatprep.subr.mxu0 0.0
    %1294 = vmatpush1.xpose.msra.mxu0 0.0
    %1295 = vmatprep.subr.mxu0 0.0
    %1296 = vmatpush1.xpose.msra.mxu0 0.0
    %1297 = vmatprep.subr.mxu0 0.0
    %1298 = vmatpush1.xpose.msra.mxu0 0.0
    %1299 = vmatprep.subr.mxu0 0.0
    %1300 = vmatpush1.xpose.msra.mxu0 0.0
    %1301 = vmatprep.subr.mxu0 0.0
    %1302 = vmatpush1.xpose.msra.mxu0 0.0
    %1303 = vmatprep.subr.mxu0 0.0
    %1304 = vmatpush1.xpose.msra.mxu0 0.0
    %1305 = vmatprep.subr.mxu0 0.0
    %1306 = vmatpush1.xpose.msra.mxu0 0.0
    %1307 = vmatprep.subr.mxu0 0.0
    %1308 = vmatpush1.xpose.msra.mxu0 0.0
    %1309 = vmatprep.subr.mxu0 0.0
    %1310 = vmatpush1.xpose.msra.mxu0 0.0
    %1311 = vmatprep.subr.mxu0 0.0
    %1312 = vmatpush1.xpose.msra.mxu0 0.0
    %1313 = vmatprep.subr.mxu0 0.0
    %1314 = vmatpush1.xpose.msra.mxu0 0.0
    %1315 = vmatprep.subr.mxu0 0.0
    %1316 = vmatpush1.xpose.msra.mxu0 0.0
    %1317 = vmatprep.mubr.f32.mxu0 0.0
    %1318 = vmatmul.mubr.f32.gmra.mrb[0].mxu0 %v1249
    %v1319 = vpop.f32.mrb[0].mxu0
    %v1320 = vadd.f32 %v1244, %v1319
    %v1321 = vpop.f32.mrb[0].mxu0
    %1322 = vdwg.mxu0
    %v1323 = vsel %vm289, %v1320, -inf
    %1324 = vmax.xlane.f32.xlu0 %v1323
    %v1325 = vpop.xlane.xlu0 %1324
    %v1326 = vsub.f32 %v1320, %v1325
    %v1327 = vmul.f32 %v1326, 1.442695
    %v1328 = vpow.pop %v1327
    %v1329 = vsel %vm289, %v1328, 0.0
    %1330 = vadd.xlane.f32.xlu0 %v1329
    %v1331 = vpop.xlane.xlu0 %1330
    %v1332 = vrcp.pop %v1331
    %v1333 = vmul.f32 %v1328, %v1332
    %1334 = vrot.lane.b32.xlu0 %v273, 64
    %v1335 = vpop.permute.xlu0 %1334
    %v1338 = vsel %vm289, %v1333, 0
    %1340 = vmatprep.subr.mxu0 0.0
    %1341 = vmatpush1.msra.mxu0 %v1335
    %1342 = vmatprep.subr.mxu0 0.0
    %1343 = vmatpush1.msra.mxu0 0.0
    %1344 = vmatprep.subr.mxu0 0.0
    %1345 = vmatpush1.msra.mxu0 0.0
    %1346 = vmatprep.subr.mxu0 0.0
    %1347 = vmatpush1.msra.mxu0 0.0
    %1348 = vmatprep.subr.mxu0 0.0
    %1349 = vmatpush1.msra.mxu0 0.0
    %1350 = vmatprep.subr.mxu0 0.0
    %1351 = vmatpush1.msra.mxu0 0.0
    %1352 = vmatprep.subr.mxu0 0.0
    %1353 = vmatpush1.msra.mxu0 0.0
    %1354 = vmatprep.subr.mxu0 0.0
    %1355 = vmatpush1.msra.mxu0 0.0
    %1356 = vmatprep.subr.mxu0 0.0
    %1357 = vmatpush1.msra.mxu0 0.0
    %1358 = vmatprep.subr.mxu0 0.0
    %1359 = vmatpush1.msra.mxu0 0.0
    %1360 = vmatprep.subr.mxu0 0.0
    %1361 = vmatpush1.msra.mxu0 0.0
    %1362 = vmatprep.subr.mxu0 0.0
    %1363 = vmatpush1.msra.mxu0 0.0
    %1364 = vmatprep.subr.mxu0 0.0
    %1365 = vmatpush1.msra.mxu0 0.0
    %1366 = vmatprep.subr.mxu0 0.0
    %1367 = vmatpush1.msra.mxu0 0.0
    %1368 = vmatprep.subr.mxu0 0.0
    %1369 = vmatpush1.msra.mxu0 0.0
    %1370 = vmatprep.subr.mxu0 0.0
    %1371 = vmatpush1.msra.mxu0 0.0
    %1372 = vmatprep.subr.mxu0 0.0
    %1373 = vmatpush1.msra.mxu0 0.0
    %1374 = vmatprep.subr.mxu0 0.0
    %1375 = vmatpush1.msra.mxu0 0.0
    %1376 = vmatprep.subr.mxu0 0.0
    %1377 = vmatpush1.msra.mxu0 0.0
    %1378 = vmatprep.subr.mxu0 0.0
    %1379 = vmatpush1.msra.mxu0 0.0
    %1380 = vmatprep.subr.mxu0 0.0
    %1381 = vmatpush1.msra.mxu0 0.0
    %1382 = vmatprep.subr.mxu0 0.0
    %1383 = vmatpush1.msra.mxu0 0.0
    %1384 = vmatprep.subr.mxu0 0.0
    %1385 = vmatpush1.msra.mxu0 0.0
    %1386 = vmatprep.subr.mxu0 0.0
    %1387 = vmatpush1.msra.mxu0 0.0
    %1388 = vmatprep.subr.mxu0 0.0
    %1389 = vmatpush1.msra.mxu0 0.0
    %1390 = vmatprep.subr.mxu0 0.0
    %1391 = vmatpush1.msra.mxu0 0.0
    %1392 = vmatprep.subr.mxu0 0.0
    %1393 = vmatpush1.msra.mxu0 0.0
    %1394 = vmatprep.subr.mxu0 0.0
    %1395 = vmatpush1.msra.mxu0 0.0
    %1396 = vmatprep.subr.mxu0 0.0
    %1397 = vmatpush1.msra.mxu0 0.0
    %1398 = vmatprep.subr.mxu0 0.0
    %1399 = vmatpush1.msra.mxu0 0.0
    %1400 = vmatprep.subr.mxu0 0.0
    %1401 = vmatpush1.msra.mxu0 0.0
    %1402 = vmatprep.subr.mxu0 0.0
    %1403 = vmatpush1.msra.mxu0 0.0
    %1404 = vmatprep.mubr.f32.mxu0 0.0
    %1405 = vmatmul.mubr.f32.gmra.mrb[0].mxu0 %v1338
    %v1406 = vpop.f32.mrb[0].mxu0
    %v1407 = vadd.f32 0.0, %v1406
    %v1408 = vpop.f32.mrb[0].mxu0
    %1409 = vdwg.mxu0
    %1410 = vrot.lane.b32.xlu0 %v277, 120
    %v1411 = vpop.permute.xlu0 %1410
    %1412 = vrot.lane.b32.xlu0 %v273, 88
    %v1413 = vpop.permute.xlu0 %1412
    %v1414 = vsel %vm289, %v1411, 0
    %v1416 = vsel %vm289, %v1413, 0
    %1418 = vmatprep.subr.mxu0 0.0
    %1419 = vmatpush1.xpose.msra.mxu0 %v1416
    %1420 = vmatprep.subr.mxu0 0.0
    %1421 = vmatpush1.xpose.msra.mxu0 0.0
    %1422 = vmatprep.subr.mxu0 0.0
    %1423 = vmatpush1.xpose.msra.mxu0 0.0
    %1424 = vmatprep.subr.mxu0 0.0
    %1425 = vmatpush1.xpose.msra.mxu0 0.0
    %1426 = vmatprep.subr.mxu0 0.0
    %1427 = vmatpush1.xpose.msra.mxu0 0.0
    %1428 = vmatprep.subr.mxu0 0.0
    %1429 = vmatpush1.xpose.msra.mxu0 0.0
    %1430 = vmatprep.subr.mxu0 0.0
    %1431 = vmatpush1.xpose.msra.mxu0 0.0
    %1432 = vmatprep.subr.mxu0 0.0
    %1433 = vmatpush1.xpose.msra.mxu0 0.0
    %1434 = vmatprep.subr.mxu0 0.0
    %1435 = vmatpush1.xpose.msra.mxu0 0.0
    %1436 = vmatprep.subr.mxu0 0.0
    %1437 = vmatpush1.xpose.msra.mxu0 0.0
    %1438 = vmatprep.subr.mxu0 0.0
    %1439 = vmatpush1.xpose.msra.mxu0 0.0
    %1440 = vmatprep.subr.mxu0 0.0
    %1441 = vmatpush1.xpose.msra.mxu0 0.0
    %1442 = vmatprep.subr.mxu0 0.0
    %1443 = vmatpush1.xpose.msra.mxu0 0.0
    %1444 = vmatprep.subr.mxu0 0.0
    %1445 = vmatpush1.xpose.msra.mxu0 0.0
    %1446 = vmatprep.subr.mxu0 0.0
    %1447 = vmatpush1.xpose.msra.mxu0 0.0
    %1448 = vmatprep.subr.mxu0 0.0
    %1449 = vmatpush1.xpose.msra.mxu0 0.0
    %1450 = vmatprep.subr.mxu0 0.0
    %1451 = vmatpush1.xpose.msra.mxu0 0.0
    %1452 = vmatprep.subr.mxu0 0.0
    %1453 = vmatpush1.xpose.msra.mxu0 0.0
    %1454 = vmatprep.subr.mxu0 0.0
    %1455 = vmatpush1.xpose.msra.mxu0 0.0
    %1456 = vmatprep.subr.mxu0 0.0
    %1457 = vmatpush1.xpose.msra.mxu0 0.0
    %1458 = vmatprep.subr.mxu0 0.0
    %1459 = vmatpush1.xpose.msra.mxu0 0.0
    %1460 = vmatprep.subr.mxu0 0.0
    %1461 = vmatpush1.xpose.msra.mxu0 0.0
    %1462 = vmatprep.subr.mxu0 0.0
    %1463 = vmatpush1.xpose.msra.mxu0 0.0
    %1464 = vmatprep.subr.mxu0 0.0
    %1465 = vmatpush1.xpose.msra.mxu0 0.0
    %1466 = vmatprep.subr.mxu0 0.0
    %1467 = vmatpush1.xpose.msra.mxu0 0.0
    %1468 = vmatprep.subr.mxu0 0.0
    %1469 = vmatpush1.xpose.msra.mxu0 0.0
    %1470 = vmatprep.subr.mxu0 0.0
    %1471 = vmatpush1.xpose.msra.mxu0 0.0
    %1472 = vmatprep.subr.mxu0 0.0
    %1473 = vmatpush1.xpose.msra.mxu0 0.0
    %1474 = vmatprep.subr.mxu0 0.0
    %1475 = vmatpush1.xpose.msra.mxu0 0.0
    %1476 = vmatprep.subr.mxu0 0.0
    %1477 = vmatpush1.xpose.msra.mxu0 0.0
    %1478 = vmatprep.subr.mxu0 0.0
    %1479 = vmatpush1.xpose.msra.mxu0 0.0
    %1480 = vmatprep.subr.mxu0 0.0
    %1481 = vmatpush1.xpose.msra.mxu0 0.0
    %1482 = vmatprep.mubr.f32.mxu0 0.0
    %1483 = vmatmul.mubr.f32.gmra.mrb[0].mxu0 %v1414
    %v1484 = vpop.f32.mrb[0].mxu0
    %v1485 = vadd.f32 %v1244, %v1484
    %v1486 = vpop.f32.mrb[0].mxu0
    %1487 = vdwg.mxu0
    %v1488 = vsel %vm289, %v1485, -inf
    %1489 = vmax.xlane.f32.xlu0 %v1488
    %v1490 = vpop.xlane.xlu0 %1489
    %v1491 = vsub.f32 %v1485, %v1490
    %v1492 = vmul.f32 %v1491, 1.442695
    %v1493 = vpow.pop %v1492
    %v1494 = vsel %vm289, %v1493, 0.0
    %1495 = vadd.xlane.f32.xlu0 %v1494
    %v1496 = vpop.xlane.xlu0 %1495
    %v1497 = vrcp.pop %v1496
    %v1498 = vmul.f32 %v1493, %v1497
    %1499 = vrot.lane.b32.xlu0 %v273, 56
    %v1500 = vpop.permute.xlu0 %1499
    %v1503 = vsel %vm289, %v1498, 0
    %1505 = vmatprep.subr.mxu0 0.0
    %1506 = vmatpush1.msra.mxu0 %v1500
    %1507 = vmatprep.subr.mxu0 0.0
    %1508 = vmatpush1.msra.mxu0 0.0
    %1509 = vmatprep.subr.mxu0 0.0
    %1510 = vmatpush1.msra.mxu0 0.0
    %1511 = vmatprep.subr.mxu0 0.0
    %1512 = vmatpush1.msra.mxu0 0.0
    %1513 = vmatprep.subr.mxu0 0.0
    %1514 = vmatpush1.msra.mxu0 0.0
    %1515 = vmatprep.subr.mxu0 0.0
    %1516 = vmatpush1.msra.mxu0 0.0
    %1517 = vmatprep.subr.mxu0 0.0
    %1518 = vmatpush1.msra.mxu0 0.0
    %1519 = vmatprep.subr.mxu0 0.0
    %1520 = vmatpush1.msra.mxu0 0.0
    %1521 = vmatprep.subr.mxu0 0.0
    %1522 = vmatpush1.msra.mxu0 0.0
    %1523 = vmatprep.subr.mxu0 0.0
    %1524 = vmatpush1.msra.mxu0 0.0
    %1525 = vmatprep.subr.mxu0 0.0
    %1526 = vmatpush1.msra.mxu0 0.0
    %1527 = vmatprep.subr.mxu0 0.0
    %1528 = vmatpush1.msra.mxu0 0.0
    %1529 = vmatprep.subr.mxu0 0.0
    %1530 = vmatpush1.msra.mxu0 0.0
    %1531 = vmatprep.subr.mxu0 0.0
    %1532 = vmatpush1.msra.mxu0 0.0
    %1533 = vmatprep.subr.mxu0 0.0
    %1534 = vmatpush1.msra.mxu0 0.0
    %1535 = vmatprep.subr.mxu0 0.0
    %1536 = vmatpush1.msra.mxu0 0.0
    %1537 = vmatprep.subr.mxu0 0.0
    %1538 = vmatpush1.msra.mxu0 0.0
    %1539 = vmatprep.subr.mxu0 0.0
    %1540 = vmatpush1.msra.mxu0 0.0
    %1541 = vmatprep.subr.mxu0 0.0
    %1542 = vmatpush1.msra.mxu0 0.0
    %1543 = vmatprep.subr.mxu0 0.0
    %1544 = vmatpush1.msra.mxu0 0.0
    %1545 = vmatprep.subr.mxu0 0.0
    %1546 = vmatpush1.msra.mxu0 0.0
    %1547 = vmatprep.subr.mxu0 0.0
    %1548 = vmatpush1.msra.mxu0 0.0
    %1549 = vmatprep.subr.mxu0 0.0
    %1550 = vmatpush1.msra.mxu0 0.0
    %1551 = vmatprep.subr.mxu0 0.0
    %1552 = vmatpush1.msra.mxu0 0.0
    %1553 = vmatprep.subr.mxu0 0.0
    %1554 = vmatpush1.msra.mxu0 0.0
    %1555 = vmatprep.subr.mxu0 0.0
    %1556 = vmatpush1.msra.mxu0 0.0
    %1557 = vmatprep.subr.mxu0 0.0
    %1558 = vmatpush1.msra.mxu0 0.0
    %1559 = vmatprep.subr.mxu0 0.0
    %1560 = vmatpush1.msra.mxu0 0.0
    %1561 = vmatprep.subr.mxu0 0.0
    %1562 = vmatpush1.msra.mxu0 0.0
    %1563 = vmatprep.subr.mxu0 0.0
    %1564 = vmatpush1.msra.mxu0 0.0
    %1565 = vmatprep.subr.mxu0 0.0
    %1566 = vmatpush1.msra.mxu0 0.0
    %1567 = vmatprep.subr.mxu0 0.0
    %1568 = vmatpush1.msra.mxu0 0.0
    %1569 = vmatprep.mubr.f32.mxu0 0.0
    %1570 = vmatmul.mubr.f32.gmra.mrb[0].mxu0 %v1503
    %v1571 = vpop.f32.mrb[0].mxu0
    %v1572 = vadd.f32 0.0, %v1571
    %v1573 = vpop.f32.mrb[0].mxu0
    %1574 = vdwg.mxu0
    %v1576 = vsel %vm289, %v1572, 0
    %1578 = vmatprep.subr.mxu0 0.0
    %1579 = vmatpush1.msra.mxu0 %v279
    %1580 = vmatprep.subr.mxu0 0.0
    %1581 = vmatpush1.msra.mxu0 0.0
    %1582 = vmatprep.subr.mxu0 0.0
    %1583 = vmatpush1.msra.mxu0 0.0
    %1584 = vmatprep.subr.mxu0 0.0
    %1585 = vmatpush1.msra.mxu0 0.0
    %1586 = vmatprep.subr.mxu0 0.0
    %1587 = vmatpush1.msra.mxu0 0.0
    %1588 = vmatprep.subr.mxu0 0.0
    %1589 = vmatpush1.msra.mxu0 0.0
    %1590 = vmatprep.subr.mxu0 0.0
    %1591 = vmatpush1.msra.mxu0 0.0
    %1592 = vmatprep.subr.mxu0 0.0
    %1593 = vmatpush1.msra.mxu0 0.0
    %1594 = vmatprep.subr.mxu0 0.0
    %1595 = vmatpush1.msra.mxu0 0.0
    %1596 = vmatprep.subr.mxu0 0.0
    %1597 = vmatpush1.msra.mxu0 0.0
    %1598 = vmatprep.subr.mxu0 0.0
    %1599 = vmatpush1.msra.mxu0 0.0
    %1600 = vmatprep.subr.mxu0 0.0
    %1601 = vmatpush1.msra.mxu0 0.0
    %1602 = vmatprep.subr.mxu0 0.0
    %1603 = vmatpush1.msra.mxu0 0.0
    %1604 = vmatprep.subr.mxu0 0.0
    %1605 = vmatpush1.msra.mxu0 0.0
    %1606 = vmatprep.subr.mxu0 0.0
    %1607 = vmatpush1.msra.mxu0 0.0
    %1608 = vmatprep.subr.mxu0 0.0
    %1609 = vmatpush1.msra.mxu0 0.0
    %1610 = vmatprep.subr.mxu0 0.0
    %1611 = vmatpush1.msra.mxu0 0.0
    %1612 = vmatprep.subr.mxu0 0.0
    %1613 = vmatpush1.msra.mxu0 0.0
    %1614 = vmatprep.subr.mxu0 0.0
    %1615 = vmatpush1.msra.mxu0 0.0
    %1616 = vmatprep.subr.mxu0 0.0
    %1617 = vmatpush1.msra.mxu0 0.0
    %1618 = vmatprep.subr.mxu0 0.0
    %1619 = vmatpush1.msra.mxu0 0.0
    %1620 = vmatprep.subr.mxu0 0.0
    %1621 = vmatpush1.msra.mxu0 0.0
    %1622 = vmatprep.subr.mxu0 0.0
    %1623 = vmatpush1.msra.mxu0 0.0
    %1624 = vmatprep.subr.mxu0 0.0
    %1625 = vmatpush1.msra.mxu0 0.0
    %1626 = vmatprep.subr.mxu0 0.0
    %1627 = vmatpush1.msra.mxu0 0.0
    %1628 = vmatprep.subr.mxu0 0.0
    %1629 = vmatpush1.msra.mxu0 0.0
    %1630 = vmatprep.subr.mxu0 0.0
    %1631 = vmatpush1.msra.mxu0 0.0
    %1632 = vmatprep.subr.mxu0 0.0
    %1633 = vmatpush1.msra.mxu0 0.0
    %1634 = vmatprep.subr.mxu0 0.0
    %1635 = vmatpush1.msra.mxu0 0.0
    %1636 = vmatprep.subr.mxu0 0.0
    %1637 = vmatpush1.msra.mxu0 0.0
    %1638 = vmatprep.subr.mxu0 0.0
    %1639 = vmatpush1.msra.mxu0 0.0
    %1640 = vmatprep.subr.mxu0 0.0
    %1641 = vmatpush1.msra.mxu0 0.0
    %1642 = vmatprep.mubr.f32.mxu0 0.0
    %1643 = vmatmul.mubr.f32.gmra.mrb[0].mxu0 %v1576
    %v1644 = vpop.f32.mrb[0].mxu0
    %v1645 = vadd.f32 0.0, %v1644
    %v1646 = vpop.f32.mrb[0].mxu0
    %1647 = vdwg.mxu0
    %v1649 = vsel %vm289, %v1407, 0
    %1651 = vmatprep.subr.mxu0 0.0
    %1652 = vmatpush1.msra.mxu0 %v278
    %1653 = vmatprep.subr.mxu0 0.0
    %1654 = vmatpush1.msra.mxu0 0.0
    %1655 = vmatprep.subr.mxu0 0.0
    %1656 = vmatpush1.msra.mxu0 0.0
    %1657 = vmatprep.subr.mxu0 0.0
    %1658 = vmatpush1.msra.mxu0 0.0
    %1659 = vmatprep.subr.mxu0 0.0
    %1660 = vmatpush1.msra.mxu0 0.0
    %1661 = vmatprep.subr.mxu0 0.0
    %1662 = vmatpush1.msra.mxu0 0.0
    %1663 = vmatprep.subr.mxu0 0.0
    %1664 = vmatpush1.msra.mxu0 0.0
    %1665 = vmatprep.subr.mxu0 0.0
    %1666 = vmatpush1.msra.mxu0 0.0
    %1667 = vmatprep.subr.mxu0 0.0
    %1668 = vmatpush1.msra.mxu0 0.0
    %1669 = vmatprep.subr.mxu0 0.0
    %1670 = vmatpush1.msra.mxu0 0.0
    %1671 = vmatprep.subr.mxu0 0.0
    %1672 = vmatpush1.msra.mxu0 0.0
    %1673 = vmatprep.subr.mxu0 0.0
    %1674 = vmatpush1.msra.mxu0 0.0
    %1675 = vmatprep.subr.mxu0 0.0
    %1676 = vmatpush1.msra.mxu0 0.0
    %1677 = vmatprep.subr.mxu0 0.0
    %1678 = vmatpush1.msra.mxu0 0.0
    %1679 = vmatprep.subr.mxu0 0.0
    %1680 = vmatpush1.msra.mxu0 0.0
    %1681 = vmatprep.subr.mxu0 0.0
    %1682 = vmatpush1.msra.mxu0 0.0
    %1683 = vmatprep.subr.mxu0 0.0
    %1684 = vmatpush1.msra.mxu0 0.0
    %1685 = vmatprep.subr.mxu0 0.0
    %1686 = vmatpush1.msra.mxu0 0.0
    %1687 = vmatprep.subr.mxu0 0.0
    %1688 = vmatpush1.msra.mxu0 0.0
    %1689 = vmatprep.subr.mxu0 0.0
    %1690 = vmatpush1.msra.mxu0 0.0
    %1691 = vmatprep.subr.mxu0 0.0
    %1692 = vmatpush1.msra.mxu0 0.0
    %1693 = vmatprep.subr.mxu0 0.0
    %1694 = vmatpush1.msra.mxu0 0.0
    %1695 = vmatprep.subr.mxu0 0.0
    %1696 = vmatpush1.msra.mxu0 0.0
    %1697 = vmatprep.subr.mxu0 0.0
    %1698 = vmatpush1.msra.mxu0 0.0
    %1699 = vmatprep.subr.mxu0 0.0
    %1700 = vmatpush1.msra.mxu0 0.0
    %1701 = vmatprep.subr.mxu0 0.0
    %1702 = vmatpush1.msra.mxu0 0.0
    %1703 = vmatprep.subr.mxu0 0.0
    %1704 = vmatpush1.msra.mxu0 0.0
    %1705 = vmatprep.subr.mxu0 0.0
    %1706 = vmatpush1.msra.mxu0 0.0
    %1707 = vmatprep.subr.mxu0 0.0
    %1708 = vmatpush1.msra.mxu0 0.0
    %1709 = vmatprep.subr.mxu0 0.0
    %1710 = vmatpush1.msra.mxu0 0.0
    %1711 = vmatprep.subr.mxu0 0.0
    %1712 = vmatpush1.msra.mxu0 0.0
    %1713 = vmatprep.subr.mxu0 0.0
    %1714 = vmatpush1.msra.mxu0 0.0
    %1715 = vmatprep.mubr.f32.mxu0 0.0
    %1716 = vmatmul.mubr.f32.gmra.mrb[0].mxu0 %v1649
    %v1717 = vpop.f32.mrb[0].mxu0
    %v1718 = vadd.f32 %v1645, %v1717
    %v1719 = vpop.f32.mrb[0].mxu0
    %1720 = vdwg.mxu0
    %1721 = vrot.lane.b32.xlu0 %v277, 112
    %v1722 = vpop.permute.xlu0 %1721
    %1723 = vrot.lane.b32.xlu0 %v273, 80
    %v1724 = vpop.permute.xlu0 %1723
    %v1725 = vsel %vm289, %v1722, 0
    %v1727 = vsel %vm289, %v1724, 0
    %1729 = vmatprep.subr.mxu0 0.0
    %1730 = vmatpush1.xpose.msra.mxu0 %v1727
    %1731 = vmatprep.subr.mxu0 0.0
    %1732 = vmatpush1.xpose.msra.mxu0 0.0
    %1733 = vmatprep.subr.mxu0 0.0
    %1734 = vmatpush1.xpose.msra.mxu0 0.0
    %1735 = vmatprep.subr.mxu0 0.0
    %1736 = vmatpush1.xpose.msra.mxu0 0.0
    %1737 = vmatprep.subr.mxu0 0.0
    %1738 = vmatpush1.xpose.msra.mxu0 0.0
    %1739 = vmatprep.subr.mxu0 0.0
    %1740 = vmatpush1.xpose.msra.mxu0 0.0
    %1741 = vmatprep.subr.mxu0 0.0
    %1742 = vmatpush1.xpose.msra.mxu0 0.0
    %1743 = vmatprep.subr.mxu0 0.0
    %1744 = vmatpush1.xpose.msra.mxu0 0.0
    %1745 = vmatprep.subr.mxu0 0.0
    %1746 = vmatpush1.xpose.msra.mxu0 0.0
    %1747 = vmatprep.subr.mxu0 0.0
    %1748 = vmatpush1.xpose.msra.mxu0 0.0
    %1749 = vmatprep.subr.mxu0 0.0
    %1750 = vmatpush1.xpose.msra.mxu0 0.0
    %1751 = vmatprep.subr.mxu0 0.0
    %1752 = vmatpush1.xpose.msra.mxu0 0.0
    %1753 = vmatprep.subr.mxu0 0.0
    %1754 = vmatpush1.xpose.msra.mxu0 0.0
    %1755 = vmatprep.subr.mxu0 0.0
    %1756 = vmatpush1.xpose.msra.mxu0 0.0
    %1757 = vmatprep.subr.mxu0 0.0
    %1758 = vmatpush1.xpose.msra.mxu0 0.0
    %1759 = vmatprep.subr.mxu0 0.0
    %1760 = vmatpush1.xpose.msra.mxu0 0.0
    %1761 = vmatprep.subr.mxu0 0.0
    %1762 = vmatpush1.xpose.msra.mxu0 0.0
    %1763 = vmatprep.subr.mxu0 0.0
    %1764 = vmatpush1.xpose.msra.mxu0 0.0
    %1765 = vmatprep.subr.mxu0 0.0
    %1766 = vmatpush1.xpose.msra.mxu0 0.0
    %1767 = vmatprep.subr.mxu0 0.0
    %1768 = vmatpush1.xpose.msra.mxu0 0.0
    %1769 = vmatprep.subr.mxu0 0.0
    %1770 = vmatpush1.xpose.msra.mxu0 0.0
    %1771 = vmatprep.subr.mxu0 0.0
    %1772 = vmatpush1.xpose.msra.mxu0 0.0
    %1773 = vmatprep.subr.mxu0 0.0
    %1774 = vmatpush1.xpose.msra.mxu0 0.0
    %1775 = vmatprep.subr.mxu0 0.0
    %1776 = vmatpush1.xpose.msra.mxu0 0.0
    %1777 = vmatprep.subr.mxu0 0.0
    %1778 = vmatpush1.xpose.msra.mxu0 0.0
    %1779 = vmatprep.subr.mxu0 0.0
    %1780 = vmatpush1.xpose.msra.mxu0 0.0
    %1781 = vmatprep.subr.mxu0 0.0
    %1782 = vmatpush1.xpose.msra.mxu0 0.0
    %1783 = vmatprep.subr.mxu0 0.0
    %1784 = vmatpush1.xpose.msra.mxu0 0.0
    %1785 = vmatprep.subr.mxu0 0.0
    %1786 = vmatpush1.xpose.msra.mxu0 0.0
    %1787 = vmatprep.subr.mxu0 0.0
    %1788 = vmatpush1.xpose.msra.mxu0 0.0
    %1789 = vmatprep.subr.mxu0 0.0
    %1790 = vmatpush1.xpose.msra.mxu0 0.0
    %1791 = vmatprep.subr.mxu0 0.0
    %1792 = vmatpush1.xpose.msra.mxu0 0.0
    %1793 = vmatprep.mubr.f32.mxu0 0.0
    %1794 = vmatmul.mubr.f32.gmra.mrb[0].mxu0 %v1725
    %v1795 = vpop.f32.mrb[0].mxu0
    %v1796 = vadd.f32 %v1244, %v1795
    %v1797 = vpop.f32.mrb[0].mxu0
    %1798 = vdwg.mxu0
    %v1799 = vsel %vm289, %v1796, -inf
    %1800 = vmax.xlane.f32.xlu0 %v1799
    %v1801 = vpop.xlane.xlu0 %1800
    %v1802 = vsub.f32 %v1796, %v1801
    %v1803 = vmul.f32 %v1802, 1.442695
    %v1804 = vpow.pop %v1803
    %v1805 = vsel %vm289, %v1804, 0.0
    %1806 = vadd.xlane.f32.xlu0 %v1805
    %v1807 = vpop.xlane.xlu0 %1806
    %v1808 = vrcp.pop %v1807
    %v1809 = vmul.f32 %v1804, %v1808
    %1810 = vrot.lane.b32.xlu0 %v273, 48
    %v1811 = vpop.permute.xlu0 %1810
    %v1814 = vsel %vm289, %v1809, 0
    %1816 = vmatprep.subr.mxu0 0.0
    %1817 = vmatpush1.msra.mxu0 %v1811
    %1818 = vmatprep.subr.mxu0 0.0
    %1819 = vmatpush1.msra.mxu0 0.0
    %1820 = vmatprep.subr.mxu0 0.0
    %1821 = vmatpush1.msra.mxu0 0.0
    %1822 = vmatprep.subr.mxu0 0.0
    %1823 = vmatpush1.msra.mxu0 0.0
    %1824 = vmatprep.subr.mxu0 0.0
    %1825 = vmatpush1.msra.mxu0 0.0
    %1826 = vmatprep.subr.mxu0 0.0
    %1827 = vmatpush1.msra.mxu0 0.0
    %1828 = vmatprep.subr.mxu0 0.0
    %1829 = vmatpush1.msra.mxu0 0.0
    %1830 = vmatprep.subr.mxu0 0.0
    %1831 = vmatpush1.msra.mxu0 0.0
    %1832 = vmatprep.subr.mxu0 0.0
    %1833 = vmatpush1.msra.mxu0 0.0
    %1834 = vmatprep.subr.mxu0 0.0
    %1835 = vmatpush1.msra.mxu0 0.0
    %1836 = vmatprep.subr.mxu0 0.0
    %1837 = vmatpush1.msra.mxu0 0.0
    %1838 = vmatprep.subr.mxu0 0.0
    %1839 = vmatpush1.msra.mxu0 0.0
    %1840 = vmatprep.subr.mxu0 0.0
    %1841 = vmatpush1.msra.mxu0 0.0
    %1842 = vmatprep.subr.mxu0 0.0
    %1843 = vmatpush1.msra.mxu0 0.0
    %1844 = vmatprep.subr.mxu0 0.0
    %1845 = vmatpush1.msra.mxu0 0.0
    %1846 = vmatprep.subr.mxu0 0.0
    %1847 = vmatpush1.msra.mxu0 0.0
    %1848 = vmatprep.subr.mxu0 0.0
    %1849 = vmatpush1.msra.mxu0 0.0
    %1850 = vmatprep.subr.mxu0 0.0
    %1851 = vmatpush1.msra.mxu0 0.0
    %1852 = vmatprep.subr.mxu0 0.0
    %1853 = vmatpush1.msra.mxu0 0.0
    %1854 = vmatprep.subr.mxu0 0.0
    %1855 = vmatpush1.msra.mxu0 0.0
    %1856 = vmatprep.subr.mxu0 0.0
    %1857 = vmatpush1.msra.mxu0 0.0
    %1858 = vmatprep.subr.mxu0 0.0
    %1859 = vmatpush1.msra.mxu0 0.0
    %1860 = vmatprep.subr.mxu0 0.0
    %1861 = vmatpush1.msra.mxu0 0.0
    %1862 = vmatprep.subr.mxu0 0.0
    %1863 = vmatpush1.msra.mxu0 0.0
    %1864 = vmatprep.subr.mxu0 0.0
    %1865 = vmatpush1.msra.mxu0 0.0
    %1866 = vmatprep.subr.mxu0 0.0
    %1867 = vmatpush1.msra.mxu0 0.0
    %1868 = vmatprep.subr.mxu0 0.0
    %1869 = vmatpush1.msra.mxu0 0.0
    %1870 = vmatprep.subr.mxu0 0.0
    %1871 = vmatpush1.msra.mxu0 0.0
    %1872 = vmatprep.subr.mxu0 0.0
    %1873 = vmatpush1.msra.mxu0 0.0
    %1874 = vmatprep.subr.mxu0 0.0
    %1875 = vmatpush1.msra.mxu0 0.0
    %1876 = vmatprep.subr.mxu0 0.0
    %1877 = vmatpush1.msra.mxu0 0.0
    %1878 = vmatprep.subr.mxu0 0.0
    %1879 = vmatpush1.msra.mxu0 0.0
    %1880 = vmatprep.mubr.f32.mxu0 0.0
    %1881 = vmatmul.mubr.f32.gmra.mrb[0].mxu0 %v1814
    %v1882 = vpop.f32.mrb[0].mxu0
    %v1883 = vadd.f32 0.0, %v1882
    %v1884 = vpop.f32.mrb[0].mxu0
    %1885 = vdwg.mxu0
    %v1887 = vsel %vm289, %v1883, 0
    %1889 = vmatprep.subr.mxu0 0.0
    %1890 = vmatpush1.msra.mxu0 %v280
    %1891 = vmatprep.subr.mxu0 0.0
    %1892 = vmatpush1.msra.mxu0 0.0
    %1893 = vmatprep.subr.mxu0 0.0
    %1894 = vmatpush1.msra.mxu0 0.0
    %1895 = vmatprep.subr.mxu0 0.0
    %1896 = vmatpush1.msra.mxu0 0.0
    %1897 = vmatprep.subr.mxu0 0.0
    %1898 = vmatpush1.msra.mxu0 0.0
    %1899 = vmatprep.subr.mxu0 0.0
    %1900 = vmatpush1.msra.mxu0 0.0
    %1901 = vmatprep.subr.mxu0 0.0
    %1902 = vmatpush1.msra.mxu0 0.0
    %1903 = vmatprep.subr.mxu0 0.0
    %1904 = vmatpush1.msra.mxu0 0.0
    %1905 = vmatprep.subr.mxu0 0.0
    %1906 = vmatpush1.msra.mxu0 0.0
    %1907 = vmatprep.subr.mxu0 0.0
    %1908 = vmatpush1.msra.mxu0 0.0
    %1909 = vmatprep.subr.mxu0 0.0
    %1910 = vmatpush1.msra.mxu0 0.0
    %1911 = vmatprep.subr.mxu0 0.0
    %1912 = vmatpush1.msra.mxu0 0.0
    %1913 = vmatprep.subr.mxu0 0.0
    %1914 = vmatpush1.msra.mxu0 0.0
    %1915 = vmatprep.subr.mxu0 0.0
    %1916 = vmatpush1.msra.mxu0 0.0
    %1917 = vmatprep.subr.mxu0 0.0
    %1918 = vmatpush1.msra.mxu0 0.0
    %1919 = vmatprep.subr.mxu0 0.0
    %1920 = vmatpush1.msra.mxu0 0.0
    %1921 = vmatprep.subr.mxu0 0.0
    %1922 = vmatpush1.msra.mxu0 0.0
    %1923 = vmatprep.subr.mxu0 0.0
    %1924 = vmatpush1.msra.mxu0 0.0
    %1925 = vmatprep.subr.mxu0 0.0
    %1926 = vmatpush1.msra.mxu0 0.0
    %1927 = vmatprep.subr.mxu0 0.0
    %1928 = vmatpush1.msra.mxu0 0.0
    %1929 = vmatprep.subr.mxu0 0.0
    %1930 = vmatpush1.msra.mxu0 0.0
    %1931 = vmatprep.subr.mxu0 0.0
    %1932 = vmatpush1.msra.mxu0 0.0
    %1933 = vmatprep.subr.mxu0 0.0
    %1934 = vmatpush1.msra.mxu0 0.0
    %1935 = vmatprep.subr.mxu0 0.0
    %1936 = vmatpush1.msra.mxu0 0.0
    %1937 = vmatprep.subr.mxu0 0.0
    %1938 = vmatpush1.msra.mxu0 0.0
    %1939 = vmatprep.subr.mxu0 0.0
    %1940 = vmatpush1.msra.mxu0 0.0
    %1941 = vmatprep.subr.mxu0 0.0
    %1942 = vmatpush1.msra.mxu0 0.0
    %1943 = vmatprep.subr.mxu0 0.0
    %1944 = vmatpush1.msra.mxu0 0.0
    %1945 = vmatprep.subr.mxu0 0.0
    %1946 = vmatpush1.msra.mxu0 0.0
    %1947 = vmatprep.subr.mxu0 0.0
    %1948 = vmatpush1.msra.mxu0 0.0
    %1949 = vmatprep.subr.mxu0 0.0
    %1950 = vmatpush1.msra.mxu0 0.0
    %1951 = vmatprep.subr.mxu0 0.0
    %1952 = vmatpush1.msra.mxu0 0.0
    %1953 = vmatprep.mubr.f32.mxu0 0.0
    %1954 = vmatmul.mubr.f32.gmra.mrb[0].mxu0 %v1887
    %v1955 = vpop.f32.mrb[0].mxu0
    %v1956 = vadd.f32 0.0, %v1955
    %v1957 = vpop.f32.mrb[0].mxu0
    %1958 = vdwg.mxu0
    %v1959 = vadd.f32 %v1718, %v1956
    %1960 = vrot.lane.b32.xlu0 %v277, 104
    %v1961 = vpop.permute.xlu0 %1960
    %1962 = vrot.lane.b32.xlu0 %v273, 72
    %v1963 = vpop.permute.xlu0 %1962
    %v1964 = vsel %vm289, %v1961, 0
    %v1966 = vsel %vm289, %v1963, 0
    %1968 = vmatprep.subr.mxu0 0.0
    %1969 = vmatpush1.xpose.msra.mxu0 %v1966
    %1970 = vmatprep.subr.mxu0 0.0
    %1971 = vmatpush1.xpose.msra.mxu0 0.0
    %1972 = vmatprep.subr.mxu0 0.0
    %1973 = vmatpush1.xpose.msra.mxu0 0.0
    %1974 = vmatprep.subr.mxu0 0.0
    %1975 = vmatpush1.xpose.msra.mxu0 0.0
    %1976 = vmatprep.subr.mxu0 0.0
    %1977 = vmatpush1.xpose.msra.mxu0 0.0
    %1978 = vmatprep.subr.mxu0 0.0
    %1979 = vmatpush1.xpose.msra.mxu0 0.0
    %1980 = vmatprep.subr.mxu0 0.0
    %1981 = vmatpush1.xpose.msra.mxu0 0.0
    %1982 = vmatprep.subr.mxu0 0.0
    %1983 = vmatpush1.xpose.msra.mxu0 0.0
    %1984 = vmatprep.subr.mxu0 0.0
    %1985 = vmatpush1.xpose.msra.mxu0 0.0
    %1986 = vmatprep.subr.mxu0 0.0
    %1987 = vmatpush1.xpose.msra.mxu0 0.0
    %1988 = vmatprep.subr.mxu0 0.0
    %1989 = vmatpush1.xpose.msra.mxu0 0.0
    %1990 = vmatprep.subr.mxu0 0.0
    %1991 = vmatpush1.xpose.msra.mxu0 0.0
    %1992 = vmatprep.subr.mxu0 0.0
    %1993 = vmatpush1.xpose.msra.mxu0 0.0
    %1994 = vmatprep.subr.mxu0 0.0
    %1995 = vmatpush1.xpose.msra.mxu0 0.0
    %1996 = vmatprep.subr.mxu0 0.0
    %1997 = vmatpush1.xpose.msra.mxu0 0.0
    %1998 = vmatprep.subr.mxu0 0.0
    %1999 = vmatpush1.xpose.msra.mxu0 0.0
    %2000 = vmatprep.subr.mxu0 0.0
    %2001 = vmatpush1.xpose.msra.mxu0 0.0
    %2002 = vmatprep.subr.mxu0 0.0
    %2003 = vmatpush1.xpose.msra.mxu0 0.0
    %2004 = vmatprep.subr.mxu0 0.0
    %2005 = vmatpush1.xpose.msra.mxu0 0.0
    %2006 = vmatprep.subr.mxu0 0.0
    %2007 = vmatpush1.xpose.msra.mxu0 0.0
    %2008 = vmatprep.subr.mxu0 0.0
    %2009 = vmatpush1.xpose.msra.mxu0 0.0
    %2010 = vmatprep.subr.mxu0 0.0
    %2011 = vmatpush1.xpose.msra.mxu0 0.0
    %2012 = vmatprep.subr.mxu0 0.0
    %2013 = vmatpush1.xpose.msra.mxu0 0.0
    %2014 = vmatprep.subr.mxu0 0.0
    %2015 = vmatpush1.xpose.msra.mxu0 0.0
    %2016 = vmatprep.subr.mxu0 0.0
    %2017 = vmatpush1.xpose.msra.mxu0 0.0
    %2018 = vmatprep.subr.mxu0 0.0
    %2019 = vmatpush1.xpose.msra.mxu0 0.0
    %2020 = vmatprep.subr.mxu0 0.0
    %2021 = vmatpush1.xpose.msra.mxu0 0.0
    %2022 = vmatprep.subr.mxu0 0.0
    %2023 = vmatpush1.xpose.msra.mxu0 0.0
    %2024 = vmatprep.subr.mxu0 0.0
    %2025 = vmatpush1.xpose.msra.mxu0 0.0
    %2026 = vmatprep.subr.mxu0 0.0
    %2027 = vmatpush1.xpose.msra.mxu0 0.0
    %2028 = vmatprep.subr.mxu0 0.0
    %2029 = vmatpush1.xpose.msra.mxu0 0.0
    %2030 = vmatprep.subr.mxu0 0.0
    %2031 = vmatpush1.xpose.msra.mxu0 0.0
    %2032 = vmatprep.mubr.f32.mxu0 0.0
    %2033 = vmatmul.mubr.f32.gmra.mrb[0].mxu0 %v1964
    %v2034 = vpop.f32.mrb[0].mxu0
    %v2035 = vadd.f32 %v1244, %v2034
    %v2036 = vpop.f32.mrb[0].mxu0
    %2037 = vdwg.mxu0
    %v2038 = vsel %vm289, %v2035, -inf
    %2039 = vmax.xlane.f32.xlu0 %v2038
    %v2040 = vpop.xlane.xlu0 %2039
    %v2041 = vsub.f32 %v2035, %v2040
    %v2042 = vmul.f32 %v2041, 1.442695
    %v2043 = vpow.pop %v2042
    %v2044 = vsel %vm289, %v2043, 0.0
    %2045 = vadd.xlane.f32.xlu0 %v2044
    %v2046 = vpop.xlane.xlu0 %2045
    %v2047 = vrcp.pop %v2046
    %v2048 = vmul.f32 %v2043, %v2047
    %2049 = vrot.lane.b32.xlu0 %v273, 40
    %v2050 = vpop.permute.xlu0 %2049
    %v2053 = vsel %vm289, %v2048, 0
    %2055 = vmatprep.subr.mxu0 0.0
    %2056 = vmatpush1.msra.mxu0 %v2050
    %2057 = vmatprep.subr.mxu0 0.0
    %2058 = vmatpush1.msra.mxu0 0.0
    %2059 = vmatprep.subr.mxu0 0.0
    %2060 = vmatpush1.msra.mxu0 0.0
    %2061 = vmatprep.subr.mxu0 0.0
    %2062 = vmatpush1.msra.mxu0 0.0
    %2063 = vmatprep.subr.mxu0 0.0
    %2064 = vmatpush1.msra.mxu0 0.0
    %2065 = vmatprep.subr.mxu0 0.0
    %2066 = vmatpush1.msra.mxu0 0.0
    %2067 = vmatprep.subr.mxu0 0.0
    %2068 = vmatpush1.msra.mxu0 0.0
    %2069 = vmatprep.subr.mxu0 0.0
    %2070 = vmatpush1.msra.mxu0 0.0
    %2071 = vmatprep.subr.mxu0 0.0
    %2072 = vmatpush1.msra.mxu0 0.0
    %2073 = vmatprep.subr.mxu0 0.0
    %2074 = vmatpush1.msra.mxu0 0.0
    %2075 = vmatprep.subr.mxu0 0.0
    %2076 = vmatpush1.msra.mxu0 0.0
    %2077 = vmatprep.subr.mxu0 0.0
    %2078 = vmatpush1.msra.mxu0 0.0
    %2079 = vmatprep.subr.mxu0 0.0
    %2080 = vmatpush1.msra.mxu0 0.0
    %2081 = vmatprep.subr.mxu0 0.0
    %2082 = vmatpush1.msra.mxu0 0.0
    %2083 = vmatprep.subr.mxu0 0.0
    %2084 = vmatpush1.msra.mxu0 0.0
    %2085 = vmatprep.subr.mxu0 0.0
    %2086 = vmatpush1.msra.mxu0 0.0
    %2087 = vmatprep.subr.mxu0 0.0
    %2088 = vmatpush1.msra.mxu0 0.0
    %2089 = vmatprep.subr.mxu0 0.0
    %2090 = vmatpush1.msra.mxu0 0.0
    %2091 = vmatprep.subr.mxu0 0.0
    %2092 = vmatpush1.msra.mxu0 0.0
    %2093 = vmatprep.subr.mxu0 0.0
    %2094 = vmatpush1.msra.mxu0 0.0
    %2095 = vmatprep.subr.mxu0 0.0
    %2096 = vmatpush1.msra.mxu0 0.0
    %2097 = vmatprep.subr.mxu0 0.0
    %2098 = vmatpush1.msra.mxu0 0.0
    %2099 = vmatprep.subr.mxu0 0.0
    %2100 = vmatpush1.msra.mxu0 0.0
    %2101 = vmatprep.subr.mxu0 0.0
    %2102 = vmatpush1.msra.mxu0 0.0
    %2103 = vmatprep.subr.mxu0 0.0
    %2104 = vmatpush1.msra.mxu0 0.0
    %2105 = vmatprep.subr.mxu0 0.0
    %2106 = vmatpush1.msra.mxu0 0.0
    %2107 = vmatprep.subr.mxu0 0.0
    %2108 = vmatpush1.msra.mxu0 0.0
    %2109 = vmatprep.subr.mxu0 0.0
    %2110 = vmatpush1.msra.mxu0 0.0
    %2111 = vmatprep.subr.mxu0 0.0
    %2112 = vmatpush1.msra.mxu0 0.0
    %2113 = vmatprep.subr.mxu0 0.0
    %2114 = vmatpush1.msra.mxu0 0.0
    %2115 = vmatprep.subr.mxu0 0.0
    %2116 = vmatpush1.msra.mxu0 0.0
    %2117 = vmatprep.subr.mxu0 0.0
    %2118 = vmatpush1.msra.mxu0 0.0
    %2119 = vmatprep.mubr.f32.mxu0 0.0
    %2120 = vmatmul.mubr.f32.gmra.mrb[0].mxu0 %v2053
    %v2121 = vpop.f32.mrb[0].mxu0
    %v2122 = vadd.f32 0.0, %v2121
    %v2123 = vpop.f32.mrb[0].mxu0
    %2124 = vdwg.mxu0
    %v2126 = vsel %vm289, %v2122, 0
    %2128 = vmatprep.subr.mxu0 0.0
    %2129 = vmatpush1.msra.mxu0 %v281
    %2130 = vmatprep.subr.mxu0 0.0
    %2131 = vmatpush1.msra.mxu0 0.0
    %2132 = vmatprep.subr.mxu0 0.0
    %2133 = vmatpush1.msra.mxu0 0.0
    %2134 = vmatprep.subr.mxu0 0.0
    %2135 = vmatpush1.msra.mxu0 0.0
    %2136 = vmatprep.subr.mxu0 0.0
    %2137 = vmatpush1.msra.mxu0 0.0
    %2138 = vmatprep.subr.mxu0 0.0
    %2139 = vmatpush1.msra.mxu0 0.0
    %2140 = vmatprep.subr.mxu0 0.0
    %2141 = vmatpush1.msra.mxu0 0.0
    %2142 = vmatprep.subr.mxu0 0.0
    %2143 = vmatpush1.msra.mxu0 0.0
    %2144 = vmatprep.subr.mxu0 0.0
    %2145 = vmatpush1.msra.mxu0 0.0
    %2146 = vmatprep.subr.mxu0 0.0
    %2147 = vmatpush1.msra.mxu0 0.0
    %2148 = vmatprep.subr.mxu0 0.0
    %2149 = vmatpush1.msra.mxu0 0.0
    %2150 = vmatprep.subr.mxu0 0.0
    %2151 = vmatpush1.msra.mxu0 0.0
    %2152 = vmatprep.subr.mxu0 0.0
    %2153 = vmatpush1.msra.mxu0 0.0
    %2154 = vmatprep.subr.mxu0 0.0
    %2155 = vmatpush1.msra.mxu0 0.0
    %2156 = vmatprep.subr.mxu0 0.0
    %2157 = vmatpush1.msra.mxu0 0.0
    %2158 = vmatprep.subr.mxu0 0.0
    %2159 = vmatpush1.msra.mxu0 0.0
    %2160 = vmatprep.subr.mxu0 0.0
    %2161 = vmatpush1.msra.mxu0 0.0
    %2162 = vmatprep.subr.mxu0 0.0
    %2163 = vmatpush1.msra.mxu0 0.0
    %2164 = vmatprep.subr.mxu0 0.0
    %2165 = vmatpush1.msra.mxu0 0.0
    %2166 = vmatprep.subr.mxu0 0.0
    %2167 = vmatpush1.msra.mxu0 0.0
    %2168 = vmatprep.subr.mxu0 0.0
    %2169 = vmatpush1.msra.mxu0 0.0
    %2170 = vmatprep.subr.mxu0 0.0
    %2171 = vmatpush1.msra.mxu0 0.0
    %2172 = vmatprep.subr.mxu0 0.0
    %2173 = vmatpush1.msra.mxu0 0.0
    %2174 = vmatprep.subr.mxu0 0.0
    %2175 = vmatpush1.msra.mxu0 0.0
    %2176 = vmatprep.subr.mxu0 0.0
    %2177 = vmatpush1.msra.mxu0 0.0
    %2178 = vmatprep.subr.mxu0 0.0
    %2179 = vmatpush1.msra.mxu0 0.0
    %2180 = vmatprep.subr.mxu0 0.0
    %2181 = vmatpush1.msra.mxu0 0.0
    %2182 = vmatprep.subr.mxu0 0.0
    %2183 = vmatpush1.msra.mxu0 0.0
    %2184 = vmatprep.subr.mxu0 0.0
    %2185 = vmatpush1.msra.mxu0 0.0
    %2186 = vmatprep.subr.mxu0 0.0
    %2187 = vmatpush1.msra.mxu0 0.0
    %2188 = vmatprep.subr.mxu0 0.0
    %2189 = vmatpush1.msra.mxu0 0.0
    %2190 = vmatprep.subr.mxu0 0.0
    %2191 = vmatpush1.msra.mxu0 0.0
    %2192 = vmatprep.mubr.f32.mxu0 0.0
    %2193 = vmatmul.mubr.f32.gmra.mrb[0].mxu0 %v2126
    %v2194 = vpop.f32.mrb[0].mxu0
    %v2195 = vadd.f32 0.0, %v2194
    %v2196 = vpop.f32.mrb[0].mxu0
    %2197 = vdwg.mxu0
    %v2198 = vadd.f32 %v1959, %v2195
    %v2199 = vld [vmem:[%s15] sm:$0x1]
    %v2201 = vlaneseq
    %v2202 = vshrl.u32 %v2201, 7
    %v2203 = vsub.s32 0, %v2202
    %v2204 = vrot.slane %v2199, %v2203
    %v2206 = vadd.f32 %v1240, %v2204
    %v2207 = vadd.f32 %v2198, %v2204
    %v2208 = vadd.f32 %v2206, %v181
    %v2209 = vadd.f32 %v2207, %v182
    %v2210 = vld [vmem:[%s17] sm:$0x1]
    %v2211 = vld [vmem:[%s19] sm:$0x1]
    %v2212 = vsel %vm139, %v2208, 0.0
    %2213 = vadd.xlane.f32.xlu0 %v2212
    %v2214 = vpop.xlane.xlu0 %2213
    %v2215 = vsel %vm139, %v2209, 0.0
    %2216 = vadd.xlane.f32.xlu0 %v2215
    %v2217 = vpop.xlane.xlu0 %2216
    %v2218 = vmul.f32 %v2214, %v146
    %v2219 = vmul.f32 %v2217, %v146
    %v2220 = vsub.f32 %v2208, %v2218
    %v2221 = vsub.f32 %v2209, %v2219
    %v2222 = vmul.f32 %v2220, %v2220
    %v2223 = vmul.f32 %v2221, %v2221
    %v2224 = vsel %vm139, %v2222, 0.0
    %2225 = vadd.xlane.f32.xlu0 %v2224
    %v2226 = vpop.xlane.xlu0 %2225
    %v2227 = vsel %vm139, %v2223, 0.0
    %2228 = vadd.xlane.f32.xlu0 %v2227
    %v2229 = vpop.xlane.xlu0 %2228
    %v2230 = vmul.f32 %v2226, %v146
    %v2231 = vmul.f32 %v2229, %v146
    %v2232 = vadd.f32 %v2230, 1e-12
    %v2233 = vadd.f32 %v2231, 1e-12
    %v2234 = vrsqrt.pop %v2232
    %v2235 = vrsqrt.pop %v2233
    %v2236 = vmul.f32 %v2220, %v2234
    %v2237 = vmul.f32 %v2221, %v2235
    %v2239 = vlaneseq
    %v2240 = vshrl.u32 %v2239, 7
    %v2241 = vsub.s32 0, %v2240
    %v2242 = vrot.slane %v2210, %v2241
    %v2244 = vmul.f32 %v2236, %v2242
    %v2245 = vmul.f32 %v2237, %v2242
    %v2247 = vlaneseq
    %v2248 = vshrl.u32 %v2247, 7
    %v2249 = vsub.s32 0, %v2248
    %v2250 = vrot.slane %v2211, %v2249
    %v2252 = vadd.f32 %v2244, %v2250
    %v2253 = vadd.f32 %v2245, %v2250
    %v2254 = vld [vmem:[%s21] sm:$0xff]
    %v2255 = vld [vmem:[%s21 + $0x8] sm:$0xff]
    %v2256 = vld [vmem:[%s21 + $0x10] sm:$0xff]
    %v2257 = vld [vmem:[%s21 + $0x18] sm:$0xff]
    %v2258 = vld [vmem:[%s23] sm:$0x1]
    %v2260 = vlaneseq
    %v2261 = vshrl.u32 %v2260, 7
    %v2262 = vsub.s32 0, %v2261
    %v2263 = vrot.slane %v2258, %v2262
    %v2266 = vsel %vm139, %v2252, 0
    %v2269 = vsel %vm139, %v2253, 0
    %2271 = vmatprep.subr.mxu0 0.0
    %2272 = vmatpush1.msra.mxu0 %v2254
    %2273 = vmatprep.subr.mxu0 0.0
    %2274 = vmatpush1.msra.mxu0 %v2255
    %2275 = vmatprep.subr.mxu0 0.0
    %2276 = vmatpush1.msra.mxu0 %v2256
    %2277 = vmatprep.subr.mxu0 0.0
    %2278 = vmatpush1.msra.mxu0 %v2257
    %2279 = vmatprep.subr.mxu0 0.0
    %2280 = vmatpush1.msra.mxu0 0.0
    %2281 = vmatprep.subr.mxu0 0.0
    %2282 = vmatpush1.msra.mxu0 0.0
    %2283 = vmatprep.subr.mxu0 0.0
    %2284 = vmatpush1.msra.mxu0 0.0
    %2285 = vmatprep.subr.mxu0 0.0
    %2286 = vmatpush1.msra.mxu0 0.0
    %2287 = vmatprep.subr.mxu0 0.0
    %2288 = vmatpush1.msra.mxu0 0.0
    %2289 = vmatprep.subr.mxu0 0.0
    %2290 = vmatpush1.msra.mxu0 0.0
    %2291 = vmatprep.subr.mxu0 0.0
    %2292 = vmatpush1.msra.mxu0 0.0
    %2293 = vmatprep.subr.mxu0 0.0
    %2294 = vmatpush1.msra.mxu0 0.0
    %2295 = vmatprep.subr.mxu0 0.0
    %2296 = vmatpush1.msra.mxu0 0.0
    %2297 = vmatprep.subr.mxu0 0.0
    %2298 = vmatpush1.msra.mxu0 0.0
    %2299 = vmatprep.subr.mxu0 0.0
    %2300 = vmatpush1.msra.mxu0 0.0
    %2301 = vmatprep.subr.mxu0 0.0
    %2302 = vmatpush1.msra.mxu0 0.0
    %2303 = vmatprep.subr.mxu0 0.0
    %2304 = vmatpush1.msra.mxu0 0.0
    %2305 = vmatprep.subr.mxu0 0.0
    %2306 = vmatpush1.msra.mxu0 0.0
    %2307 = vmatprep.subr.mxu0 0.0
    %2308 = vmatpush1.msra.mxu0 0.0
    %2309 = vmatprep.subr.mxu0 0.0
    %2310 = vmatpush1.msra.mxu0 0.0
    %2311 = vmatprep.subr.mxu0 0.0
    %2312 = vmatpush1.msra.mxu0 0.0
    %2313 = vmatprep.subr.mxu0 0.0
    %2314 = vmatpush1.msra.mxu0 0.0
    %2315 = vmatprep.subr.mxu0 0.0
    %2316 = vmatpush1.msra.mxu0 0.0
    %2317 = vmatprep.subr.mxu0 0.0
    %2318 = vmatpush1.msra.mxu0 0.0
    %2319 = vmatprep.subr.mxu0 0.0
    %2320 = vmatpush1.msra.mxu0 0.0
    %2321 = vmatprep.subr.mxu0 0.0
    %2322 = vmatpush1.msra.mxu0 0.0
    %2323 = vmatprep.subr.mxu0 0.0
    %2324 = vmatpush1.msra.mxu0 0.0
    %2325 = vmatprep.subr.mxu0 0.0
    %2326 = vmatpush1.msra.mxu0 0.0
    %2327 = vmatprep.subr.mxu0 0.0
    %2328 = vmatpush1.msra.mxu0 0.0
    %2329 = vmatprep.subr.mxu0 0.0
    %2330 = vmatpush1.msra.mxu0 0.0
    %2331 = vmatprep.subr.mxu0 0.0
    %2332 = vmatpush1.msra.mxu0 0.0
    %2333 = vmatprep.subr.mxu0 0.0
    %2334 = vmatpush1.msra.mxu0 0.0
    %2335 = vmatprep.mubr.f32.mxu0 0.0
    %2336 = vmatmul.mubr.f32.gmra.mrb[0].mxu0 %v2266
    %v2337 = vpop.f32.mrb[0].mxu0
    %v2338 = vadd.f32 %v2263, %v2337
    %v2339 = vpop.f32.mrb[0].mxu0
    %2340 = vmatprep.mubr.f32.mxu0 0.0
    %2341 = vmatmul.mubr.f32.gmra.mrb[0].mxu0 %v2269
    %v2342 = vpop.f32.mrb[0].mxu0
    %v2343 = vadd.f32 %v2263, %v2342
    %v2344 = vpop.f32.mrb[0].mxu0
    %2345 = vdwg.mxu0
    %v2346 = vmul.f32 %v2338, 0.5
    %v2347 = vmul.f32 %v2343, 0.5
    %v2348 = vmul.f32 %v2338, 0.044715
    %v2349 = vmul.f32 %v2343, 0.044715
    %v2350 = vmul.f32 %v2348, %v2338
    %v2351 = vmul.f32 %v2349, %v2343
    %v2352 = vmul.f32 %v2350, %v2338
    %v2353 = vmul.f32 %v2351, %v2343
    %v2354 = vadd.f32 %v2338, %v2352
    %v2355 = vadd.f32 %v2343, %v2353
    %v2356 = vmul.f32 %v2354, 0.7978846
    %v2357 = vmul.f32 %v2355, 0.7978846
    %v2358 = vtanh.pop %v2356
    %v2359 = vtanh.pop %v2357
    %v2360 = vadd.f32 %v2358, 1.0
    %v2361 = vadd.f32 %v2359, 1.0
    %v2362 = vmul.f32 %v2346, %v2360
    %v2363 = vmul.f32 %v2347, %v2361
    %v2364 = vld [vmem:[%s25] sm:$0xff]
    %v2365 = vld [vmem:[%s25 + $0x8] sm:$0xff]
    %v2366 = vld [vmem:[%s25 + $0x10] sm:$0xff]
    %v2367 = vld [vmem:[%s25 + $0x18] sm:$0xff]
    %v2368 = vld [vmem:[%s25 + $0x20] sm:$0xff]
    %v2369 = vld [vmem:[%s25 + $0x28] sm:$0xff]
    %v2370 = vld [vmem:[%s25 + $0x30] sm:$0xff]
    %v2371 = vld [vmem:[%s25 + $0x38] sm:$0xff]
    %v2372 = vld [vmem:[%s27] sm:$0x1]
    %v2374 = vlaneseq
    %v2375 = vshrl.u32 %v2374, 7
    %v2376 = vsub.s32 0, %v2375
    %v2377 = vrot.slane %v2372, %v2376
    %vm2379 = vcmask 523264
    %v2381 = vsel %vm2379, %v2362, 0
    %v2384 = vsel %vm2379, %v2363, 0
    %2386 = vmatprep.subr.mxu0 0.0
    %2387 = vmatpush1.msra.mxu0 %v2364
    %2388 = vmatprep.subr.mxu0 0.0
    %2389 = vmatpush1.msra.mxu0 %v2365
    %2390 = vmatprep.subr.mxu0 0.0
    %2391 = vmatpush1.msra.mxu0 %v2366
    %2392 = vmatprep.subr.mxu0 0.0
    %2393 = vmatpush1.msra.mxu0 %v2367
    %2394 = vmatprep.subr.mxu0 0.0
    %2395 = vmatpush1.msra.mxu0 %v2368
    %2396 = vmatprep.subr.mxu0 0.0
    %2397 = vmatpush1.msra.mxu0 %v2369
    %2398 = vmatprep.subr.mxu0 0.0
    %2399 = vmatpush1.msra.mxu0 %v2370
    %2400 = vmatprep.subr.mxu0 0.0
    %2401 = vmatpush1.msra.mxu0 %v2371
    %2402 = vmatprep.subr.mxu0 0.0
    %2403 = vmatpush1.msra.mxu0 0.0
    %2404 = vmatprep.subr.mxu0 0.0
    %2405 = vmatpush1.msra.mxu0 0.0
    %2406 = vmatprep.subr.mxu0 0.0
    %2407 = vmatpush1.msra.mxu0 0.0
    %2408 = vmatprep.subr.mxu0 0.0
    %2409 = vmatpush1.msra.mxu0 0.0
    %2410 = vmatprep.subr.mxu0 0.0
    %2411 = vmatpush1.msra.mxu0 0.0
    %2412 = vmatprep.subr.mxu0 0.0
    %2413 = vmatpush1.msra.mxu0 0.0
    %2414 = vmatprep.subr.mxu0 0.0
    %2415 = vmatpush1.msra.mxu0 0.0
    %2416 = vmatprep.subr.mxu0 0.0
    %2417 = vmatpush1.msra.mxu0 0.0
    %2418 = vmatprep.subr.mxu0 0.0
    %2419 = vmatpush1.msra.mxu0 0.0
    %2420 = vmatprep.subr.mxu0 0.0
    %2421 = vmatpush1.msra.mxu0 0.0
    %2422 = vmatprep.subr.mxu0 0.0
    %2423 = vmatpush1.msra.mxu0 0.0
    %2424 = vmatprep.subr.mxu0 0.0
    %2425 = vmatpush1.msra.mxu0 0.0
    %2426 = vmatprep.subr.mxu0 0.0
    %2427 = vmatpush1.msra.mxu0 0.0
    %2428 = vmatprep.subr.mxu0 0.0
    %2429 = vmatpush1.msra.mxu0 0.0
    %2430 = vmatprep.subr.mxu0 0.0
    %2431 = vmatpush1.msra.mxu0 0.0
    %2432 = vmatprep.subr.mxu0 0.0
    %2433 = vmatpush1.msra.mxu0 0.0
    %2434 = vmatprep.subr.mxu0 0.0
    %2435 = vmatpush1.msra.mxu0 0.0
    %2436 = vmatprep.subr.mxu0 0.0
    %2437 = vmatpush1.msra.mxu0 0.0
    %2438 = vmatprep.subr.mxu0 0.0
    %2439 = vmatpush1.msra.mxu0 0.0
    %2440 = vmatprep.subr.mxu0 0.0
    %2441 = vmatpush1.msra.mxu0 0.0
    %2442 = vmatprep.subr.mxu0 0.0
    %2443 = vmatpush1.msra.mxu0 0.0
    %2444 = vmatprep.subr.mxu0 0.0
    %2445 = vmatpush1.msra.mxu0 0.0
    %2446 = vmatprep.subr.mxu0 0.0
    %2447 = vmatpush1.msra.mxu0 0.0
    %2448 = vmatprep.subr.mxu0 0.0
    %2449 = vmatpush1.msra.mxu0 0.0
    %2450 = vmatprep.mubr.f32.mxu0 0.0
    %2451 = vmatmul.mubr.f32.gmra.mrb[0].mxu0 %v2381
    %v2452 = vpop.f32.mrb[0].mxu0
    %v2453 = vadd.f32 %v2377, %v2452
    %v2454 = vpop.f32.mrb[0].mxu0
    %2455 = vmatprep.mubr.f32.mxu0 0.0
    %2456 = vmatmul.mubr.f32.gmra.mrb[0].mxu0 %v2384
    %v2457 = vpop.f32.mrb[0].mxu0
    %v2458 = vadd.f32 %v2377, %v2457
    %v2459 = vpop.f32.mrb[0].mxu0
    %2460 = vdwg.mxu0
    %v2461 = vadd.f32 %v2453, %v2252
    %v2462 = vadd.f32 %v2458, %v2253
    %v2463 = vld [vmem:[%s29] sm:$0x1]
    %v2464 = vld [vmem:[%s31] sm:$0x1]
    %v2465 = vsel %vm139, %v2461, 0.0
    %2466 = vadd.xlane.f32.xlu0 %v2465
    %v2467 = vpop.xlane.xlu0 %2466
    %v2468 = vsel %vm139, %v2462, 0.0
    %2469 = vadd.xlane.f32.xlu0 %v2468
    %v2470 = vpop.xlane.xlu0 %2469
    %v2471 = vmul.f32 %v2467, %v146
    %v2472 = vmul.f32 %v2470, %v146
    %v2473 = vsub.f32 %v2461, %v2471
    %v2474 = vsub.f32 %v2462, %v2472
    %v2475 = vmul.f32 %v2473, %v2473
    %v2476 = vmul.f32 %v2474, %v2474
    %v2477 = vsel %vm139, %v2475, 0.0
    %2478 = vadd.xlane.f32.xlu0 %v2477
    %v2479 = vpop.xlane.xlu0 %2478
    %v2480 = vsel %vm139, %v2476, 0.0
    %2481 = vadd.xlane.f32.xlu0 %v2480
    %v2482 = vpop.xlane.xlu0 %2481
    %v2483 = vmul.f32 %v2479, %v146
    %v2484 = vmul.f32 %v2482, %v146
    %v2485 = vadd.f32 %v2483, 1e-12
    %v2486 = vadd.f32 %v2484, 1e-12
    %v2487 = vrsqrt.pop %v2485
    %v2488 = vrsqrt.pop %v2486
    %v2489 = vmul.f32 %v2473, %v2487
    %v2490 = vmul.f32 %v2474, %v2488
    %v2492 = vlaneseq
    %v2493 = vshrl.u32 %v2492, 7
    %v2494 = vsub.s32 0, %v2493
    %v2495 = vrot.slane %v2463, %v2494
    %v2497 = vmul.f32 %v2489, %v2495
    %v2498 = vmul.f32 %v2490, %v2495
    %v2500 = vlaneseq
    %v2501 = vshrl.u32 %v2500, 7
    %v2502 = vsub.s32 0, %v2501
    %v2503 = vrot.slane %v2464, %v2502
    %v2505 = vadd.f32 %v2497, %v2503
    %v2506 = vadd.f32 %v2498, %v2503
    %v2507 = vld [vmem:[%s33] sm:$0xff]
    %v2508 = vld [vmem:[%s33 + $0x8] sm:$0xff]
    %v2509 = vld [vmem:[%s33 + $0x10] sm:$0xff]
    %v2510 = vld [vmem:[%s33 + $0x18] sm:$0xff]
    %v2511 = vld [vmem:[%s35] sm:$0x1]
    %v2513 = vlaneseq
    %v2514 = vshrl.u32 %v2513, 7
    %v2515 = vsub.s32 0, %v2514
    %v2516 = vrot.slane %v2511, %v2515
    %v2519 = vsel %vm139, %v2505, 0
    %v2522 = vsel %vm139, %v2506, 0
    %2524 = vmatprep.subr.mxu0 0.0
    %2525 = vmatpush1.msra.mxu0 %v2507
    %2526 = vmatprep.subr.mxu0 0.0
    %2527 = vmatpush1.msra.mxu0 %v2508
    %2528 = vmatprep.subr.mxu0 0.0
    %2529 = vmatpush1.msra.mxu0 %v2509
    %2530 = vmatprep.subr.mxu0 0.0
    %2531 = vmatpush1.msra.mxu0 %v2510
    %2532 = vmatprep.subr.mxu0 0.0
    %2533 = vmatpush1.msra.mxu0 0.0
    %2534 = vmatprep.subr.mxu0 0.0
    %2535 = vmatpush1.msra.mxu0 0.0
    %2536 = vmatprep.subr.mxu0 0.0
    %2537 = vmatpush1.msra.mxu0 0.0
    %2538 = vmatprep.subr.mxu0 0.0
    %2539 = vmatpush1.msra.mxu0 0.0
    %2540 = vmatprep.subr.mxu0 0.0
    %2541 = vmatpush1.msra.mxu0 0.0
    %2542 = vmatprep.subr.mxu0 0.0
    %2543 = vmatpush1.msra.mxu0 0.0
    %2544 = vmatprep.subr.mxu0 0.0
    %2545 = vmatpush1.msra.mxu0 0.0
    %2546 = vmatprep.subr.mxu0 0.0
    %2547 = vmatpush1.msra.mxu0 0.0
    %2548 = vmatprep.subr.mxu0 0.0
    %2549 = vmatpush1.msra.mxu0 0.0
    %2550 = vmatprep.subr.mxu0 0.0
    %2551 = vmatpush1.msra.mxu0 0.0
    %2552 = vmatprep.subr.mxu0 0.0
    %2553 = vmatpush1.msra.mxu0 0.0
    %2554 = vmatprep.subr.mxu0 0.0
    %2555 = vmatpush1.msra.mxu0 0.0
    %2556 = vmatprep.subr.mxu0 0.0
    %2557 = vmatpush1.msra.mxu0 0.0
    %2558 = vmatprep.subr.mxu0 0.0
    %2559 = vmatpush1.msra.mxu0 0.0
    %2560 = vmatprep.subr.mxu0 0.0
    %2561 = vmatpush1.msra.mxu0 0.0
    %2562 = vmatprep.subr.mxu0 0.0
    %2563 = vmatpush1.msra.mxu0 0.0
    %2564 = vmatprep.subr.mxu0 0.0
    %2565 = vmatpush1.msra.mxu0 0.0
    %2566 = vmatprep.subr.mxu0 0.0
    %2567 = vmatpush1.msra.mxu0 0.0
    %2568 = vmatprep.subr.mxu0 0.0
    %2569 = vmatpush1.msra.mxu0 0.0
    %2570 = vmatprep.subr.mxu0 0.0
    %2571 = vmatpush1.msra.mxu0 0.0
    %2572 = vmatprep.subr.mxu0 0.0
    %2573 = vmatpush1.msra.mxu0 0.0
    %2574 = vmatprep.subr.mxu0 0.0
    %2575 = vmatpush1.msra.mxu0 0.0
    %2576 = vmatprep.subr.mxu0 0.0
    %2577 = vmatpush1.msra.mxu0 0.0
    %2578 = vmatprep.subr.mxu0 0.0
    %2579 = vmatpush1.msra.mxu0 0.0
    %2580 = vmatprep.subr.mxu0 0.0
    %2581 = vmatpush1.msra.mxu0 0.0
    %2582 = vmatprep.subr.mxu0 0.0
    %2583 = vmatpush1.msra.mxu0 0.0
    %2584 = vmatprep.subr.mxu0 0.0
    %2585 = vmatpush1.msra.mxu0 0.0
    %2586 = vmatprep.subr.mxu0 0.0
    %2587 = vmatpush1.msra.mxu0 0.0
    %2588 = vmatprep.mubr.f32.mxu0 0.0
    %2589 = vmatmul.mubr.f32.gmra.mrb[0].mxu0 %v2519
    %v2590 = vpop.f32.mrb[0].mxu0
    %v2591 = vadd.f32 %v2516, %v2590
    %v2592 = vpop.f32.mrb[0].mxu0
    %2593 = vmatprep.mubr.f32.mxu0 0.0
    %2594 = vmatmul.mubr.f32.gmra.mrb[0].mxu0 %v2522
    %v2595 = vpop.f32.mrb[0].mxu0
    %v2596 = vadd.f32 %v2516, %v2595
    %v2597 = vpop.f32.mrb[0].mxu0
    %2598 = vdwg.mxu0
    %v2599 = vmul.f32 %v2591, 0.35355338
    %v2600 = vmul.f32 %v2596, 0.35355338
    %v2601 = vld [vmem:[%s37] sm:$0xff]
    %v2602 = vld [vmem:[%s37 + $0x8] sm:$0xff]
    %v2603 = vld [vmem:[%s37 + $0x10] sm:$0xff]
    %v2604 = vld [vmem:[%s37 + $0x18] sm:$0xff]
    %2606 = vrot.lane.b32.xlu0 %v2591, 96
    %v2607 = vpop.permute.xlu0 %2606
    %v2609 = vsel %vm289, %v2599, 0
    %v2611 = vsel %vm289, %v2607, 0
    %2613 = vmatprep.subr.mxu0 0.0
    %2614 = vmatpush1.xpose.msra.mxu0 %v2611
    %2615 = vmatprep.subr.mxu0 0.0
    %2616 = vmatpush1.xpose.msra.mxu0 0.0
    %2617 = vmatprep.subr.mxu0 0.0
    %2618 = vmatpush1.xpose.msra.mxu0 0.0
    %2619 = vmatprep.subr.mxu0 0.0
    %2620 = vmatpush1.xpose.msra.mxu0 0.0
    %2621 = vmatprep.subr.mxu0 0.0
    %2622 = vmatpush1.xpose.msra.mxu0 0.0
    %2623 = vmatprep.subr.mxu0 0.0
    %2624 = vmatpush1.xpose.msra.mxu0 0.0
    %2625 = vmatprep.subr.mxu0 0.0
    %2626 = vmatpush1.xpose.msra.mxu0 0.0
    %2627 = vmatprep.subr.mxu0 0.0
    %2628 = vmatpush1.xpose.msra.mxu0 0.0
    %2629 = vmatprep.subr.mxu0 0.0
    %2630 = vmatpush1.xpose.msra.mxu0 0.0
    %2631 = vmatprep.subr.mxu0 0.0
    %2632 = vmatpush1.xpose.msra.mxu0 0.0
    %2633 = vmatprep.subr.mxu0 0.0
    %2634 = vmatpush1.xpose.msra.mxu0 0.0
    %2635 = vmatprep.subr.mxu0 0.0
    %2636 = vmatpush1.xpose.msra.mxu0 0.0
    %2637 = vmatprep.subr.mxu0 0.0
    %2638 = vmatpush1.xpose.msra.mxu0 0.0
    %2639 = vmatprep.subr.mxu0 0.0
    %2640 = vmatpush1.xpose.msra.mxu0 0.0
    %2641 = vmatprep.subr.mxu0 0.0
    %2642 = vmatpush1.xpose.msra.mxu0 0.0
    %2643 = vmatprep.subr.mxu0 0.0
    %2644 = vmatpush1.xpose.msra.mxu0 0.0
    %2645 = vmatprep.subr.mxu0 0.0
    %2646 = vmatpush1.xpose.msra.mxu0 0.0
    %2647 = vmatprep.subr.mxu0 0.0
    %2648 = vmatpush1.xpose.msra.mxu0 0.0
    %2649 = vmatprep.subr.mxu0 0.0
    %2650 = vmatpush1.xpose.msra.mxu0 0.0
    %2651 = vmatprep.subr.mxu0 0.0
    %2652 = vmatpush1.xpose.msra.mxu0 0.0
    %2653 = vmatprep.subr.mxu0 0.0
    %2654 = vmatpush1.xpose.msra.mxu0 0.0
    %2655 = vmatprep.subr.mxu0 0.0
    %2656 = vmatpush1.xpose.msra.mxu0 0.0
    %2657 = vmatprep.subr.mxu0 0.0
    %2658 = vmatpush1.xpose.msra.mxu0 0.0
    %2659 = vmatprep.subr.mxu0 0.0
    %2660 = vmatpush1.xpose.msra.mxu0 0.0
    %2661 = vmatprep.subr.mxu0 0.0
    %2662 = vmatpush1.xpose.msra.mxu0 0.0
    %2663 = vmatprep.subr.mxu0 0.0
    %2664 = vmatpush1.xpose.msra.mxu0 0.0
    %2665 = vmatprep.subr.mxu0 0.0
    %2666 = vmatpush1.xpose.msra.mxu0 0.0
    %2667 = vmatprep.subr.mxu0 0.0
    %2668 = vmatpush1.xpose.msra.mxu0 0.0
    %2669 = vmatprep.subr.mxu0 0.0
    %2670 = vmatpush1.xpose.msra.mxu0 0.0
    %2671 = vmatprep.subr.mxu0 0.0
    %2672 = vmatpush1.xpose.msra.mxu0 0.0
    %2673 = vmatprep.subr.mxu0 0.0
    %2674 = vmatpush1.xpose.msra.mxu0 0.0
    %2675 = vmatprep.subr.mxu0 0.0
    %2676 = vmatpush1.xpose.msra.mxu0 0.0
    %2677 = vmatprep.mubr.f32.mxu0 0.0
    %2678 = vmatmul.mubr.f32.gmra.mrb[0].mxu0 %v2609
    %v2679 = vpop.f32.mrb[0].mxu0
    %v2680 = vadd.f32 %v285, %v2679
    %v2681 = vpop.f32.mrb[0].mxu0
    %2682 = vdwg.mxu0
    %v2683 = vsel %vm289, %v2680, -inf
    %2684 = vmax.xlane.f32.xlu0 %v2683
    %v2685 = vpop.xlane.xlu0 %2684
    %v2686 = vsub.f32 %v2680, %v2685
    %v2687 = vmul.f32 %v2686, 1.442695
    %v2688 = vpow.pop %v2687
    %v2689 = vsel %vm289, %v2688, 0.0
    %2690 = vadd.xlane.f32.xlu0 %v2689
    %v2691 = vpop.xlane.xlu0 %2690
    %v2692 = vrcp.pop %v2691
    %v2693 = vmul.f32 %v2688, %v2692
    %2694 = vrot.lane.b32.xlu0 %v2591, 64
    %v2695 = vpop.permute.xlu0 %2694
    %v2698 = vsel %vm289, %v2693, 0
    %2700 = vmatprep.subr.mxu0 0.0
    %2701 = vmatpush1.msra.mxu0 %v2695
    %2702 = vmatprep.subr.mxu0 0.0
    %2703 = vmatpush1.msra.mxu0 0.0
    %2704 = vmatprep.subr.mxu0 0.0
    %2705 = vmatpush1.msra.mxu0 0.0
    %2706 = vmatprep.subr.mxu0 0.0
    %2707 = vmatpush1.msra.mxu0 0.0
    %2708 = vmatprep.subr.mxu0 0.0
    %2709 = vmatpush1.msra.mxu0 0.0
    %2710 = vmatprep.subr.mxu0 0.0
    %2711 = vmatpush1.msra.mxu0 0.0
    %2712 = vmatprep.subr.mxu0 0.0
    %2713 = vmatpush1.msra.mxu0 0.0
    %2714 = vmatprep.subr.mxu0 0.0
    %2715 = vmatpush1.msra.mxu0 0.0
    %2716 = vmatprep.subr.mxu0 0.0
    %2717 = vmatpush1.msra.mxu0 0.0
    %2718 = vmatprep.subr.mxu0 0.0
    %2719 = vmatpush1.msra.mxu0 0.0
    %2720 = vmatprep.subr.mxu0 0.0
    %2721 = vmatpush1.msra.mxu0 0.0
    %2722 = vmatprep.subr.mxu0 0.0
    %2723 = vmatpush1.msra.mxu0 0.0
    %2724 = vmatprep.subr.mxu0 0.0
    %2725 = vmatpush1.msra.mxu0 0.0
    %2726 = vmatprep.subr.mxu0 0.0
    %2727 = vmatpush1.msra.mxu0 0.0
    %2728 = vmatprep.subr.mxu0 0.0
    %2729 = vmatpush1.msra.mxu0 0.0
    %2730 = vmatprep.subr.mxu0 0.0
    %2731 = vmatpush1.msra.mxu0 0.0
    %2732 = vmatprep.subr.mxu0 0.0
    %2733 = vmatpush1.msra.mxu0 0.0
    %2734 = vmatprep.subr.mxu0 0.0
    %2735 = vmatpush1.msra.mxu0 0.0
    %2736 = vmatprep.subr.mxu0 0.0
    %2737 = vmatpush1.msra.mxu0 0.0
    %2738 = vmatprep.subr.mxu0 0.0
    %2739 = vmatpush1.msra.mxu0 0.0
    %2740 = vmatprep.subr.mxu0 0.0
    %2741 = vmatpush1.msra.mxu0 0.0
    %2742 = vmatprep.subr.mxu0 0.0
    %2743 = vmatpush1.msra.mxu0 0.0
    %2744 = vmatprep.subr.mxu0 0.0
    %2745 = vmatpush1.msra.mxu0 0.0
    %2746 = vmatprep.subr.mxu0 0.0
    %2747 = vmatpush1.msra.mxu0 0.0
    %2748 = vmatprep.subr.mxu0 0.0
    %2749 = vmatpush1.msra.mxu0 0.0
    %2750 = vmatprep.subr.mxu0 0.0
    %2751 = vmatpush1.msra.mxu0 0.0
    %2752 = vmatprep.subr.mxu0 0.0
    %2753 = vmatpush1.msra.mxu0 0.0
    %2754 = vmatprep.subr.mxu0 0.0
    %2755 = vmatpush1.msra.mxu0 0.0
    %2756 = vmatprep.subr.mxu0 0.0
    %2757 = vmatpush1.msra.mxu0 0.0
    %2758 = vmatprep.subr.mxu0 0.0
    %2759 = vmatpush1.msra.mxu0 0.0
    %2760 = vmatprep.subr.mxu0 0.0
    %2761 = vmatpush1.msra.mxu0 0.0
    %2762 = vmatprep.subr.mxu0 0.0
    %2763 = vmatpush1.msra.mxu0 0.0
    %2764 = vmatprep.mubr.f32.mxu0 0.0
    %2765 = vmatmul.mubr.f32.gmra.mrb[0].mxu0 %v2698
    %v2766 = vpop.f32.mrb[0].mxu0
    %v2767 = vadd.f32 0.0, %v2766
    %v2768 = vpop.f32.mrb[0].mxu0
    %2769 = vdwg.mxu0
    %2770 = vrot.lane.b32.xlu0 %v2599, 120
    %v2771 = vpop.permute.xlu0 %2770
    %2772 = vrot.lane.b32.xlu0 %v2591, 88
    %v2773 = vpop.permute.xlu0 %2772
    %v2774 = vsel %vm289, %v2771, 0
    %v2776 = vsel %vm289, %v2773, 0
    %2778 = vmatprep.subr.mxu0 0.0
    %2779 = vmatpush1.xpose.msra.mxu0 %v2776
    %2780 = vmatprep.subr.mxu0 0.0
    %2781 = vmatpush1.xpose.msra.mxu0 0.0
    %2782 = vmatprep.subr.mxu0 0.0
    %2783 = vmatpush1.xpose.msra.mxu0 0.0
    %2784 = vmatprep.subr.mxu0 0.0
    %2785 = vmatpush1.xpose.msra.mxu0 0.0
    %2786 = vmatprep.subr.mxu0 0.0
    %2787 = vmatpush1.xpose.msra.mxu0 0.0
    %2788 = vmatprep.subr.mxu0 0.0
    %2789 = vmatpush1.xpose.msra.mxu0 0.0
    %2790 = vmatprep.subr.mxu0 0.0
    %2791 = vmatpush1.xpose.msra.mxu0 0.0
    %2792 = vmatprep.subr.mxu0 0.0
    %2793 = vmatpush1.xpose.msra.mxu0 0.0
    %2794 = vmatprep.subr.mxu0 0.0
    %2795 = vmatpush1.xpose.msra.mxu0 0.0
    %2796 = vmatprep.subr.mxu0 0.0
    %2797 = vmatpush1.xpose.msra.mxu0 0.0
    %2798 = vmatprep.subr.mxu0 0.0
    %2799 = vmatpush1.xpose.msra.mxu0 0.0
    %2800 = vmatprep.subr.mxu0 0.0
    %2801 = vmatpush1.xpose.msra.mxu0 0.0
    %2802 = vmatprep.subr.mxu0 0.0
    %2803 = vmatpush1.xpose.msra.mxu0 0.0
    %2804 = vmatprep.subr.mxu0 0.0
    %2805 = vmatpush1.xpose.msra.mxu0 0.0
    %2806 = vmatprep.subr.mxu0 0.0
    %2807 = vmatpush1.xpose.msra.mxu0 0.0
    %2808 = vmatprep.subr.mxu0 0.0
    %2809 = vmatpush1.xpose.msra.mxu0 0.0
    %2810 = vmatprep.subr.mxu0 0.0
    %2811 = vmatpush1.xpose.msra.mxu0 0.0
    %2812 = vmatprep.subr.mxu0 0.0
    %2813 = vmatpush1.xpose.msra.mxu0 0.0
    %2814 = vmatprep.subr.mxu0 0.0
    %2815 = vmatpush1.xpose.msra.mxu0 0.0
    %2816 = vmatprep.subr.mxu0 0.0
    %2817 = vmatpush1.xpose.msra.mxu0 0.0
    %2818 = vmatprep.subr.mxu0 0.0
    %2819 = vmatpush1.xpose.msra.mxu0 0.0
    %2820 = vmatprep.subr.mxu0 0.0
    %2821 = vmatpush1.xpose.msra.mxu0 0.0
    %2822 = vmatprep.subr.mxu0 0.0
    %2823 = vmatpush1.xpose.msra.mxu0 0.0
    %2824 = vmatprep.subr.mxu0 0.0
    %2825 = vmatpush1.xpose.msra.mxu0 0.0
    %2826 = vmatprep.subr.mxu0 0.0
    %2827 = vmatpush1.xpose.msra.mxu0 0.0
    %2828 = vmatprep.subr.mxu0 0.0
    %2829 = vmatpush1.xpose.msra.mxu0 0.0
    %2830 = vmatprep.subr.mxu0 0.0
    %2831 = vmatpush1.xpose.msra.mxu0 0.0
    %2832 = vmatprep.subr.mxu0 0.0
    %2833 = vmatpush1.xpose.msra.mxu0 0.0
    %2834 = vmatprep.subr.mxu0 0.0
    %2835 = vmatpush1.xpose.msra.mxu0 0.0
    %2836 = vmatprep.subr.mxu0 0.0
    %2837 = vmatpush1.xpose.msra.mxu0 0.0
    %2838 = vmatprep.subr.mxu0 0.0
    %2839 = vmatpush1.xpose.msra.mxu0 0.0
    %2840 = vmatprep.subr.mxu0 0.0
    %2841 = vmatpush1.xpose.msra.mxu0 0.0
    %2842 = vmatprep.mubr.f32.mxu0 0.0
    %2843 = vmatmul.mubr.f32.gmra.mrb[0].mxu0 %v2774
    %v2844 = vpop.f32.mrb[0].mxu0
    %v2845 = vadd.f32 %v285, %v2844
    %v2846 = vpop.f32.mrb[0].mxu0
    %2847 = vdwg.mxu0
    %v2848 = vsel %vm289, %v2845, -inf
    %2849 = vmax.xlane.f32.xlu0 %v2848
    %v2850 = vpop.xlane.xlu0 %2849
    %v2851 = vsub.f32 %v2845, %v2850
    %v2852 = vmul.f32 %v2851, 1.442695
    %v2853 = vpow.pop %v2852
    %v2854 = vsel %vm289, %v2853, 0.0
    %2855 = vadd.xlane.f32.xlu0 %v2854
    %v2856 = vpop.xlane.xlu0 %2855
    %v2857 = vrcp.pop %v2856
    %v2858 = vmul.f32 %v2853, %v2857
    %2859 = vrot.lane.b32.xlu0 %v2591, 56
    %v2860 = vpop.permute.xlu0 %2859
    %v2863 = vsel %vm289, %v2858, 0
    %2865 = vmatprep.subr.mxu0 0.0
    %2866 = vmatpush1.msra.mxu0 %v2860
    %2867 = vmatprep.subr.mxu0 0.0
    %2868 = vmatpush1.msra.mxu0 0.0
    %2869 = vmatprep.subr.mxu0 0.0
    %2870 = vmatpush1.msra.mxu0 0.0
    %2871 = vmatprep.subr.mxu0 0.0
    %2872 = vmatpush1.msra.mxu0 0.0
    %2873 = vmatprep.subr.mxu0 0.0
    %2874 = vmatpush1.msra.mxu0 0.0
    %2875 = vmatprep.subr.mxu0 0.0
    %2876 = vmatpush1.msra.mxu0 0.0
    %2877 = vmatprep.subr.mxu0 0.0
    %2878 = vmatpush1.msra.mxu0 0.0
    %2879 = vmatprep.subr.mxu0 0.0
    %2880 = vmatpush1.msra.mxu0 0.0
    %2881 = vmatprep.subr.mxu0 0.0
    %2882 = vmatpush1.msra.mxu0 0.0
    %2883 = vmatprep.subr.mxu0 0.0
    %2884 = vmatpush1.msra.mxu0 0.0
    %2885 = vmatprep.subr.mxu0 0.0
    %2886 = vmatpush1.msra.mxu0 0.0
    %2887 = vmatprep.subr.mxu0 0.0
    %2888 = vmatpush1.msra.mxu0 0.0
    %2889 = vmatprep.subr.mxu0 0.0
    %2890 = vmatpush1.msra.mxu0 0.0
    %2891 = vmatprep.subr.mxu0 0.0
    %2892 = vmatpush1.msra.mxu0 0.0
    %2893 = vmatprep.subr.mxu0 0.0
    %2894 = vmatpush1.msra.mxu0 0.0
    %2895 = vmatprep.subr.mxu0 0.0
    %2896 = vmatpush1.msra.mxu0 0.0
    %2897 = vmatprep.subr.mxu0 0.0
    %2898 = vmatpush1.msra.mxu0 0.0
    %2899 = vmatprep.subr.mxu0 0.0
    %2900 = vmatpush1.msra.mxu0 0.0
    %2901 = vmatprep.subr.mxu0 0.0
    %2902 = vmatpush1.msra.mxu0 0.0
    %2903 = vmatprep.subr.mxu0 0.0
    %2904 = vmatpush1.msra.mxu0 0.0
    %2905 = vmatprep.subr.mxu0 0.0
    %2906 = vmatpush1.msra.mxu0 0.0
    %2907 = vmatprep.subr.mxu0 0.0
    %2908 = vmatpush1.msra.mxu0 0.0
    %2909 = vmatprep.subr.mxu0 0.0
    %2910 = vmatpush1.msra.mxu0 0.0
    %2911 = vmatprep.subr.mxu0 0.0
    %2912 = vmatpush1.msra.mxu0 0.0
    %2913 = vmatprep.subr.mxu0 0.0
    %2914 = vmatpush1.msra.mxu0 0.0
    %2915 = vmatprep.subr.mxu0 0.0
    %2916 = vmatpush1.msra.mxu0 0.0
    %2917 = vmatprep.subr.mxu0 0.0
    %2918 = vmatpush1.msra.mxu0 0.0
    %2919 = vmatprep.subr.mxu0 0.0
    %2920 = vmatpush1.msra.mxu0 0.0
    %2921 = vmatprep.subr.mxu0 0.0
    %2922 = vmatpush1.msra.mxu0 0.0
    %2923 = vmatprep.subr.mxu0 0.0
    %2924 = vmatpush1.msra.mxu0 0.0
    %2925 = vmatprep.subr.mxu0 0.0
    %2926 = vmatpush1.msra.mxu0 0.0
    %2927 = vmatprep.subr.mxu0 0.0
    %2928 = vmatpush1.msra.mxu0 0.0
    %2929 = vmatprep.mubr.f32.mxu0 0.0
    %2930 = vmatmul.mubr.f32.gmra.mrb[0].mxu0 %v2863
    %v2931 = vpop.f32.mrb[0].mxu0
    %v2932 = vadd.f32 0.0, %v2931
    %v2933 = vpop.f32.mrb[0].mxu0
    %2934 = vdwg.mxu0
    %v2936 = vsel %vm289, %v2932, 0
    %2938 = vmatprep.subr.mxu0 0.0
    %2939 = vmatpush1.msra.mxu0 %v2602
    %2940 = vmatprep.subr.mxu0 0.0
    %2941 = vmatpush1.msra.mxu0 0.0
    %2942 = vmatprep.subr.mxu0 0.0
    %2943 = vmatpush1.msra.mxu0 0.0
    %2944 = vmatprep.subr.mxu0 0.0
    %2945 = vmatpush1.msra.mxu0 0.0
    %2946 = vmatprep.subr.mxu0 0.0
    %2947 = vmatpush1.msra.mxu0 0.0
    %2948 = vmatprep.subr.mxu0 0.0
    %2949 = vmatpush1.msra.mxu0 0.0
    %2950 = vmatprep.subr.mxu0 0.0
    %2951 = vmatpush1.msra.mxu0 0.0
    %2952 = vmatprep.subr.mxu0 0.0
    %2953 = vmatpush1.msra.mxu0 0.0
    %2954 = vmatprep.subr.mxu0 0.0
    %2955 = vmatpush1.msra.mxu0 0.0
    %2956 = vmatprep.subr.mxu0 0.0
    %2957 = vmatpush1.msra.mxu0 0.0
    %2958 = vmatprep.subr.mxu0 0.0
    %2959 = vmatpush1.msra.mxu0 0.0
    %2960 = vmatprep.subr.mxu0 0.0
    %2961 = vmatpush1.msra.mxu0 0.0
    %2962 = vmatprep.subr.mxu0 0.0
    %2963 = vmatpush1.msra.mxu0 0.0
    %2964 = vmatprep.subr.mxu0 0.0
    %2965 = vmatpush1.msra.mxu0 0.0
    %2966 = vmatprep.subr.mxu0 0.0
    %2967 = vmatpush1.msra.mxu0 0.0
    %2968 = vmatprep.subr.mxu0 0.0
    %2969 = vmatpush1.msra.mxu0 0.0
    %2970 = vmatprep.subr.mxu0 0.0
    %2971 = vmatpush1.msra.mxu0 0.0
    %2972 = vmatprep.subr.mxu0 0.0
    %2973 = vmatpush1.msra.mxu0 0.0
    %2974 = vmatprep.subr.mxu0 0.0
    %2975 = vmatpush1.msra.mxu0 0.0
    %2976 = vmatprep.subr.mxu0 0.0
    %2977 = vmatpush1.msra.mxu0 0.0
    %2978 = vmatprep.subr.mxu0 0.0
    %2979 = vmatpush1.msra.mxu0 0.0
    %2980 = vmatprep.subr.mxu0 0.0
    %2981 = vmatpush1.msra.mxu0 0.0
    %2982 = vmatprep.subr.mxu0 0.0
    %2983 = vmatpush1.msra.mxu0 0.0
    %2984 = vmatprep.subr.mxu0 0.0
    %2985 = vmatpush1.msra.mxu0 0.0
    %2986 = vmatprep.subr.mxu0 0.0
    %2987 = vmatpush1.msra.mxu0 0.0
    %2988 = vmatprep.subr.mxu0 0.0
    %2989 = vmatpush1.msra.mxu0 0.0
    %2990 = vmatprep.subr.mxu0 0.0
    %2991 = vmatpush1.msra.mxu0 0.0
    %2992 = vmatprep.subr.mxu0 0.0
    %2993 = vmatpush1.msra.mxu0 0.0
    %2994 = vmatprep.subr.mxu0 0.0
    %2995 = vmatpush1.msra.mxu0 0.0
    %2996 = vmatprep.subr.mxu0 0.0
    %2997 = vmatpush1.msra.mxu0 0.0
    %2998 = vmatprep.subr.mxu0 0.0
    %2999 = vmatpush1.msra.mxu0 0.0
    %3000 = vmatprep.subr.mxu0 0.0
    %3001 = vmatpush1.msra.mxu0 0.0
    %3002 = vmatprep.mubr.f32.mxu0 0.0
    %3003 = vmatmul.mubr.f32.gmra.mrb[0].mxu0 %v2936
    %v3004 = vpop.f32.mrb[0].mxu0
    %v3005 = vadd.f32 0.0, %v3004
    %v3006 = vpop.f32.mrb[0].mxu0
    %3007 = vdwg.mxu0
    %v3009 = vsel %vm289, %v2767, 0
    %3011 = vmatprep.subr.mxu0 0.0
    %3012 = vmatpush1.msra.mxu0 %v2601
    %3013 = vmatprep.subr.mxu0 0.0
    %3014 = vmatpush1.msra.mxu0 0.0
    %3015 = vmatprep.subr.mxu0 0.0
    %3016 = vmatpush1.msra.mxu0 0.0
    %3017 = vmatprep.subr.mxu0 0.0
    %3018 = vmatpush1.msra.mxu0 0.0
    %3019 = vmatprep.subr.mxu0 0.0
    %3020 = vmatpush1.msra.mxu0 0.0
    %3021 = vmatprep.subr.mxu0 0.0
    %3022 = vmatpush1.msra.mxu0 0.0
    %3023 = vmatprep.subr.mxu0 0.0
    %3024 = vmatpush1.msra.mxu0 0.0
    %3025 = vmatprep.subr.mxu0 0.0
    %3026 = vmatpush1.msra.mxu0 0.0
    %3027 = vmatprep.subr.mxu0 0.0
    %3028 = vmatpush1.msra.mxu0 0.0
    %3029 = vmatprep.subr.mxu0 0.0
    %3030 = vmatpush1.msra.mxu0 0.0
    %3031 = vmatprep.subr.mxu0 0.0
    %3032 = vmatpush1.msra.mxu0 0.0
    %3033 = vmatprep.subr.mxu0 0.0
    %3034 = vmatpush1.msra.mxu0 0.0
    %3035 = vmatprep.subr.mxu0 0.0
    %3036 = vmatpush1.msra.mxu0 0.0
    %3037 = vmatprep.subr.mxu0 0.0
    %3038 = vmatpush1.msra.mxu0 0.0
    %3039 = vmatprep.subr.mxu0 0.0
    %3040 = vmatpush1.msra.mxu0 0.0
    %3041 = vmatprep.subr.mxu0 0.0
    %3042 = vmatpush1.msra.mxu0 0.0
    %3043 = vmatprep.subr.mxu0 0.0
    %3044 = vmatpush1.msra.mxu0 0.0
    %3045 = vmatprep.subr.mxu0 0.0
    %3046 = vmatpush1.msra.mxu0 0.0
    %3047 = vmatprep.subr.mxu0 0.0
    %3048 = vmatpush1.msra.mxu0 0.0
    %3049 = vmatprep.subr.mxu0 0.0
    %3050 = vmatpush1.msra.mxu0 0.0
    %3051 = vmatprep.subr.mxu0 0.0
    %3052 = vmatpush1.msra.mxu0 0.0
    %3053 = vmatprep.subr.mxu0 0.0
    %3054 = vmatpush1.msra.mxu0 0.0
    %3055 = vmatprep.subr.mxu0 0.0
    %3056 = vmatpush1.msra.mxu0 0.0
    %3057 = vmatprep.subr.mxu0 0.0
    %3058 = vmatpush1.msra.mxu0 0.0
    %3059 = vmatprep.subr.mxu0 0.0
    %3060 = vmatpush1.msra.mxu0 0.0
    %3061 = vmatprep.subr.mxu0 0.0
    %3062 = vmatpush1.msra.mxu0 0.0
    %3063 = vmatprep.subr.mxu0 0.0
    %3064 = vmatpush1.msra.mxu0 0.0
    %3065 = vmatprep.subr.mxu0 0.0
    %3066 = vmatpush1.msra.mxu0 0.0
    %3067 = vmatprep.subr.mxu0 0.0
    %3068 = vmatpush1.msra.mxu0 0.0
    %3069 = vmatprep.subr.mxu0 0.0
    %3070 = vmatpush1.msra.mxu0 0.0
    %3071 = vmatprep.subr.mxu0 0.0
    %3072 = vmatpush1.msra.mxu0 0.0
    %3073 = vmatprep.subr.mxu0 0.0
    %3074 = vmatpush1.msra.mxu0 0.0
    %3075 = vmatprep.mubr.f32.mxu0 0.0
    %3076 = vmatmul.mubr.f32.gmra.mrb[0].mxu0 %v3009
    %v3077 = vpop.f32.mrb[0].mxu0
    %v3078 = vadd.f32 %v3005, %v3077
    %v3079 = vpop.f32.mrb[0].mxu0
    %3080 = vdwg.mxu0
    %3081 = vrot.lane.b32.xlu0 %v2599, 112
    %v3082 = vpop.permute.xlu0 %3081
    %3083 = vrot.lane.b32.xlu0 %v2591, 80
    %v3084 = vpop.permute.xlu0 %3083
    %v3085 = vsel %vm289, %v3082, 0
    %v3087 = vsel %vm289, %v3084, 0
    %3089 = vmatprep.subr.mxu0 0.0
    %3090 = vmatpush1.xpose.msra.mxu0 %v3087
    %3091 = vmatprep.subr.mxu0 0.0
    %3092 = vmatpush1.xpose.msra.mxu0 0.0
    %3093 = vmatprep.subr.mxu0 0.0
    %3094 = vmatpush1.xpose.msra.mxu0 0.0
    %3095 = vmatprep.subr.mxu0 0.0
    %3096 = vmatpush1.xpose.msra.mxu0 0.0
    %3097 = vmatprep.subr.mxu0 0.0
    %3098 = vmatpush1.xpose.msra.mxu0 0.0
    %3099 = vmatprep.subr.mxu0 0.0
    %3100 = vmatpush1.xpose.msra.mxu0 0.0
    %3101 = vmatprep.subr.mxu0 0.0
    %3102 = vmatpush1.xpose.msra.mxu0 0.0
    %3103 = vmatprep.subr.mxu0 0.0
    %3104 = vmatpush1.xpose.msra.mxu0 0.0
    %3105 = vmatprep.subr.mxu0 0.0
    %3106 = vmatpush1.xpose.msra.mxu0 0.0
    %3107 = vmatprep.subr.mxu0 0.0
    %3108 = vmatpush1.xpose.msra.mxu0 0.0
    %3109 = vmatprep.subr.mxu0 0.0
    %3110 = vmatpush1.xpose.msra.mxu0 0.0
    %3111 = vmatprep.subr.mxu0 0.0
    %3112 = vmatpush1.xpose.msra.mxu0 0.0
    %3113 = vmatprep.subr.mxu0 0.0
    %3114 = vmatpush1.xpose.msra.mxu0 0.0
    %3115 = vmatprep.subr.mxu0 0.0
    %3116 = vmatpush1.xpose.msra.mxu0 0.0
    %3117 = vmatprep.subr.mxu0 0.0
    %3118 = vmatpush1.xpose.msra.mxu0 0.0
    %3119 = vmatprep.subr.mxu0 0.0
    %3120 = vmatpush1.xpose.msra.mxu0 0.0
    %3121 = vmatprep.subr.mxu0 0.0
    %3122 = vmatpush1.xpose.msra.mxu0 0.0
    %3123 = vmatprep.subr.mxu0 0.0
    %3124 = vmatpush1.xpose.msra.mxu0 0.0
    %3125 = vmatprep.subr.mxu0 0.0
    %3126 = vmatpush1.xpose.msra.mxu0 0.0
    %3127 = vmatprep.subr.mxu0 0.0
    %3128 = vmatpush1.xpose.msra.mxu0 0.0
    %3129 = vmatprep.subr.mxu0 0.0
    %3130 = vmatpush1.xpose.msra.mxu0 0.0
    %3131 = vmatprep.subr.mxu0 0.0
    %3132 = vmatpush1.xpose.msra.mxu0 0.0
    %3133 = vmatprep.subr.mxu0 0.0
    %3134 = vmatpush1.xpose.msra.mxu0 0.0
    %3135 = vmatprep.subr.mxu0 0.0
    %3136 = vmatpush1.xpose.msra.mxu0 0.0
    %3137 = vmatprep.subr.mxu0 0.0
    %3138 = vmatpush1.xpose.msra.mxu0 0.0
    %3139 = vmatprep.subr.mxu0 0.0
    %3140 = vmatpush1.xpose.msra.mxu0 0.0
    %3141 = vmatprep.subr.mxu0 0.0
    %3142 = vmatpush1.xpose.msra.mxu0 0.0
    %3143 = vmatprep.subr.mxu0 0.0
    %3144 = vmatpush1.xpose.msra.mxu0 0.0
    %3145 = vmatprep.subr.mxu0 0.0
    %3146 = vmatpush1.xpose.msra.mxu0 0.0
    %3147 = vmatprep.subr.mxu0 0.0
    %3148 = vmatpush1.xpose.msra.mxu0 0.0
    %3149 = vmatprep.subr.mxu0 0.0
    %3150 = vmatpush1.xpose.msra.mxu0 0.0
    %3151 = vmatprep.subr.mxu0 0.0
    %3152 = vmatpush1.xpose.msra.mxu0 0.0
    %3153 = vmatprep.mubr.f32.mxu0 0.0
    %3154 = vmatmul.mubr.f32.gmra.mrb[0].mxu0 %v3085
    %v3155 = vpop.f32.mrb[0].mxu0
    %v3156 = vadd.f32 %v285, %v3155
    %v3157 = vpop.f32.mrb[0].mxu0
    %3158 = vdwg.mxu0
    %v3159 = vsel %vm289, %v3156, -inf
    %3160 = vmax.xlane.f32.xlu0 %v3159
    %v3161 = vpop.xlane.xlu0 %3160
    %v3162 = vsub.f32 %v3156, %v3161
    %v3163 = vmul.f32 %v3162, 1.442695
    %v3164 = vpow.pop %v3163
    %v3165 = vsel %vm289, %v3164, 0.0
    %3166 = vadd.xlane.f32.xlu0 %v3165
    %v3167 = vpop.xlane.xlu0 %3166
    %v3168 = vrcp.pop %v3167
    %v3169 = vmul.f32 %v3164, %v3168
    %3170 = vrot.lane.b32.xlu0 %v2591, 48
    %v3171 = vpop.permute.xlu0 %3170
    %v3174 = vsel %vm289, %v3169, 0
    %3176 = vmatprep.subr.mxu0 0.0
    %3177 = vmatpush1.msra.mxu0 %v3171
    %3178 = vmatprep.subr.mxu0 0.0
    %3179 = vmatpush1.msra.mxu0 0.0
    %3180 = vmatprep.subr.mxu0 0.0
    %3181 = vmatpush1.msra.mxu0 0.0
    %3182 = vmatprep.subr.mxu0 0.0
    %3183 = vmatpush1.msra.mxu0 0.0
    %3184 = vmatprep.subr.mxu0 0.0
    %3185 = vmatpush1.msra.mxu0 0.0
    %3186 = vmatprep.subr.mxu0 0.0
    %3187 = vmatpush1.msra.mxu0 0.0
    %3188 = vmatprep.subr.mxu0 0.0
    %3189 = vmatpush1.msra.mxu0 0.0
    %3190 = vmatprep.subr.mxu0 0.0
    %3191 = vmatpush1.msra.mxu0 0.0
    %3192 = vmatprep.subr.mxu0 0.0
    %3193 = vmatpush1.msra.mxu0 0.0
    %3194 = vmatprep.subr.mxu0 0.0
    %3195 = vmatpush1.msra.mxu0 0.0
    %3196 = vmatprep.subr.mxu0 0.0
    %3197 = vmatpush1.msra.mxu0 0.0
    %3198 = vmatprep.subr.mxu0 0.0
    %3199 = vmatpush1.msra.mxu0 0.0
    %3200 = vmatprep.subr.mxu0 0.0
    %3201 = vmatpush1.msra.mxu0 0.0
    %3202 = vmatprep.subr.mxu0 0.0
    %3203 = vmatpush1.msra.mxu0 0.0
    %3204 = vmatprep.subr.mxu0 0.0
    %3205 = vmatpush1.msra.mxu0 0.0
    %3206 = vmatprep.subr.mxu0 0.0
    %3207 = vmatpush1.msra.mxu0 0.0
    %3208 = vmatprep.subr.mxu0 0.0
    %3209 = vmatpush1.msra.mxu0 0.0
    %3210 = vmatprep.subr.mxu0 0.0
    %3211 = vmatpush1.msra.mxu0 0.0
    %3212 = vmatprep.subr.mxu0 0.0
    %3213 = vmatpush1.msra.mxu0 0.0
    %3214 = vmatprep.subr.mxu0 0.0
    %3215 = vmatpush1.msra.mxu0 0.0
    %3216 = vmatprep.subr.mxu0 0.0
    %3217 = vmatpush1.msra.mxu0 0.0
    %3218 = vmatprep.subr.mxu0 0.0
    %3219 = vmatpush1.msra.mxu0 0.0
    %3220 = vmatprep.subr.mxu0 0.0
    %3221 = vmatpush1.msra.mxu0 0.0
    %3222 = vmatprep.subr.mxu0 0.0
    %3223 = vmatpush1.msra.mxu0 0.0
    %3224 = vmatprep.subr.mxu0 0.0
    %3225 = vmatpush1.msra.mxu0 0.0
    %3226 = vmatprep.subr.mxu0 0.0
    %3227 = vmatpush1.msra.mxu0 0.0
    %3228 = vmatprep.subr.mxu0 0.0
    %3229 = vmatpush1.msra.mxu0 0.0
    %3230 = vmatprep.subr.mxu0 0.0
    %3231 = vmatpush1.msra.mxu0 0.0
    %3232 = vmatprep.subr.mxu0 0.0
    %3233 = vmatpush1.msra.mxu0 0.0
    %3234 = vmatprep.subr.mxu0 0.0
    %3235 = vmatpush1.msra.mxu0 0.0
    %3236 = vmatprep.subr.mxu0 0.0
    %3237 = vmatpush1.msra.mxu0 0.0
    %3238 = vmatprep.subr.mxu0 0.0
    %3239 = vmatpush1.msra.mxu0 0.0
    %3240 = vmatprep.mubr.f32.mxu0 0.0
    %3241 = vmatmul.mubr.f32.gmra.mrb[0].mxu0 %v3174
    %v3242 = vpop.f32.mrb[0].mxu0
    %v3243 = vadd.f32 0.0, %v3242
    %v3244 = vpop.f32.mrb[0].mxu0
    %3245 = vdwg.mxu0
    %v3247 = vsel %vm289, %v3243, 0
    %3249 = vmatprep.subr.mxu0 0.0
    %3250 = vmatpush1.msra.mxu0 %v2603
    %3251 = vmatprep.subr.mxu0 0.0
    %3252 = vmatpush1.msra.mxu0 0.0
    %3253 = vmatprep.subr.mxu0 0.0
    %3254 = vmatpush1.msra.mxu0 0.0
    %3255 = vmatprep.subr.mxu0 0.0
    %3256 = vmatpush1.msra.mxu0 0.0
    %3257 = vmatprep.subr.mxu0 0.0
    %3258 = vmatpush1.msra.mxu0 0.0
    %3259 = vmatprep.subr.mxu0 0.0
    %3260 = vmatpush1.msra.mxu0 0.0
    %3261 = vmatprep.subr.mxu0 0.0
    %3262 = vmatpush1.msra.mxu0 0.0
    %3263 = vmatprep.subr.mxu0 0.0
    %3264 = vmatpush1.msra.mxu0 0.0
    %3265 = vmatprep.subr.mxu0 0.0
    %3266 = vmatpush1.msra.mxu0 0.0
    %3267 = vmatprep.subr.mxu0 0.0
    %3268 = vmatpush1.msra.mxu0 0.0
    %3269 = vmatprep.subr.mxu0 0.0
    %3270 = vmatpush1.msra.mxu0 0.0
    %3271 = vmatprep.subr.mxu0 0.0
    %3272 = vmatpush1.msra.mxu0 0.0
    %3273 = vmatprep.subr.mxu0 0.0
    %3274 = vmatpush1.msra.mxu0 0.0
    %3275 = vmatprep.subr.mxu0 0.0
    %3276 = vmatpush1.msra.mxu0 0.0
    %3277 = vmatprep.subr.mxu0 0.0
    %3278 = vmatpush1.msra.mxu0 0.0
    %3279 = vmatprep.subr.mxu0 0.0
    %3280 = vmatpush1.msra.mxu0 0.0
    %3281 = vmatprep.subr.mxu0 0.0
    %3282 = vmatpush1.msra.mxu0 0.0
    %3283 = vmatprep.subr.mxu0 0.0
    %3284 = vmatpush1.msra.mxu0 0.0
    %3285 = vmatprep.subr.mxu0 0.0
    %3286 = vmatpush1.msra.mxu0 0.0
    %3287 = vmatprep.subr.mxu0 0.0
    %3288 = vmatpush1.msra.mxu0 0.0
    %3289 = vmatprep.subr.mxu0 0.0
    %3290 = vmatpush1.msra.mxu0 0.0
    %3291 = vmatprep.subr.mxu0 0.0
    %3292 = vmatpush1.msra.mxu0 0.0
    %3293 = vmatprep.subr.mxu0 0.0
    %3294 = vmatpush1.msra.mxu0 0.0
    %3295 = vmatprep.subr.mxu0 0.0
    %3296 = vmatpush1.msra.mxu0 0.0
    %3297 = vmatprep.subr.mxu0 0.0
    %3298 = vmatpush1.msra.mxu0 0.0
    %3299 = vmatprep.subr.mxu0 0.0
    %3300 = vmatpush1.msra.mxu0 0.0
    %3301 = vmatprep.subr.mxu0 0.0
    %3302 = vmatpush1.msra.mxu0 0.0
    %3303 = vmatprep.subr.mxu0 0.0
    %3304 = vmatpush1.msra.mxu0 0.0
    %3305 = vmatprep.subr.mxu0 0.0
    %3306 = vmatpush1.msra.mxu0 0.0
    %3307 = vmatprep.subr.mxu0 0.0
    %3308 = vmatpush1.msra.mxu0 0.0
    %3309 = vmatprep.subr.mxu0 0.0
    %3310 = vmatpush1.msra.mxu0 0.0
    %3311 = vmatprep.subr.mxu0 0.0
    %3312 = vmatpush1.msra.mxu0 0.0
    %3313 = vmatprep.mubr.f32.mxu0 0.0
    %3314 = vmatmul.mubr.f32.gmra.mrb[0].mxu0 %v3247
    %v3315 = vpop.f32.mrb[0].mxu0
    %v3316 = vadd.f32 0.0, %v3315
    %v3317 = vpop.f32.mrb[0].mxu0
    %3318 = vdwg.mxu0
    %v3319 = vadd.f32 %v3078, %v3316
    %3320 = vrot.lane.b32.xlu0 %v2599, 104
    %v3321 = vpop.permute.xlu0 %3320
    %3322 = vrot.lane.b32.xlu0 %v2591, 72
    %v3323 = vpop.permute.xlu0 %3322
    %v3324 = vsel %vm289, %v3321, 0
    %v3326 = vsel %vm289, %v3323, 0
    %3328 = vmatprep.subr.mxu0 0.0
    %3329 = vmatpush1.xpose.msra.mxu0 %v3326
    %3330 = vmatprep.subr.mxu0 0.0
    %3331 = vmatpush1.xpose.msra.mxu0 0.0
    %3332 = vmatprep.subr.mxu0 0.0
    %3333 = vmatpush1.xpose.msra.mxu0 0.0
    %3334 = vmatprep.subr.mxu0 0.0
    %3335 = vmatpush1.xpose.msra.mxu0 0.0
    %3336 = vmatprep.subr.mxu0 0.0
    %3337 = vmatpush1.xpose.msra.mxu0 0.0
    %3338 = vmatprep.subr.mxu0 0.0
    %3339 = vmatpush1.xpose.msra.mxu0 0.0
    %3340 = vmatprep.subr.mxu0 0.0
    %3341 = vmatpush1.xpose.msra.mxu0 0.0
    %3342 = vmatprep.subr.mxu0 0.0
    %3343 = vmatpush1.xpose.msra.mxu0 0.0
    %3344 = vmatprep.subr.mxu0 0.0
    %3345 = vmatpush1.xpose.msra.mxu0 0.0
    %3346 = vmatprep.subr.mxu0 0.0
    %3347 = vmatpush1.xpose.msra.mxu0 0.0
    %3348 = vmatprep.subr.mxu0 0.0
    %3349 = vmatpush1.xpose.msra.mxu0 0.0
    %3350 = vmatprep.subr.mxu0 0.0
    %3351 = vmatpush1.xpose.msra.mxu0 0.0
    %3352 = vmatprep.subr.mxu0 0.0
    %3353 = vmatpush1.xpose.msra.mxu0 0.0
    %3354 = vmatprep.subr.mxu0 0.0
    %3355 = vmatpush1.xpose.msra.mxu0 0.0
    %3356 = vmatprep.subr.mxu0 0.0
    %3357 = vmatpush1.xpose.msra.mxu0 0.0
    %3358 = vmatprep.subr.mxu0 0.0
    %3359 = vmatpush1.xpose.msra.mxu0 0.0
    %3360 = vmatprep.subr.mxu0 0.0
    %3361 = vmatpush1.xpose.msra.mxu0 0.0
    %3362 = vmatprep.subr.mxu0 0.0
    %3363 = vmatpush1.xpose.msra.mxu0 0.0
    %3364 = vmatprep.subr.mxu0 0.0
    %3365 = vmatpush1.xpose.msra.mxu0 0.0
    %3366 = vmatprep.subr.mxu0 0.0
    %3367 = vmatpush1.xpose.msra.mxu0 0.0
    %3368 = vmatprep.subr.mxu0 0.0
    %3369 = vmatpush1.xpose.msra.mxu0 0.0
    %3370 = vmatprep.subr.mxu0 0.0
    %3371 = vmatpush1.xpose.msra.mxu0 0.0
    %3372 = vmatprep.subr.mxu0 0.0
    %3373 = vmatpush1.xpose.msra.mxu0 0.0
    %3374 = vmatprep.subr.mxu0 0.0
    %3375 = vmatpush1.xpose.msra.mxu0 0.0
    %3376 = vmatprep.subr.mxu0 0.0
    %3377 = vmatpush1.xpose.msra.mxu0 0.0
    %3378 = vmatprep.subr.mxu0 0.0
    %3379 = vmatpush1.xpose.msra.mxu0 0.0
    %3380 = vmatprep.subr.mxu0 0.0
    %3381 = vmatpush1.xpose.msra.mxu0 0.0
    %3382 = vmatprep.subr.mxu0 0.0
    %3383 = vmatpush1.xpose.msra.mxu0 0.0
    %3384 = vmatprep.subr.mxu0 0.0
    %3385 = vmatpush1.xpose.msra.mxu0 0.0
    %3386 = vmatprep.subr.mxu0 0.0
    %3387 = vmatpush1.xpose.msra.mxu0 0.0
    %3388 = vmatprep.subr.mxu0 0.0
    %3389 = vmatpush1.xpose.msra.mxu0 0.0
    %3390 = vmatprep.subr.mxu0 0.0
    %3391 = vmatpush1.xpose.msra.mxu0 0.0
    %3392 = vmatprep.mubr.f32.mxu0 0.0
    %3393 = vmatmul.mubr.f32.gmra.mrb[0].mxu0 %v3324
    %v3394 = vpop.f32.mrb[0].mxu0
    %v3395 = vadd.f32 %v285, %v3394
    %v3396 = vpop.f32.mrb[0].mxu0
    %3397 = vdwg.mxu0
    %v3398 = vsel %vm289, %v3395, -inf
    %3399 = vmax.xlane.f32.xlu0 %v3398
    %v3400 = vpop.xlane.xlu0 %3399
    %v3401 = vsub.f32 %v3395, %v3400
    %v3402 = vmul.f32 %v3401, 1.442695
    %v3403 = vpow.pop %v3402
    %v3404 = vsel %vm289, %v3403, 0.0
    %3405 = vadd.xlane.f32.xlu0 %v3404
    %v3406 = vpop.xlane.xlu0 %3405
    %v3407 = vrcp.pop %v3406
    %v3408 = vmul.f32 %v3403, %v3407
    %3409 = vrot.lane.b32.xlu0 %v2591, 40
    %v3410 = vpop.permute.xlu0 %3409
    %v3413 = vsel %vm289, %v3408, 0
    %3415 = vmatprep.subr.mxu0 0.0
    %3416 = vmatpush1.msra.mxu0 %v3410
    %3417 = vmatprep.subr.mxu0 0.0
    %3418 = vmatpush1.msra.mxu0 0.0
    %3419 = vmatprep.subr.mxu0 0.0
    %3420 = vmatpush1.msra.mxu0 0.0
    %3421 = vmatprep.subr.mxu0 0.0
    %3422 = vmatpush1.msra.mxu0 0.0
    %3423 = vmatprep.subr.mxu0 0.0
    %3424 = vmatpush1.msra.mxu0 0.0
    %3425 = vmatprep.subr.mxu0 0.0
    %3426 = vmatpush1.msra.mxu0 0.0
    %3427 = vmatprep.subr.mxu0 0.0
    %3428 = vmatpush1.msra.mxu0 0.0
    %3429 = vmatprep.subr.mxu0 0.0
    %3430 = vmatpush1.msra.mxu0 0.0
    %3431 = vmatprep.subr.mxu0 0.0
    %3432 = vmatpush1.msra.mxu0 0.0
    %3433 = vmatprep.subr.mxu0 0.0
    %3434 = vmatpush1.msra.mxu0 0.0
    %3435 = vmatprep.subr.mxu0 0.0
    %3436 = vmatpush1.msra.mxu0 0.0
    %3437 = vmatprep.subr.mxu0 0.0
    %3438 = vmatpush1.msra.mxu0 0.0
    %3439 = vmatprep.subr.mxu0 0.0
    %3440 = vmatpush1.msra.mxu0 0.0
    %3441 = vmatprep.subr.mxu0 0.0
    %3442 = vmatpush1.msra.mxu0 0.0
    %3443 = vmatprep.subr.mxu0 0.0
    %3444 = vmatpush1.msra.mxu0 0.0
    %3445 = vmatprep.subr.mxu0 0.0
    %3446 = vmatpush1.msra.mxu0 0.0
    %3447 = vmatprep.subr.mxu0 0.0
    %3448 = vmatpush1.msra.mxu0 0.0
    %3449 = vmatprep.subr.mxu0 0.0
    %3450 = vmatpush1.msra.mxu0 0.0
    %3451 = vmatprep.subr.mxu0 0.0
    %3452 = vmatpush1.msra.mxu0 0.0
    %3453 = vmatprep.subr.mxu0 0.0
    %3454 = vmatpush1.msra.mxu0 0.0
    %3455 = vmatprep.subr.mxu0 0.0
    %3456 = vmatpush1.msra.mxu0 0.0
    %3457 = vmatprep.subr.mxu0 0.0
    %3458 = vmatpush1.msra.mxu0 0.0
    %3459 = vmatprep.subr.mxu0 0.0
    %3460 = vmatpush1.msra.mxu0 0.0
    %3461 = vmatprep.subr.mxu0 0.0
    %3462 = vmatpush1.msra.mxu0 0.0
    %3463 = vmatprep.subr.mxu0 0.0
    %3464 = vmatpush1.msra.mxu0 0.0
    %3465 = vmatprep.subr.mxu0 0.0
    %3466 = vmatpush1.msra.mxu0 0.0
    %3467 = vmatprep.subr.mxu0 0.0
    %3468 = vmatpush1.msra.mxu0 0.0
    %3469 = vmatprep.subr.mxu0 0.0
    %3470 = vmatpush1.msra.mxu0 0.0
    %3471 = vmatprep.subr.mxu0 0.0
    %3472 = vmatpush1.msra.mxu0 0.0
    %3473 = vmatprep.subr.mxu0 0.0
    %3474 = vmatpush1.msra.mxu0 0.0
    %3475 = vmatprep.subr.mxu0 0.0
    %3476 = vmatpush1.msra.mxu0 0.0
    %3477 = vmatprep.subr.mxu0 0.0
    %3478 = vmatpush1.msra.mxu0 0.0
    %3479 = vmatprep.mubr.f32.mxu0 0.0
    %3480 = vmatmul.mubr.f32.gmra.mrb[0].mxu0 %v3413
    %v3481 = vpop.f32.mrb[0].mxu0
    %v3482 = vadd.f32 0.0, %v3481
    %v3483 = vpop.f32.mrb[0].mxu0
    %3484 = vdwg.mxu0
    %v3486 = vsel %vm289, %v3482, 0
    %3488 = vmatprep.subr.mxu0 0.0
    %3489 = vmatpush1.msra.mxu0 %v2604
    %3490 = vmatprep.subr.mxu0 0.0
    %3491 = vmatpush1.msra.mxu0 0.0
    %3492 = vmatprep.subr.mxu0 0.0
    %3493 = vmatpush1.msra.mxu0 0.0
    %3494 = vmatprep.subr.mxu0 0.0
    %3495 = vmatpush1.msra.mxu0 0.0
    %3496 = vmatprep.subr.mxu0 0.0
    %3497 = vmatpush1.msra.mxu0 0.0
    %3498 = vmatprep.subr.mxu0 0.0
    %3499 = vmatpush1.msra.mxu0 0.0
    %3500 = vmatprep.subr.mxu0 0.0
    %3501 = vmatpush1.msra.mxu0 0.0
    %3502 = vmatprep.subr.mxu0 0.0
    %3503 = vmatpush1.msra.mxu0 0.0
    %3504 = vmatprep.subr.mxu0 0.0
    %3505 = vmatpush1.msra.mxu0 0.0
    %3506 = vmatprep.subr.mxu0 0.0
    %3507 = vmatpush1.msra.mxu0 0.0
    %3508 = vmatprep.subr.mxu0 0.0
    %3509 = vmatpush1.msra.mxu0 0.0
    %3510 = vmatprep.subr.mxu0 0.0
    %3511 = vmatpush1.msra.mxu0 0.0
    %3512 = vmatprep.subr.mxu0 0.0
    %3513 = vmatpush1.msra.mxu0 0.0
    %3514 = vmatprep.subr.mxu0 0.0
    %3515 = vmatpush1.msra.mxu0 0.0
    %3516 = vmatprep.subr.mxu0 0.0
    %3517 = vmatpush1.msra.mxu0 0.0
    %3518 = vmatprep.subr.mxu0 0.0
    %3519 = vmatpush1.msra.mxu0 0.0
    %3520 = vmatprep.subr.mxu0 0.0
    %3521 = vmatpush1.msra.mxu0 0.0
    %3522 = vmatprep.subr.mxu0 0.0
    %3523 = vmatpush1.msra.mxu0 0.0
    %3524 = vmatprep.subr.mxu0 0.0
    %3525 = vmatpush1.msra.mxu0 0.0
    %3526 = vmatprep.subr.mxu0 0.0
    %3527 = vmatpush1.msra.mxu0 0.0
    %3528 = vmatprep.subr.mxu0 0.0
    %3529 = vmatpush1.msra.mxu0 0.0
    %3530 = vmatprep.subr.mxu0 0.0
    %3531 = vmatpush1.msra.mxu0 0.0
    %3532 = vmatprep.subr.mxu0 0.0
    %3533 = vmatpush1.msra.mxu0 0.0
    %3534 = vmatprep.subr.mxu0 0.0
    %3535 = vmatpush1.msra.mxu0 0.0
    %3536 = vmatprep.subr.mxu0 0.0
    %3537 = vmatpush1.msra.mxu0 0.0
    %3538 = vmatprep.subr.mxu0 0.0
    %3539 = vmatpush1.msra.mxu0 0.0
    %3540 = vmatprep.subr.mxu0 0.0
    %3541 = vmatpush1.msra.mxu0 0.0
    %3542 = vmatprep.subr.mxu0 0.0
    %3543 = vmatpush1.msra.mxu0 0.0
    %3544 = vmatprep.subr.mxu0 0.0
    %3545 = vmatpush1.msra.mxu0 0.0
    %3546 = vmatprep.subr.mxu0 0.0
    %3547 = vmatpush1.msra.mxu0 0.0
    %3548 = vmatprep.subr.mxu0 0.0
    %3549 = vmatpush1.msra.mxu0 0.0
    %3550 = vmatprep.subr.mxu0 0.0
    %3551 = vmatpush1.msra.mxu0 0.0
    %3552 = vmatprep.mubr.f32.mxu0 0.0
    %3553 = vmatmul.mubr.f32.gmra.mrb[0].mxu0 %v3486
    %v3554 = vpop.f32.mrb[0].mxu0
    %v3555 = vadd.f32 0.0, %v3554
    %v3556 = vpop.f32.mrb[0].mxu0
    %3557 = vdwg.mxu0
    %v3558 = vadd.f32 %v3319, %v3555
    %3560 = vrot.lane.b32.xlu0 %v2596, 96
    %v3561 = vpop.permute.xlu0 %3560
    %v3563 = vsel %vm289, %v2600, 0
    %v3565 = vsel %vm289, %v3561, 0
    %3567 = vmatprep.subr.mxu0 0.0
    %3568 = vmatpush1.xpose.msra.mxu0 %v3565
    %3569 = vmatprep.subr.mxu0 0.0
    %3570 = vmatpush1.xpose.msra.mxu0 0.0
    %3571 = vmatprep.subr.mxu0 0.0
    %3572 = vmatpush1.xpose.msra.mxu0 0.0
    %3573 = vmatprep.subr.mxu0 0.0
    %3574 = vmatpush1.xpose.msra.mxu0 0.0
    %3575 = vmatprep.subr.mxu0 0.0
    %3576 = vmatpush1.xpose.msra.mxu0 0.0
    %3577 = vmatprep.subr.mxu0 0.0
    %3578 = vmatpush1.xpose.msra.mxu0 0.0
    %3579 = vmatprep.subr.mxu0 0.0
    %3580 = vmatpush1.xpose.msra.mxu0 0.0
    %3581 = vmatprep.subr.mxu0 0.0
    %3582 = vmatpush1.xpose.msra.mxu0 0.0
    %3583 = vmatprep.subr.mxu0 0.0
    %3584 = vmatpush1.xpose.msra.mxu0 0.0
    %3585 = vmatprep.subr.mxu0 0.0
    %3586 = vmatpush1.xpose.msra.mxu0 0.0
    %3587 = vmatprep.subr.mxu0 0.0
    %3588 = vmatpush1.xpose.msra.mxu0 0.0
    %3589 = vmatprep.subr.mxu0 0.0
    %3590 = vmatpush1.xpose.msra.mxu0 0.0
    %3591 = vmatprep.subr.mxu0 0.0
    %3592 = vmatpush1.xpose.msra.mxu0 0.0
    %3593 = vmatprep.subr.mxu0 0.0
    %3594 = vmatpush1.xpose.msra.mxu0 0.0
    %3595 = vmatprep.subr.mxu0 0.0
    %3596 = vmatpush1.xpose.msra.mxu0 0.0
    %3597 = vmatprep.subr.mxu0 0.0
    %3598 = vmatpush1.xpose.msra.mxu0 0.0
    %3599 = vmatprep.subr.mxu0 0.0
    %3600 = vmatpush1.xpose.msra.mxu0 0.0
    %3601 = vmatprep.subr.mxu0 0.0
    %3602 = vmatpush1.xpose.msra.mxu0 0.0
    %3603 = vmatprep.subr.mxu0 0.0
    %3604 = vmatpush1.xpose.msra.mxu0 0.0
    %3605 = vmatprep.subr.mxu0 0.0
    %3606 = vmatpush1.xpose.msra.mxu0 0.0
    %3607 = vmatprep.subr.mxu0 0.0
    %3608 = vmatpush1.xpose.msra.mxu0 0.0
    %3609 = vmatprep.subr.mxu0 0.0
    %3610 = vmatpush1.xpose.msra.mxu0 0.0
    %3611 = vmatprep.subr.mxu0 0.0
    %3612 = vmatpush1.xpose.msra.mxu0 0.0
    %3613 = vmatprep.subr.mxu0 0.0
    %3614 = vmatpush1.xpose.msra.mxu0 0.0
    %3615 = vmatprep.subr.mxu0 0.0
    %3616 = vmatpush1.xpose.msra.mxu0 0.0
    %3617 = vmatprep.subr.mxu0 0.0
    %3618 = vmatpush1.xpose.msra.mxu0 0.0
    %3619 = vmatprep.subr.mxu0 0.0
    %3620 = vmatpush1.xpose.msra.mxu0 0.0
    %3621 = vmatprep.subr.mxu0 0.0
    %3622 = vmatpush1.xpose.msra.mxu0 0.0
    %3623 = vmatprep.subr.mxu0 0.0
    %3624 = vmatpush1.xpose.msra.mxu0 0.0
    %3625 = vmatprep.subr.mxu0 0.0
    %3626 = vmatpush1.xpose.msra.mxu0 0.0
    %3627 = vmatprep.subr.mxu0 0.0
    %3628 = vmatpush1.xpose.msra.mxu0 0.0
    %3629 = vmatprep.subr.mxu0 0.0
    %3630 = vmatpush1.xpose.msra.mxu0 0.0
    %3631 = vmatprep.mubr.f32.mxu0 0.0
    %3632 = vmatmul.mubr.f32.gmra.mrb[0].mxu0 %v3563
    %v3633 = vpop.f32.mrb[0].mxu0
    %v3634 = vadd.f32 %v1244, %v3633
    %v3635 = vpop.f32.mrb[0].mxu0
    %3636 = vdwg.mxu0
    %v3637 = vsel %vm289, %v3634, -inf
    %3638 = vmax.xlane.f32.xlu0 %v3637
    %v3639 = vpop.xlane.xlu0 %3638
    %v3640 = vsub.f32 %v3634, %v3639
    %v3641 = vmul.f32 %v3640, 1.442695
    %v3642 = vpow.pop %v3641
    %v3643 = vsel %vm289, %v3642, 0.0
    %3644 = vadd.xlane.f32.xlu0 %v3643
    %v3645 = vpop.xlane.xlu0 %3644
    %v3646 = vrcp.pop %v3645
    %v3647 = vmul.f32 %v3642, %v3646
    %3648 = vrot.lane.b32.xlu0 %v2596, 64
    %v3649 = vpop.permute.xlu0 %3648
    %v3652 = vsel %vm289, %v3647, 0
    %3654 = vmatprep.subr.mxu0 0.0
    %3655 = vmatpush1.msra.mxu0 %v3649
    %3656 = vmatprep.subr.mxu0 0.0
    %3657 = vmatpush1.msra.mxu0 0.0
    %3658 = vmatprep.subr.mxu0 0.0
    %3659 = vmatpush1.msra.mxu0 0.0
    %3660 = vmatprep.subr.mxu0 0.0
    %3661 = vmatpush1.msra.mxu0 0.0
    %3662 = vmatprep.subr.mxu0 0.0
    %3663 = vmatpush1.msra.mxu0 0.0
    %3664 = vmatprep.subr.mxu0 0.0
    %3665 = vmatpush1.msra.mxu0 0.0
    %3666 = vmatprep.subr.mxu0 0.0
    %3667 = vmatpush1.msra.mxu0 0.0
    %3668 = vmatprep.subr.mxu0 0.0
    %3669 = vmatpush1.msra.mxu0 0.0
    %3670 = vmatprep.subr.mxu0 0.0
    %3671 = vmatpush1.msra.mxu0 0.0
    %3672 = vmatprep.subr.mxu0 0.0
    %3673 = vmatpush1.msra.mxu0 0.0
    %3674 = vmatprep.subr.mxu0 0.0
    %3675 = vmatpush1.msra.mxu0 0.0
    %3676 = vmatprep.subr.mxu0 0.0
    %3677 = vmatpush1.msra.mxu0 0.0
    %3678 = vmatprep.subr.mxu0 0.0
    %3679 = vmatpush1.msra.mxu0 0.0
    %3680 = vmatprep.subr.mxu0 0.0
    %3681 = vmatpush1.msra.mxu0 0.0
    %3682 = vmatprep.subr.mxu0 0.0
    %3683 = vmatpush1.msra.mxu0 0.0
    %3684 = vmatprep.subr.mxu0 0.0
    %3685 = vmatpush1.msra.mxu0 0.0
    %3686 = vmatprep.subr.mxu0 0.0
    %3687 = vmatpush1.msra.mxu0 0.0
    %3688 = vmatprep.subr.mxu0 0.0
    %3689 = vmatpush1.msra.mxu0 0.0
    %3690 = vmatprep.subr.mxu0 0.0
    %3691 = vmatpush1.msra.mxu0 0.0
    %3692 = vmatprep.subr.mxu0 0.0
    %3693 = vmatpush1.msra.mxu0 0.0
    %3694 = vmatprep.subr.mxu0 0.0
    %3695 = vmatpush1.msra.mxu0 0.0
    %3696 = vmatprep.subr.mxu0 0.0
    %3697 = vmatpush1.msra.mxu0 0.0
    %3698 = vmatprep.subr.mxu0 0.0
    %3699 = vmatpush1.msra.mxu0 0.0
    %3700 = vmatprep.subr.mxu0 0.0
    %3701 = vmatpush1.msra.mxu0 0.0
    %3702 = vmatprep.subr.mxu0 0.0
    %3703 = vmatpush1.msra.mxu0 0.0
    %3704 = vmatprep.subr.mxu0 0.0
    %3705 = vmatpush1.msra.mxu0 0.0
    %3706 = vmatprep.subr.mxu0 0.0
    %3707 = vmatpush1.msra.mxu0 0.0
    %3708 = vmatprep.subr.mxu0 0.0
    %3709 = vmatpush1.msra.mxu0 0.0
    %3710 = vmatprep.subr.mxu0 0.0
    %3711 = vmatpush1.msra.mxu0 0.0
    %3712 = vmatprep.subr.mxu0 0.0
    %3713 = vmatpush1.msra.mxu0 0.0
    %3714 = vmatprep.subr.mxu0 0.0
    %3715 = vmatpush1.msra.mxu0 0.0
    %3716 = vmatprep.subr.mxu0 0.0
    %3717 = vmatpush1.msra.mxu0 0.0
    %3718 = vmatprep.mubr.f32.mxu0 0.0
    %3719 = vmatmul.mubr.f32.gmra.mrb[0].mxu0 %v3652
    %v3720 = vpop.f32.mrb[0].mxu0
    %v3721 = vadd.f32 0.0, %v3720
    %v3722 = vpop.f32.mrb[0].mxu0
    %3723 = vdwg.mxu0
    %3724 = vrot.lane.b32.xlu0 %v2600, 120
    %v3725 = vpop.permute.xlu0 %3724
    %3726 = vrot.lane.b32.xlu0 %v2596, 88
    %v3727 = vpop.permute.xlu0 %3726
    %v3728 = vsel %vm289, %v3725, 0
    %v3730 = vsel %vm289, %v3727, 0
    %3732 = vmatprep.subr.mxu0 0.0
    %3733 = vmatpush1.xpose.msra.mxu0 %v3730
    %3734 = vmatprep.subr.mxu0 0.0
    %3735 = vmatpush1.xpose.msra.mxu0 0.0
    %3736 = vmatprep.subr.mxu0 0.0
    %3737 = vmatpush1.xpose.msra.mxu0 0.0
    %3738 = vmatprep.subr.mxu0 0.0
    %3739 = vmatpush1.xpose.msra.mxu0 0.0
    %3740 = vmatprep.subr.mxu0 0.0
    %3741 = vmatpush1.xpose.msra.mxu0 0.0
    %3742 = vmatprep.subr.mxu0 0.0
    %3743 = vmatpush1.xpose.msra.mxu0 0.0
    %3744 = vmatprep.subr.mxu0 0.0
    %3745 = vmatpush1.xpose.msra.mxu0 0.0
    %3746 = vmatprep.subr.mxu0 0.0
    %3747 = vmatpush1.xpose.msra.mxu0 0.0
    %3748 = vmatprep.subr.mxu0 0.0
    %3749 = vmatpush1.xpose.msra.mxu0 0.0
    %3750 = vmatprep.subr.mxu0 0.0
    %3751 = vmatpush1.xpose.msra.mxu0 0.0
    %3752 = vmatprep.subr.mxu0 0.0
    %3753 = vmatpush1.xpose.msra.mxu0 0.0
    %3754 = vmatprep.subr.mxu0 0.0
    %3755 = vmatpush1.xpose.msra.mxu0 0.0
    %3756 = vmatprep.subr.mxu0 0.0
    %3757 = vmatpush1.xpose.msra.mxu0 0.0
    %3758 = vmatprep.subr.mxu0 0.0
    %3759 = vmatpush1.xpose.msra.mxu0 0.0
    %3760 = vmatprep.subr.mxu0 0.0
    %3761 = vmatpush1.xpose.msra.mxu0 0.0
    %3762 = vmatprep.subr.mxu0 0.0
    %3763 = vmatpush1.xpose.msra.mxu0 0.0
    %3764 = vmatprep.subr.mxu0 0.0
    %3765 = vmatpush1.xpose.msra.mxu0 0.0
    %3766 = vmatprep.subr.mxu0 0.0
    %3767 = vmatpush1.xpose.msra.mxu0 0.0
    %3768 = vmatprep.subr.mxu0 0.0
    %3769 = vmatpush1.xpose.msra.mxu0 0.0
    %3770 = vmatprep.subr.mxu0 0.0
    %3771 = vmatpush1.xpose.msra.mxu0 0.0
    %3772 = vmatprep.subr.mxu0 0.0
    %3773 = vmatpush1.xpose.msra.mxu0 0.0
    %3774 = vmatprep.subr.mxu0 0.0
    %3775 = vmatpush1.xpose.msra.mxu0 0.0
    %3776 = vmatprep.subr.mxu0 0.0
    %3777 = vmatpush1.xpose.msra.mxu0 0.0
    %3778 = vmatprep.subr.mxu0 0.0
    %3779 = vmatpush1.xpose.msra.mxu0 0.0
    %3780 = vmatprep.subr.mxu0 0.0
    %3781 = vmatpush1.xpose.msra.mxu0 0.0
    %3782 = vmatprep.subr.mxu0 0.0
    %3783 = vmatpush1.xpose.msra.mxu0 0.0
    %3784 = vmatprep.subr.mxu0 0.0
    %3785 = vmatpush1.xpose.msra.mxu0 0.0
    %3786 = vmatprep.subr.mxu0 0.0
    %3787 = vmatpush1.xpose.msra.mxu0 0.0
    %3788 = vmatprep.subr.mxu0 0.0
    %3789 = vmatpush1.xpose.msra.mxu0 0.0
    %3790 = vmatprep.subr.mxu0 0.0
    %3791 = vmatpush1.xpose.msra.mxu0 0.0
    %3792 = vmatprep.subr.mxu0 0.0
    %3793 = vmatpush1.xpose.msra.mxu0 0.0
    %3794 = vmatprep.subr.mxu0 0.0
    %3795 = vmatpush1.xpose.msra.mxu0 0.0
    %3796 = vmatprep.mubr.f32.mxu0 0.0
    %3797 = vmatmul.mubr.f32.gmra.mrb[0].mxu0 %v3728
    %v3798 = vpop.f32.mrb[0].mxu0
    %v3799 = vadd.f32 %v1244, %v3798
    %v3800 = vpop.f32.mrb[0].mxu0
    %3801 = vdwg.mxu0
    %v3802 = vsel %vm289, %v3799, -inf
    %3803 = vmax.xlane.f32.xlu0 %v3802
    %v3804 = vpop.xlane.xlu0 %3803
    %v3805 = vsub.f32 %v3799, %v3804
    %v3806 = vmul.f32 %v3805, 1.442695
    %v3807 = vpow.pop %v3806
    %v3808 = vsel %vm289, %v3807, 0.0
    %3809 = vadd.xlane.f32.xlu0 %v3808
    %v3810 = vpop.xlane.xlu0 %3809
    %v3811 = vrcp.pop %v3810
    %v3812 = vmul.f32 %v3807, %v3811
    %3813 = vrot.lane.b32.xlu0 %v2596, 56
    %v3814 = vpop.permute.xlu0 %3813
    %v3817 = vsel %vm289, %v3812, 0
    %3819 = vmatprep.subr.mxu0 0.0
    %3820 = vmatpush1.msra.mxu0 %v3814
    %3821 = vmatprep.subr.mxu0 0.0
    %3822 = vmatpush1.msra.mxu0 0.0
    %3823 = vmatprep.subr.mxu0 0.0
    %3824 = vmatpush1.msra.mxu0 0.0
    %3825 = vmatprep.subr.mxu0 0.0
    %3826 = vmatpush1.msra.mxu0 0.0
    %3827 = vmatprep.subr.mxu0 0.0
    %3828 = vmatpush1.msra.mxu0 0.0
    %3829 = vmatprep.subr.mxu0 0.0
    %3830 = vmatpush1.msra.mxu0 0.0
    %3831 = vmatprep.subr.mxu0 0.0
    %3832 = vmatpush1.msra.mxu0 0.0
    %3833 = vmatprep.subr.mxu0 0.0
    %3834 = vmatpush1.msra.mxu0 0.0
    %3835 = vmatprep.subr.mxu0 0.0
    %3836 = vmatpush1.msra.mxu0 0.0
    %3837 = vmatprep.subr.mxu0 0.0
    %3838 = vmatpush1.msra.mxu0 0.0
    %3839 = vmatprep.subr.mxu0 0.0
    %3840 = vmatpush1.msra.mxu0 0.0
    %3841 = vmatprep.subr.mxu0 0.0
    %3842 = vmatpush1.msra.mxu0 0.0
    %3843 = vmatprep.subr.mxu0 0.0
    %3844 = vmatpush1.msra.mxu0 0.0
    %3845 = vmatprep.subr.mxu0 0.0
    %3846 = vmatpush1.msra.mxu0 0.0
    %3847 = vmatprep.subr.mxu0 0.0
    %3848 = vmatpush1.msra.mxu0 0.0
    %3849 = vmatprep.subr.mxu0 0.0
    %3850 = vmatpush1.msra.mxu0 0.0
    %3851 = vmatprep.subr.mxu0 0.0
    %3852 = vmatpush1.msra.mxu0 0.0
    %3853 = vmatprep.subr.mxu0 0.0
    %3854 = vmatpush1.msra.mxu0 0.0
    %3855 = vmatprep.subr.mxu0 0.0
    %3856 = vmatpush1.msra.mxu0 0.0
    %3857 = vmatprep.subr.mxu0 0.0
    %3858 = vmatpush1.msra.mxu0 0.0
    %3859 = vmatprep.subr.mxu0 0.0
    %3860 = vmatpush1.msra.mxu0 0.0
    %3861 = vmatprep.subr.mxu0 0.0
    %3862 = vmatpush1.msra.mxu0 0.0
    %3863 = vmatprep.subr.mxu0 0.0
    %3864 = vmatpush1.msra.mxu0 0.0
    %3865 = vmatprep.subr.mxu0 0.0
    %3866 = vmatpush1.msra.mxu0 0.0
    %3867 = vmatprep.subr.mxu0 0.0
    %3868 = vmatpush1.msra.mxu0 0.0
    %3869 = vmatprep.subr.mxu0 0.0
    %3870 = vmatpush1.msra.mxu0 0.0
    %3871 = vmatprep.subr.mxu0 0.0
    %3872 = vmatpush1.msra.mxu0 0.0
    %3873 = vmatprep.subr.mxu0 0.0
    %3874 = vmatpush1.msra.mxu0 0.0
    %3875 = vmatprep.subr.mxu0 0.0
    %3876 = vmatpush1.msra.mxu0 0.0
    %3877 = vmatprep.subr.mxu0 0.0
    %3878 = vmatpush1.msra.mxu0 0.0
    %3879 = vmatprep.subr.mxu0 0.0
    %3880 = vmatpush1.msra.mxu0 0.0
    %3881 = vmatprep.subr.mxu0 0.0
    %3882 = vmatpush1.msra.mxu0 0.0
    %3883 = vmatprep.mubr.f32.mxu0 0.0
    %3884 = vmatmul.mubr.f32.gmra.mrb[0].mxu0 %v3817
    %v3885 = vpop.f32.mrb[0].mxu0
    %v3886 = vadd.f32 0.0, %v3885
    %v3887 = vpop.f32.mrb[0].mxu0
    %3888 = vdwg.mxu0
    %v3890 = vsel %vm289, %v3886, 0
    %3892 = vmatprep.subr.mxu0 0.0
    %3893 = vmatpush1.msra.mxu0 %v2602
    %3894 = vmatprep.subr.mxu0 0.0
    %3895 = vmatpush1.msra.mxu0 0.0
    %3896 = vmatprep.subr.mxu0 0.0
    %3897 = vmatpush1.msra.mxu0 0.0
    %3898 = vmatprep.subr.mxu0 0.0
    %3899 = vmatpush1.msra.mxu0 0.0
    %3900 = vmatprep.subr.mxu0 0.0
    %3901 = vmatpush1.msra.mxu0 0.0
    %3902 = vmatprep.subr.mxu0 0.0
    %3903 = vmatpush1.msra.mxu0 0.0
    %3904 = vmatprep.subr.mxu0 0.0
    %3905 = vmatpush1.msra.mxu0 0.0
    %3906 = vmatprep.subr.mxu0 0.0
    %3907 = vmatpush1.msra.mxu0 0.0
    %3908 = vmatprep.subr.mxu0 0.0
    %3909 = vmatpush1.msra.mxu0 0.0
    %3910 = vmatprep.subr.mxu0 0.0
    %3911 = vmatpush1.msra.mxu0 0.0
    %3912 = vmatprep.subr.mxu0 0.0
    %3913 = vmatpush1.msra.mxu0 0.0
    %3914 = vmatprep.subr.mxu0 0.0
    %3915 = vmatpush1.msra.mxu0 0.0
    %3916 = vmatprep.subr.mxu0 0.0
    %3917 = vmatpush1.msra.mxu0 0.0
    %3918 = vmatprep.subr.mxu0 0.0
    %3919 = vmatpush1.msra.mxu0 0.0
    %3920 = vmatprep.subr.mxu0 0.0
    %3921 = vmatpush1.msra.mxu0 0.0
    %3922 = vmatprep.subr.mxu0 0.0
    %3923 = vmatpush1.msra.mxu0 0.0
    %3924 = vmatprep.subr.mxu0 0.0
    %3925 = vmatpush1.msra.mxu0 0.0
    %3926 = vmatprep.subr.mxu0 0.0
    %3927 = vmatpush1.msra.mxu0 0.0
    %3928 = vmatprep.subr.mxu0 0.0
    %3929 = vmatpush1.msra.mxu0 0.0
    %3930 = vmatprep.subr.mxu0 0.0
    %3931 = vmatpush1.msra.mxu0 0.0
    %3932 = vmatprep.subr.mxu0 0.0
    %3933 = vmatpush1.msra.mxu0 0.0
    %3934 = vmatprep.subr.mxu0 0.0
    %3935 = vmatpush1.msra.mxu0 0.0
    %3936 = vmatprep.subr.mxu0 0.0
    %3937 = vmatpush1.msra.mxu0 0.0
    %3938 = vmatprep.subr.mxu0 0.0
    %3939 = vmatpush1.msra.mxu0 0.0
    %3940 = vmatprep.subr.mxu0 0.0
    %3941 = vmatpush1.msra.mxu0 0.0
    %3942 = vmatprep.subr.mxu0 0.0
    %3943 = vmatpush1.msra.mxu0 0.0
    %3944 = vmatprep.subr.mxu0 0.0
    %3945 = vmatpush1.msra.mxu0 0.0
    %3946 = vmatprep.subr.mxu0 0.0
    %3947 = vmatpush1.msra.mxu0 0.0
    %3948 = vmatprep.subr.mxu0 0.0
    %3949 = vmatpush1.msra.mxu0 0.0
    %3950 = vmatprep.subr.mxu0 0.0
    %3951 = vmatpush1.msra.mxu0 0.0
    %3952 = vmatprep.subr.mxu0 0.0
    %3953 = vmatpush1.msra.mxu0 0.0
    %3954 = vmatprep.subr.mxu0 0.0
    %3955 = vmatpush1.msra.mxu0 0.0
    %3956 = vmatprep.mubr.f32.mxu0 0.0
    %3957 = vmatmul.mubr.f32.gmra.mrb[0].mxu0 %v3890
    %v3958 = vpop.f32.mrb[0].mxu0
    %v3959 = vadd.f32 0.0, %v3958
    %v3960 = vpop.f32.mrb[0].mxu0
    %3961 = vdwg.mxu0
    %v3963 = vsel %vm289, %v3721, 0
    %3965 = vmatprep.subr.mxu0 0.0
    %3966 = vmatpush1.msra.mxu0 %v2601
    %3967 = vmatprep.subr.mxu0 0.0
    %3968 = vmatpush1.msra.mxu0 0.0
    %3969 = vmatprep.subr.mxu0 0.0
    %3970 = vmatpush1.msra.mxu0 0.0
    %3971 = vmatprep.subr.mxu0 0.0
    %3972 = vmatpush1.msra.mxu0 0.0
    %3973 = vmatprep.subr.mxu0 0.0
    %3974 = vmatpush1.msra.mxu0 0.0
    %3975 = vmatprep.subr.mxu0 0.0
    %3976 = vmatpush1.msra.mxu0 0.0
    %3977 = vmatprep.subr.mxu0 0.0
    %3978 = vmatpush1.msra.mxu0 0.0
    %3979 = vmatprep.subr.mxu0 0.0
    %3980 = vmatpush1.msra.mxu0 0.0
    %3981 = vmatprep.subr.mxu0 0.0
    %3982 = vmatpush1.msra.mxu0 0.0
    %3983 = vmatprep.subr.mxu0 0.0
    %3984 = vmatpush1.msra.mxu0 0.0
    %3985 = vmatprep.subr.mxu0 0.0
    %3986 = vmatpush1.msra.mxu0 0.0
    %3987 = vmatprep.subr.mxu0 0.0
    %3988 = vmatpush1.msra.mxu0 0.0
    %3989 = vmatprep.subr.mxu0 0.0
    %3990 = vmatpush1.msra.mxu0 0.0
    %3991 = vmatprep.subr.mxu0 0.0
    %3992 = vmatpush1.msra.mxu0 0.0
    %3993 = vmatprep.subr.mxu0 0.0
    %3994 = vmatpush1.msra.mxu0 0.0
    %3995 = vmatprep.subr.mxu0 0.0
    %3996 = vmatpush1.msra.mxu0 0.0
    %3997 = vmatprep.subr.mxu0 0.0
    %3998 = vmatpush1.msra.mxu0 0.0
    %3999 = vmatprep.subr.mxu0 0.0
    %4000 = vmatpush1.msra.mxu0 0.0
    %4001 = vmatprep.subr.mxu0 0.0
    %4002 = vmatpush1.msra.mxu0 0.0
    %4003 = vmatprep.subr.mxu0 0.0
    %4004 = vmatpush1.msra.mxu0 0.0
    %4005 = vmatprep.subr.mxu0 0.0
    %4006 = vmatpush1.msra.mxu0 0.0
    %4007 = vmatprep.subr.mxu0 0.0
    %4008 = vmatpush1.msra.mxu0 0.0
    %4009 = vmatprep.subr.mxu0 0.0
    %4010 = vmatpush1.msra.mxu0 0.0
    %4011 = vmatprep.subr.mxu0 0.0
    %4012 = vmatpush1.msra.mxu0 0.0
    %4013 = vmatprep.subr.mxu0 0.0
    %4014 = vmatpush1.msra.mxu0 0.0
    %4015 = vmatprep.subr.mxu0 0.0
    %4016 = vmatpush1.msra.mxu0 0.0
    %4017 = vmatprep.subr.mxu0 0.0
    %4018 = vmatpush1.msra.mxu0 0.0
    %4019 = vmatprep.subr.mxu0 0.0
    %4020 = vmatpush1.msra.mxu0 0.0
    %4021 = vmatprep.subr.mxu0 0.0
    %4022 = vmatpush1.msra.mxu0 0.0
    %4023 = vmatprep.subr.mxu0 0.0
    %4024 = vmatpush1.msra.mxu0 0.0
    %4025 = vmatprep.subr.mxu0 0.0
    %4026 = vmatpush1.msra.mxu0 0.0
    %4027 = vmatprep.subr.mxu0 0.0
    %4028 = vmatpush1.msra.mxu0 0.0
    %4029 = vmatprep.mubr.f32.mxu0 0.0
    %4030 = vmatmul.mubr.f32.gmra.mrb[0].mxu0 %v3963
    %v4031 = vpop.f32.mrb[0].mxu0
    %v4032 = vadd.f32 %v3959, %v4031
    %v4033 = vpop.f32.mrb[0].mxu0
    %4034 = vdwg.mxu0
    %4035 = vrot.lane.b32.xlu0 %v2600, 112
    %v4036 = vpop.permute.xlu0 %4035
    %4037 = vrot.lane.b32.xlu0 %v2596, 80
    %v4038 = vpop.permute.xlu0 %4037
    %v4039 = vsel %vm289, %v4036, 0
    %v4041 = vsel %vm289, %v4038, 0
    %4043 = vmatprep.subr.mxu0 0.0
    %4044 = vmatpush1.xpose.msra.mxu0 %v4041
    %4045 = vmatprep.subr.mxu0 0.0
    %4046 = vmatpush1.xpose.msra.mxu0 0.0
    %4047 = vmatprep.subr.mxu0 0.0
    %4048 = vmatpush1.xpose.msra.mxu0 0.0
    %4049 = vmatprep.subr.mxu0 0.0
    %4050 = vmatpush1.xpose.msra.mxu0 0.0
    %4051 = vmatprep.subr.mxu0 0.0
    %4052 = vmatpush1.xpose.msra.mxu0 0.0
    %4053 = vmatprep.subr.mxu0 0.0
    %4054 = vmatpush1.xpose.msra.mxu0 0.0
    %4055 = vmatprep.subr.mxu0 0.0
    %4056 = vmatpush1.xpose.msra.mxu0 0.0
    %4057 = vmatprep.subr.mxu0 0.0
    %4058 = vmatpush1.xpose.msra.mxu0 0.0
    %4059 = vmatprep.subr.mxu0 0.0
    %4060 = vmatpush1.xpose.msra.mxu0 0.0
    %4061 = vmatprep.subr.mxu0 0.0
    %4062 = vmatpush1.xpose.msra.mxu0 0.0
    %4063 = vmatprep.subr.mxu0 0.0
    %4064 = vmatpush1.xpose.msra.mxu0 0.0
    %4065 = vmatprep.subr.mxu0 0.0
    %4066 = vmatpush1.xpose.msra.mxu0 0.0
    %4067 = vmatprep.subr.mxu0 0.0
    %4068 = vmatpush1.xpose.msra.mxu0 0.0
    %4069 = vmatprep.subr.mxu0 0.0
    %4070 = vmatpush1.xpose.msra.mxu0 0.0
    %4071 = vmatprep.subr.mxu0 0.0
    %4072 = vmatpush1.xpose.msra.mxu0 0.0
    %4073 = vmatprep.subr.mxu0 0.0
    %4074 = vmatpush1.xpose.msra.mxu0 0.0
    %4075 = vmatprep.subr.mxu0 0.0
    %4076 = vmatpush1.xpose.msra.mxu0 0.0
    %4077 = vmatprep.subr.mxu0 0.0
    %4078 = vmatpush1.xpose.msra.mxu0 0.0
    %4079 = vmatprep.subr.mxu0 0.0
    %4080 = vmatpush1.xpose.msra.mxu0 0.0
    %4081 = vmatprep.subr.mxu0 0.0
    %4082 = vmatpush1.xpose.msra.mxu0 0.0
    %4083 = vmatprep.subr.mxu0 0.0
    %4084 = vmatpush1.xpose.msra.mxu0 0.0
    %4085 = vmatprep.subr.mxu0 0.0
    %4086 = vmatpush1.xpose.msra.mxu0 0.0
    %4087 = vmatprep.subr.mxu0 0.0
    %4088 = vmatpush1.xpose.msra.mxu0 0.0
    %4089 = vmatprep.subr.mxu0 0.0
    %4090 = vmatpush1.xpose.msra.mxu0 0.0
    %4091 = vmatprep.subr.mxu0 0.0
    %4092 = vmatpush1.xpose.msra.mxu0 0.0
    %4093 = vmatprep.subr.mxu0 0.0
    %4094 = vmatpush1.xpose.msra.mxu0 0.0
    %4095 = vmatprep.subr.mxu0 0.0
    %4096 = vmatpush1.xpose.msra.mxu0 0.0
    %4097 = vmatprep.subr.mxu0 0.0
    %4098 = vmatpush1.xpose.msra.mxu0 0.0
    %4099 = vmatprep.subr.mxu0 0.0
    %4100 = vmatpush1.xpose.msra.mxu0 0.0
    %4101 = vmatprep.subr.mxu0 0.0
    %4102 = vmatpush1.xpose.msra.mxu0 0.0
    %4103 = vmatprep.subr.mxu0 0.0
    %4104 = vmatpush1.xpose.msra.mxu0 0.0
    %4105 = vmatprep.subr.mxu0 0.0
    %4106 = vmatpush1.xpose.msra.mxu0 0.0
    %4107 = vmatprep.mubr.f32.mxu0 0.0
    %4108 = vmatmul.mubr.f32.gmra.mrb[0].mxu0 %v4039
    %v4109 = vpop.f32.mrb[0].mxu0
    %v4110 = vadd.f32 %v1244, %v4109
    %v4111 = vpop.f32.mrb[0].mxu0
    %4112 = vdwg.mxu0
    %v4113 = vsel %vm289, %v4110, -inf
    %4114 = vmax.xlane.f32.xlu0 %v4113
    %v4115 = vpop.xlane.xlu0 %4114
    %v4116 = vsub.f32 %v4110, %v4115
    %v4117 = vmul.f32 %v4116, 1.442695
    %v4118 = vpow.pop %v4117
    %v4119 = vsel %vm289, %v4118, 0.0
    %4120 = vadd.xlane.f32.xlu0 %v4119
    %v4121 = vpop.xlane.xlu0 %4120
    %v4122 = vrcp.pop %v4121
    %v4123 = vmul.f32 %v4118, %v4122
    %4124 = vrot.lane.b32.xlu0 %v2596, 48
    %v4125 = vpop.permute.xlu0 %4124
    %v4128 = vsel %vm289, %v4123, 0
    %4130 = vmatprep.subr.mxu0 0.0
    %4131 = vmatpush1.msra.mxu0 %v4125
    %4132 = vmatprep.subr.mxu0 0.0
    %4133 = vmatpush1.msra.mxu0 0.0
    %4134 = vmatprep.subr.mxu0 0.0
    %4135 = vmatpush1.msra.mxu0 0.0
    %4136 = vmatprep.subr.mxu0 0.0
    %4137 = vmatpush1.msra.mxu0 0.0
    %4138 = vmatprep.subr.mxu0 0.0
    %4139 = vmatpush1.msra.mxu0 0.0
    %4140 = vmatprep.subr.mxu0 0.0
    %4141 = vmatpush1.msra.mxu0 0.0
    %4142 = vmatprep.subr.mxu0 0.0
    %4143 = vmatpush1.msra.mxu0 0.0
    %4144 = vmatprep.subr.mxu0 0.0
    %4145 = vmatpush1.msra.mxu0 0.0
    %4146 = vmatprep.subr.mxu0 0.0
    %4147 = vmatpush1.msra.mxu0 0.0
    %4148 = vmatprep.subr.mxu0 0.0
    %4149 = vmatpush1.msra.mxu0 0.0
    %4150 = vmatprep.subr.mxu0 0.0
    %4151 = vmatpush1.msra.mxu0 0.0
    %4152 = vmatprep.subr.mxu0 0.0
    %4153 = vmatpush1.msra.mxu0 0.0
    %4154 = vmatprep.subr.mxu0 0.0
    %4155 = vmatpush1.msra.mxu0 0.0
    %4156 = vmatprep.subr.mxu0 0.0
    %4157 = vmatpush1.msra.mxu0 0.0
    %4158 = vmatprep.subr.mxu0 0.0
    %4159 = vmatpush1.msra.mxu0 0.0
    %4160 = vmatprep.subr.mxu0 0.0
    %4161 = vmatpush1.msra.mxu0 0.0
    %4162 = vmatprep.subr.mxu0 0.0
    %4163 = vmatpush1.msra.mxu0 0.0
    %4164 = vmatprep.subr.mxu0 0.0
    %4165 = vmatpush1.msra.mxu0 0.0
    %4166 = vmatprep.subr.mxu0 0.0
    %4167 = vmatpush1.msra.mxu0 0.0
    %4168 = vmatprep.subr.mxu0 0.0
    %4169 = vmatpush1.msra.mxu0 0.0
    %4170 = vmatprep.subr.mxu0 0.0
    %4171 = vmatpush1.msra.mxu0 0.0
    %4172 = vmatprep.subr.mxu0 0.0
    %4173 = vmatpush1.msra.mxu0 0.0
    %4174 = vmatprep.subr.mxu0 0.0
    %4175 = vmatpush1.msra.mxu0 0.0
    %4176 = vmatprep.subr.mxu0 0.0
    %4177 = vmatpush1.msra.mxu0 0.0
    %4178 = vmatprep.subr.mxu0 0.0
    %4179 = vmatpush1.msra.mxu0 0.0
    %4180 = vmatprep.subr.mxu0 0.0
    %4181 = vmatpush1.msra.mxu0 0.0
    %4182 = vmatprep.subr.mxu0 0.0
    %4183 = vmatpush1.msra.mxu0 0.0
    %4184 = vmatprep.subr.mxu0 0.0
    %4185 = vmatpush1.msra.mxu0 0.0
    %4186 = vmatprep.subr.mxu0 0.0
    %4187 = vmatpush1.msra.mxu0 0.0
    %4188 = vmatprep.subr.mxu0 0.0
    %4189 = vmatpush1.msra.mxu0 0.0
    %4190 = vmatprep.subr.mxu0 0.0
    %4191 = vmatpush1.msra.mxu0 0.0
    %4192 = vmatprep.subr.mxu0 0.0
    %4193 = vmatpush1.msra.mxu0 0.0
    %4194 = vmatprep.mubr.f32.mxu0 0.0
    %4195 = vmatmul.mubr.f32.gmra.mrb[0].mxu0 %v4128
    %v4196 = vpop.f32.mrb[0].mxu0
    %v4197 = vadd.f32 0.0, %v4196
    %v4198 = vpop.f32.mrb[0].mxu0
    %4199 = vdwg.mxu0
    %v4201 = vsel %vm289, %v4197, 0
    %4203 = vmatprep.subr.mxu0 0.0
    %4204 = vmatpush1.msra.mxu0 %v2603
    %4205 = vmatprep.subr.mxu0 0.0
    %4206 = vmatpush1.msra.mxu0 0.0
    %4207 = vmatprep.subr.mxu0 0.0
    %4208 = vmatpush1.msra.mxu0 0.0
    %4209 = vmatprep.subr.mxu0 0.0
    %4210 = vmatpush1.msra.mxu0 0.0
    %4211 = vmatprep.subr.mxu0 0.0
    %4212 = vmatpush1.msra.mxu0 0.0
    %4213 = vmatprep.subr.mxu0 0.0
    %4214 = vmatpush1.msra.mxu0 0.0
    %4215 = vmatprep.subr.mxu0 0.0
    %4216 = vmatpush1.msra.mxu0 0.0
    %4217 = vmatprep.subr.mxu0 0.0
    %4218 = vmatpush1.msra.mxu0 0.0
    %4219 = vmatprep.subr.mxu0 0.0
    %4220 = vmatpush1.msra.mxu0 0.0
    %4221 = vmatprep.subr.mxu0 0.0
    %4222 = vmatpush1.msra.mxu0 0.0
    %4223 = vmatprep.subr.mxu0 0.0
    %4224 = vmatpush1.msra.mxu0 0.0
    %4225 = vmatprep.subr.mxu0 0.0
    %4226 = vmatpush1.msra.mxu0 0.0
    %4227 = vmatprep.subr.mxu0 0.0
    %4228 = vmatpush1.msra.mxu0 0.0
    %4229 = vmatprep.subr.mxu0 0.0
    %4230 = vmatpush1.msra.mxu0 0.0
    %4231 = vmatprep.subr.mxu0 0.0
    %4232 = vmatpush1.msra.mxu0 0.0
    %4233 = vmatprep.subr.mxu0 0.0
    %4234 = vmatpush1.msra.mxu0 0.0
    %4235 = vmatprep.subr.mxu0 0.0
    %4236 = vmatpush1.msra.mxu0 0.0
    %4237 = vmatprep.subr.mxu0 0.0
    %4238 = vmatpush1.msra.mxu0 0.0
    %4239 = vmatprep.subr.mxu0 0.0
    %4240 = vmatpush1.msra.mxu0 0.0
    %4241 = vmatprep.subr.mxu0 0.0
    %4242 = vmatpush1.msra.mxu0 0.0
    %4243 = vmatprep.subr.mxu0 0.0
    %4244 = vmatpush1.msra.mxu0 0.0
    %4245 = vmatprep.subr.mxu0 0.0
    %4246 = vmatpush1.msra.mxu0 0.0
    %4247 = vmatprep.subr.mxu0 0.0
    %4248 = vmatpush1.msra.mxu0 0.0
    %4249 = vmatprep.subr.mxu0 0.0
    %4250 = vmatpush1.msra.mxu0 0.0
    %4251 = vmatprep.subr.mxu0 0.0
    %4252 = vmatpush1.msra.mxu0 0.0
    %4253 = vmatprep.subr.mxu0 0.0
    %4254 = vmatpush1.msra.mxu0 0.0
    %4255 = vmatprep.subr.mxu0 0.0
    %4256 = vmatpush1.msra.mxu0 0.0
    %4257 = vmatprep.subr.mxu0 0.0
    %4258 = vmatpush1.msra.mxu0 0.0
    %4259 = vmatprep.subr.mxu0 0.0
    %4260 = vmatpush1.msra.mxu0 0.0
    %4261 = vmatprep.subr.mxu0 0.0
    %4262 = vmatpush1.msra.mxu0 0.0
    %4263 = vmatprep.subr.mxu0 0.0
    %4264 = vmatpush1.msra.mxu0 0.0
    %4265 = vmatprep.subr.mxu0 0.0
    %4266 = vmatpush1.msra.mxu0 0.0
    %4267 = vmatprep.mubr.f32.mxu0 0.0
    %4268 = vmatmul.mubr.f32.gmra.mrb[0].mxu0 %v4201
    %v4269 = vpop.f32.mrb[0].mxu0
    %v4270 = vadd.f32 0.0, %v4269
    %v4271 = vpop.f32.mrb[0].mxu0
    %4272 = vdwg.mxu0
    %v4273 = vadd.f32 %v4032, %v4270
    %4274 = vrot.lane.b32.xlu0 %v2600, 104
    %v4275 = vpop.permute.xlu0 %4274
    %4276 = vrot.lane.b32.xlu0 %v2596, 72
    %v4277 = vpop.permute.xlu0 %4276
    %v4278 = vsel %vm289, %v4275, 0
    %v4280 = vsel %vm289, %v4277, 0
    %4282 = vmatprep.subr.mxu0 0.0
    %4283 = vmatpush1.xpose.msra.mxu0 %v4280
    %4284 = vmatprep.subr.mxu0 0.0
    %4285 = vmatpush1.xpose.msra.mxu0 0.0
    %4286 = vmatprep.subr.mxu0 0.0
    %4287 = vmatpush1.xpose.msra.mxu0 0.0
    %4288 = vmatprep.subr.mxu0 0.0
    %4289 = vmatpush1.xpose.msra.mxu0 0.0
    %4290 = vmatprep.subr.mxu0 0.0
    %4291 = vmatpush1.xpose.msra.mxu0 0.0
    %4292 = vmatprep.subr.mxu0 0.0
    %4293 = vmatpush1.xpose.msra.mxu0 0.0
    %4294 = vmatprep.subr.mxu0 0.0
    %4295 = vmatpush1.xpose.msra.mxu0 0.0
    %4296 = vmatprep.subr.mxu0 0.0
    %4297 = vmatpush1.xpose.msra.mxu0 0.0
    %4298 = vmatprep.subr.mxu0 0.0
    %4299 = vmatpush1.xpose.msra.mxu0 0.0
    %4300 = vmatprep.subr.mxu0 0.0
    %4301 = vmatpush1.xpose.msra.mxu0 0.0
    %4302 = vmatprep.subr.mxu0 0.0
    %4303 = vmatpush1.xpose.msra.mxu0 0.0
    %4304 = vmatprep.subr.mxu0 0.0
    %4305 = vmatpush1.xpose.msra.mxu0 0.0
    %4306 = vmatprep.subr.mxu0 0.0
    %4307 = vmatpush1.xpose.msra.mxu0 0.0
    %4308 = vmatprep.subr.mxu0 0.0
    %4309 = vmatpush1.xpose.msra.mxu0 0.0
    %4310 = vmatprep.subr.mxu0 0.0
    %4311 = vmatpush1.xpose.msra.mxu0 0.0
    %4312 = vmatprep.subr.mxu0 0.0
    %4313 = vmatpush1.xpose.msra.mxu0 0.0
    %4314 = vmatprep.subr.mxu0 0.0
    %4315 = vmatpush1.xpose.msra.mxu0 0.0
    %4316 = vmatprep.subr.mxu0 0.0
    %4317 = vmatpush1.xpose.msra.mxu0 0.0
    %4318 = vmatprep.subr.mxu0 0.0
    %4319 = vmatpush1.xpose.msra.mxu0 0.0
    %4320 = vmatprep.subr.mxu0 0.0
    %4321 = vmatpush1.xpose.msra.mxu0 0.0
    %4322 = vmatprep.subr.mxu0 0.0
    %4323 = vmatpush1.xpose.msra.mxu0 0.0
    %4324 = vmatprep.subr.mxu0 0.0
    %4325 = vmatpush1.xpose.msra.mxu0 0.0
    %4326 = vmatprep.subr.mxu0 0.0
    %4327 = vmatpush1.xpose.msra.mxu0 0.0
    %4328 = vmatprep.subr.mxu0 0.0
    %4329 = vmatpush1.xpose.msra.mxu0 0.0
    %4330 = vmatprep.subr.mxu0 0.0
    %4331 = vmatpush1.xpose.msra.mxu0 0.0
    %4332 = vmatprep.subr.mxu0 0.0
    %4333 = vmatpush1.xpose.msra.mxu0 0.0
    %4334 = vmatprep.subr.mxu0 0.0
    %4335 = vmatpush1.xpose.msra.mxu0 0.0
    %4336 = vmatprep.subr.mxu0 0.0
    %4337 = vmatpush1.xpose.msra.mxu0 0.0
    %4338 = vmatprep.subr.mxu0 0.0
    %4339 = vmatpush1.xpose.msra.mxu0 0.0
    %4340 = vmatprep.subr.mxu0 0.0
    %4341 = vmatpush1.xpose.msra.mxu0 0.0
    %4342 = vmatprep.subr.mxu0 0.0
    %4343 = vmatpush1.xpose.msra.mxu0 0.0
    %4344 = vmatprep.subr.mxu0 0.0
    %4345 = vmatpush1.xpose.msra.mxu0 0.0
    %4346 = vmatprep.mubr.f32.mxu0 0.0
    %4347 = vmatmul.mubr.f32.gmra.mrb[0].mxu0 %v4278
    %v4348 = vpop.f32.mrb[0].mxu0
    %v4349 = vadd.f32 %v1244, %v4348
    %v4350 = vpop.f32.mrb[0].mxu0
    %4351 = vdwg.mxu0
    %v4352 = vsel %vm289, %v4349, -inf
    %4353 = vmax.xlane.f32.xlu0 %v4352
    %v4354 = vpop.xlane.xlu0 %4353
    %v4355 = vsub.f32 %v4349, %v4354
    %v4356 = vmul.f32 %v4355, 1.442695
    %v4357 = vpow.pop %v4356
    %v4358 = vsel %vm289, %v4357, 0.0
    %4359 = vadd.xlane.f32.xlu0 %v4358
    %v4360 = vpop.xlane.xlu0 %4359
    %v4361 = vrcp.pop %v4360
    %v4362 = vmul.f32 %v4357, %v4361
    %4363 = vrot.lane.b32.xlu0 %v2596, 40
    %v4364 = vpop.permute.xlu0 %4363
    %v4367 = vsel %vm289, %v4362, 0
    %4369 = vmatprep.subr.mxu0 0.0
    %4370 = vmatpush1.msra.mxu0 %v4364
    %4371 = vmatprep.subr.mxu0 0.0
    %4372 = vmatpush1.msra.mxu0 0.0
    %4373 = vmatprep.subr.mxu0 0.0
    %4374 = vmatpush1.msra.mxu0 0.0
    %4375 = vmatprep.subr.mxu0 0.0
    %4376 = vmatpush1.msra.mxu0 0.0
    %4377 = vmatprep.subr.mxu0 0.0
    %4378 = vmatpush1.msra.mxu0 0.0
    %4379 = vmatprep.subr.mxu0 0.0
    %4380 = vmatpush1.msra.mxu0 0.0
    %4381 = vmatprep.subr.mxu0 0.0
    %4382 = vmatpush1.msra.mxu0 0.0
    %4383 = vmatprep.subr.mxu0 0.0
    %4384 = vmatpush1.msra.mxu0 0.0
    %4385 = vmatprep.subr.mxu0 0.0
    %4386 = vmatpush1.msra.mxu0 0.0
    %4387 = vmatprep.subr.mxu0 0.0
    %4388 = vmatpush1.msra.mxu0 0.0
    %4389 = vmatprep.subr.mxu0 0.0
    %4390 = vmatpush1.msra.mxu0 0.0
    %4391 = vmatprep.subr.mxu0 0.0
    %4392 = vmatpush1.msra.mxu0 0.0
    %4393 = vmatprep.subr.mxu0 0.0
    %4394 = vmatpush1.msra.mxu0 0.0
    %4395 = vmatprep.subr.mxu0 0.0
    %4396 = vmatpush1.msra.mxu0 0.0
    %4397 = vmatprep.subr.mxu0 0.0
    %4398 = vmatpush1.msra.mxu0 0.0
    %4399 = vmatprep.subr.mxu0 0.0
    %4400 = vmatpush1.msra.mxu0 0.0
    %4401 = vmatprep.subr.mxu0 0.0
    %4402 = vmatpush1.msra.mxu0 0.0
    %4403 = vmatprep.subr.mxu0 0.0
    %4404 = vmatpush1.msra.mxu0 0.0
    %4405 = vmatprep.subr.mxu0 0.0
    %4406 = vmatpush1.msra.mxu0 0.0
    %4407 = vmatprep.subr.mxu0 0.0
    %4408 = vmatpush1.msra.mxu0 0.0
    %4409 = vmatprep.subr.mxu0 0.0
    %4410 = vmatpush1.msra.mxu0 0.0
    %4411 = vmatprep.subr.mxu0 0.0
    %4412 = vmatpush1.msra.mxu0 0.0
    %4413 = vmatprep.subr.mxu0 0.0
    %4414 = vmatpush1.msra.mxu0 0.0
    %4415 = vmatprep.subr.mxu0 0.0
    %4416 = vmatpush1.msra.mxu0 0.0
    %4417 = vmatprep.subr.mxu0 0.0
    %4418 = vmatpush1.msra.mxu0 0.0
    %4419 = vmatprep.subr.mxu0 0.0
    %4420 = vmatpush1.msra.mxu0 0.0
    %4421 = vmatprep.subr.mxu0 0.0
    %4422 = vmatpush1.msra.mxu0 0.0
    %4423 = vmatprep.subr.mxu0 0.0
    %4424 = vmatpush1.msra.mxu0 0.0
    %4425 = vmatprep.subr.mxu0 0.0
    %4426 = vmatpush1.msra.mxu0 0.0
    %4427 = vmatprep.subr.mxu0 0.0
    %4428 = vmatpush1.msra.mxu0 0.0
    %4429 = vmatprep.subr.mxu0 0.0
    %4430 = vmatpush1.msra.mxu0 0.0
    %4431 = vmatprep.subr.mxu0 0.0
    %4432 = vmatpush1.msra.mxu0 0.0
    %4433 = vmatprep.mubr.f32.mxu0 0.0
    %4434 = vmatmul.mubr.f32.gmra.mrb[0].mxu0 %v4367
    %v4435 = vpop.f32.mrb[0].mxu0
    %v4436 = vadd.f32 0.0, %v4435
    %v4437 = vpop.f32.mrb[0].mxu0
    %4438 = vdwg.mxu0
    %v4440 = vsel %vm289, %v4436, 0
    %4442 = vmatprep.subr.mxu0 0.0
    %4443 = vmatpush1.msra.mxu0 %v2604
    %4444 = vmatprep.subr.mxu0 0.0
    %4445 = vmatpush1.msra.mxu0 0.0
    %4446 = vmatprep.subr.mxu0 0.0
    %4447 = vmatpush1.msra.mxu0 0.0
    %4448 = vmatprep.subr.mxu0 0.0
    %4449 = vmatpush1.msra.mxu0 0.0
    %4450 = vmatprep.subr.mxu0 0.0
    %4451 = vmatpush1.msra.mxu0 0.0
    %4452 = vmatprep.subr.mxu0 0.0
    %4453 = vmatpush1.msra.mxu0 0.0
    %4454 = vmatprep.subr.mxu0 0.0
    %4455 = vmatpush1.msra.mxu0 0.0
    %4456 = vmatprep.subr.mxu0 0.0
    %4457 = vmatpush1.msra.mxu0 0.0
    %4458 = vmatprep.subr.mxu0 0.0
    %4459 = vmatpush1.msra.mxu0 0.0
    %4460 = vmatprep.subr.mxu0 0.0
    %4461 = vmatpush1.msra.mxu0 0.0
    %4462 = vmatprep.subr.mxu0 0.0
    %4463 = vmatpush1.msra.mxu0 0.0
    %4464 = vmatprep.subr.mxu0 0.0
    %4465 = vmatpush1.msra.mxu0 0.0
    %4466 = vmatprep.subr.mxu0 0.0
    %4467 = vmatpush1.msra.mxu0 0.0
    %4468 = vmatprep.subr.mxu0 0.0
    %4469 = vmatpush1.msra.mxu0 0.0
    %4470 = vmatprep.subr.mxu0 0.0
    %4471 = vmatpush1.msra.mxu0 0.0
    %4472 = vmatprep.subr.mxu0 0.0
    %4473 = vmatpush1.msra.mxu0 0.0
    %4474 = vmatprep.subr.mxu0 0.0
    %4475 = vmatpush1.msra.mxu0 0.0
    %4476 = vmatprep.subr.mxu0 0.0
    %4477 = vmatpush1.msra.mxu0 0.0
    %4478 = vmatprep.subr.mxu0 0.0
    %4479 = vmatpush1.msra.mxu0 0.0
    %4480 = vmatprep.subr.mxu0 0.0
    %4481 = vmatpush1.msra.mxu0 0.0
    %4482 = vmatprep.subr.mxu0 0.0
    %4483 = vmatpush1.msra.mxu0 0.0
    %4484 = vmatprep.subr.mxu0 0.0
    %4485 = vmatpush1.msra.mxu0 0.0
    %4486 = vmatprep.subr.mxu0 0.0
    %4487 = vmatpush1.msra.mxu0 0.0
    %4488 = vmatprep.subr.mxu0 0.0
    %4489 = vmatpush1.msra.mxu0 0.0
    %4490 = vmatprep.subr.mxu0 0.0
    %4491 = vmatpush1.msra.mxu0 0.0
    %4492 = vmatprep.subr.mxu0 0.0
    %4493 = vmatpush1.msra.mxu0 0.0
    %4494 = vmatprep.subr.mxu0 0.0
    %4495 = vmatpush1.msra.mxu0 0.0
    %4496 = vmatprep.subr.mxu0 0.0
    %4497 = vmatpush1.msra.mxu0 0.0
    %4498 = vmatprep.subr.mxu0 0.0
    %4499 = vmatpush1.msra.mxu0 0.0
    %4500 = vmatprep.subr.mxu0 0.0
    %4501 = vmatpush1.msra.mxu0 0.0
    %4502 = vmatprep.subr.mxu0 0.0
    %4503 = vmatpush1.msra.mxu0 0.0
    %4504 = vmatprep.subr.mxu0 0.0
    %4505 = vmatpush1.msra.mxu0 0.0
    %4506 = vmatprep.mubr.f32.mxu0 0.0
    %4507 = vmatmul.mubr.f32.gmra.mrb[0].mxu0 %v4440
    %v4508 = vpop.f32.mrb[0].mxu0
    %v4509 = vadd.f32 0.0, %v4508
    %v4510 = vpop.f32.mrb[0].mxu0
    %4511 = vdwg.mxu0
    %v4512 = vadd.f32 %v4273, %v4509
    %v4513 = vld [vmem:[%s39] sm:$0x1]
    %v4515 = vlaneseq
    %v4516 = vshrl.u32 %v4515, 7
    %v4517 = vsub.s32 0, %v4516
    %v4518 = vrot.slane %v4513, %v4517
    %v4520 = vadd.f32 %v3558, %v4518
    %v4521 = vadd.f32 %v4512, %v4518
    %v4522 = vadd.f32 %v4520, %v2505
    %v4523 = vadd.f32 %v4521, %v2506
    %v4524 = vld [vmem:[%s41] sm:$0x1]
    %v4525 = vld [vmem:[%s43] sm:$0x1]
    %v4526 = vsel %vm139, %v4522, 0.0
    %4527 = vadd.xlane.f32.xlu0 %v4526
    %v4528 = vpop.xlane.xlu0 %4527
    %v4529 = vsel %vm139, %v4523, 0.0
    %4530 = vadd.xlane.f32.xlu0 %v4529
    %v4531 = vpop.xlane.xlu0 %4530
    %v4532 = vmul.f32 %v4528, %v146
    %v4533 = vmul.f32 %v4531, %v146
    %v4534 = vsub.f32 %v4522, %v4532
    %v4535 = vsub.f32 %v4523, %v4533
    %v4536 = vmul.f32 %v4534, %v4534
    %v4537 = vmul.f32 %v4535, %v4535
    %v4538 = vsel %vm139, %v4536, 0.0
    %4539 = vadd.xlane.f32.xlu0 %v4538
    %v4540 = vpop.xlane.xlu0 %4539
    %v4541 = vsel %vm139, %v4537, 0.0
    %4542 = vadd.xlane.f32.xlu0 %v4541
    %v4543 = vpop.xlane.xlu0 %4542
    %v4544 = vmul.f32 %v4540, %v146
    %v4545 = vmul.f32 %v4543, %v146
    %v4546 = vadd.f32 %v4544, 1e-12
    %v4547 = vadd.f32 %v4545, 1e-12
    %v4548 = vrsqrt.pop %v4546
    %v4549 = vrsqrt.pop %v4547
    %v4550 = vmul.f32 %v4534, %v4548
    %v4551 = vmul.f32 %v4535, %v4549
    %v4553 = vlaneseq
    %v4554 = vshrl.u32 %v4553, 7
    %v4555 = vsub.s32 0, %v4554
    %v4556 = vrot.slane %v4524, %v4555
    %v4558 = vmul.f32 %v4550, %v4556
    %v4559 = vmul.f32 %v4551, %v4556
    %v4561 = vlaneseq
    %v4562 = vshrl.u32 %v4561, 7
    %v4563 = vsub.s32 0, %v4562
    %v4564 = vrot.slane %v4525, %v4563
    %v4566 = vadd.f32 %v4558, %v4564
    %v4567 = vadd.f32 %v4559, %v4564
    %v4568 = vld [vmem:[%s45] sm:$0xff]
    %v4569 = vld [vmem:[%s45 + $0x8] sm:$0xff]
    %v4570 = vld [vmem:[%s45 + $0x10] sm:$0xff]
    %v4571 = vld [vmem:[%s45 + $0x18] sm:$0xff]
    %v4572 = vld [vmem:[%s47] sm:$0x1]
    %v4574 = vlaneseq
    %v4575 = vshrl.u32 %v4574, 7
    %v4576 = vsub.s32 0, %v4575
    %v4577 = vrot.slane %v4572, %v4576
    %v4580 = vsel %vm139, %v4566, 0
    %v4583 = vsel %vm139, %v4567, 0
    %4585 = vmatprep.subr.mxu0 0.0
    %4586 = vmatpush1.msra.mxu0 %v4568
    %4587 = vmatprep.subr.mxu0 0.0
    %4588 = vmatpush1.msra.mxu0 %v4569
    %4589 = vmatprep.subr.mxu0 0.0
    %4590 = vmatpush1.msra.mxu0 %v4570
    %4591 = vmatprep.subr.mxu0 0.0
    %4592 = vmatpush1.msra.mxu0 %v4571
    %4593 = vmatprep.subr.mxu0 0.0
    %4594 = vmatpush1.msra.mxu0 0.0
    %4595 = vmatprep.subr.mxu0 0.0
    %4596 = vmatpush1.msra.mxu0 0.0
    %4597 = vmatprep.subr.mxu0 0.0
    %4598 = vmatpush1.msra.mxu0 0.0
    %4599 = vmatprep.subr.mxu0 0.0
    %4600 = vmatpush1.msra.mxu0 0.0
    %4601 = vmatprep.subr.mxu0 0.0
    %4602 = vmatpush1.msra.mxu0 0.0
    %4603 = vmatprep.subr.mxu0 0.0
    %4604 = vmatpush1.msra.mxu0 0.0
    %4605 = vmatprep.subr.mxu0 0.0
    %4606 = vmatpush1.msra.mxu0 0.0
    %4607 = vmatprep.subr.mxu0 0.0
    %4608 = vmatpush1.msra.mxu0 0.0
    %4609 = vmatprep.subr.mxu0 0.0
    %4610 = vmatpush1.msra.mxu0 0.0
    %4611 = vmatprep.subr.mxu0 0.0
    %4612 = vmatpush1.msra.mxu0 0.0
    %4613 = vmatprep.subr.mxu0 0.0
    %4614 = vmatpush1.msra.mxu0 0.0
    %4615 = vmatprep.subr.mxu0 0.0
    %4616 = vmatpush1.msra.mxu0 0.0
    %4617 = vmatprep.subr.mxu0 0.0
    %4618 = vmatpush1.msra.mxu0 0.0
    %4619 = vmatprep.subr.mxu0 0.0
    %4620 = vmatpush1.msra.mxu0 0.0
    %4621 = vmatprep.subr.mxu0 0.0
    %4622 = vmatpush1.msra.mxu0 0.0
    %4623 = vmatprep.subr.mxu0 0.0
    %4624 = vmatpush1.msra.mxu0 0.0
    %4625 = vmatprep.subr.mxu0 0.0
    %4626 = vmatpush1.msra.mxu0 0.0
    %4627 = vmatprep.subr.mxu0 0.0
    %4628 = vmatpush1.msra.mxu0 0.0
    %4629 = vmatprep.subr.mxu0 0.0
    %4630 = vmatpush1.msra.mxu0 0.0
    %4631 = vmatprep.subr.mxu0 0.0
    %4632 = vmatpush1.msra.mxu0 0.0
    %4633 = vmatprep.subr.mxu0 0.0
    %4634 = vmatpush1.msra.mxu0 0.0
    %4635 = vmatprep.subr.mxu0 0.0
    %4636 = vmatpush1.msra.mxu0 0.0
    %4637 = vmatprep.subr.mxu0 0.0
    %4638 = vmatpush1.msra.mxu0 0.0
    %4639 = vmatprep.subr.mxu0 0.0
    %4640 = vmatpush1.msra.mxu0 0.0
    %4641 = vmatprep.subr.mxu0 0.0
    %4642 = vmatpush1.msra.mxu0 0.0
    %4643 = vmatprep.subr.mxu0 0.0
    %4644 = vmatpush1.msra.mxu0 0.0
    %4645 = vmatprep.subr.mxu0 0.0
    %4646 = vmatpush1.msra.mxu0 0.0
    %4647 = vmatprep.subr.mxu0 0.0
    %4648 = vmatpush1.msra.mxu0 0.0
    %4649 = vmatprep.mubr.f32.mxu0 0.0
    %4650 = vmatmul.mubr.f32.gmra.mrb[0].mxu0 %v4580
    %v4651 = vpop.f32.mrb[0].mxu0
    %v4652 = vadd.f32 %v4577, %v4651
    %v4653 = vpop.f32.mrb[0].mxu0
    %4654 = vmatprep.mubr.f32.mxu0 0.0
    %4655 = vmatmul.mubr.f32.gmra.mrb[0].mxu0 %v4583
    %v4656 = vpop.f32.mrb[0].mxu0
    %v4657 = vadd.f32 %v4577, %v4656
    %v4658 = vpop.f32.mrb[0].mxu0
    %4659 = vdwg.mxu0
    %v4660 = vmul.f32 %v4652, 0.5
    %v4661 = vmul.f32 %v4657, 0.5
    %v4662 = vmul.f32 %v4652, 0.044715
    %v4663 = vmul.f32 %v4657, 0.044715
    %v4664 = vmul.f32 %v4662, %v4652
    %v4665 = vmul.f32 %v4663, %v4657
    %v4666 = vmul.f32 %v4664, %v4652
    %v4667 = vmul.f32 %v4665, %v4657
    %v4668 = vadd.f32 %v4652, %v4666
    %v4669 = vadd.f32 %v4657, %v4667
    %v4670 = vmul.f32 %v4668, 0.7978846
    %v4671 = vmul.f32 %v4669, 0.7978846
    %v4672 = vtanh.pop %v4670
    %v4673 = vtanh.pop %v4671
    %v4674 = vadd.f32 %v4672, 1.0
    %v4675 = vadd.f32 %v4673, 1.0
    %v4676 = vmul.f32 %v4660, %v4674
    %v4677 = vmul.f32 %v4661, %v4675
    %v4678 = vld [vmem:[%s49] sm:$0xff]
    %v4679 = vld [vmem:[%s49 + $0x8] sm:$0xff]
    %v4680 = vld [vmem:[%s49 + $0x10] sm:$0xff]
    %v4681 = vld [vmem:[%s49 + $0x18] sm:$0xff]
    %v4682 = vld [vmem:[%s49 + $0x20] sm:$0xff]
    %v4683 = vld [vmem:[%s49 + $0x28] sm:$0xff]
    %v4684 = vld [vmem:[%s49 + $0x30] sm:$0xff]
    %v4685 = vld [vmem:[%s49 + $0x38] sm:$0xff]
    %v4686 = vld [vmem:[%s51] sm:$0x1]
    %v4688 = vlaneseq
    %v4689 = vshrl.u32 %v4688, 7
    %v4690 = vsub.s32 0, %v4689
    %v4691 = vrot.slane %v4686, %v4690
    %v4694 = vsel %vm2379, %v4676, 0
    %v4697 = vsel %vm2379, %v4677, 0
    %4699 = vmatprep.subr.mxu0 0.0
    %4700 = vmatpush1.msra.mxu0 %v4678
    %4701 = vmatprep.subr.mxu0 0.0
    %4702 = vmatpush1.msra.mxu0 %v4679
    %4703 = vmatprep.subr.mxu0 0.0
    %4704 = vmatpush1.msra.mxu0 %v4680
    %4705 = vmatprep.subr.mxu0 0.0
    %4706 = vmatpush1.msra.mxu0 %v4681
    %4707 = vmatprep.subr.mxu0 0.0
    %4708 = vmatpush1.msra.mxu0 %v4682
    %4709 = vmatprep.subr.mxu0 0.0
    %4710 = vmatpush1.msra.mxu0 %v4683
    %4711 = vmatprep.subr.mxu0 0.0
    %4712 = vmatpush1.msra.mxu0 %v4684
    %4713 = vmatprep.subr.mxu0 0.0
    %4714 = vmatpush1.msra.mxu0 %v4685
    %4715 = vmatprep.subr.mxu0 0.0
    %4716 = vmatpush1.msra.mxu0 0.0
    %4717 = vmatprep.subr.mxu0 0.0
    %4718 = vmatpush1.msra.mxu0 0.0
    %4719 = vmatprep.subr.mxu0 0.0
    %4720 = vmatpush1.msra.mxu0 0.0
    %4721 = vmatprep.subr.mxu0 0.0
    %4722 = vmatpush1.msra.mxu0 0.0
    %4723 = vmatprep.subr.mxu0 0.0
    %4724 = vmatpush1.msra.mxu0 0.0
    %4725 = vmatprep.subr.mxu0 0.0
    %4726 = vmatpush1.msra.mxu0 0.0
    %4727 = vmatprep.subr.mxu0 0.0
    %4728 = vmatpush1.msra.mxu0 0.0
    %4729 = vmatprep.subr.mxu0 0.0
    %4730 = vmatpush1.msra.mxu0 0.0
    %4731 = vmatprep.subr.mxu0 0.0
    %4732 = vmatpush1.msra.mxu0 0.0
    %4733 = vmatprep.subr.mxu0 0.0
    %4734 = vmatpush1.msra.mxu0 0.0
    %4735 = vmatprep.subr.mxu0 0.0
    %4736 = vmatpush1.msra.mxu0 0.0
    %4737 = vmatprep.subr.mxu0 0.0
    %4738 = vmatpush1.msra.mxu0 0.0
    %4739 = vmatprep.subr.mxu0 0.0
    %4740 = vmatpush1.msra.mxu0 0.0
    %4741 = vmatprep.subr.mxu0 0.0
    %4742 = vmatpush1.msra.mxu0 0.0
    %4743 = vmatprep.subr.mxu0 0.0
    %4744 = vmatpush1.msra.mxu0 0.0
    %4745 = vmatprep.subr.mxu0 0.0
    %4746 = vmatpush1.msra.mxu0 0.0
    %4747 = vmatprep.subr.mxu0 0.0
    %4748 = vmatpush1.msra.mxu0 0.0
    %4749 = vmatprep.subr.mxu0 0.0
    %4750 = vmatpush1.msra.mxu0 0.0
    %4751 = vmatprep.subr.mxu0 0.0
    %4752 = vmatpush1.msra.mxu0 0.0
    %4753 = vmatprep.subr.mxu0 0.0
    %4754 = vmatpush1.msra.mxu0 0.0
    %4755 = vmatprep.subr.mxu0 0.0
    %4756 = vmatpush1.msra.mxu0 0.0
    %4757 = vmatprep.subr.mxu0 0.0
    %4758 = vmatpush1.msra.mxu0 0.0
    %4759 = vmatprep.subr.mxu0 0.0
    %4760 = vmatpush1.msra.mxu0 0.0
    %4761 = vmatprep.subr.mxu0 0.0
    %4762 = vmatpush1.msra.mxu0 0.0
    %4763 = vmatprep.mubr.f32.mxu0 0.0
    %4764 = vmatmul.mubr.f32.gmra.mrb[0].mxu0 %v4694
    %v4765 = vpop.f32.mrb[0].mxu0
    %v4766 = vadd.f32 %v4691, %v4765
    %v4767 = vpop.f32.mrb[0].mxu0
    %4768 = vmatprep.mubr.f32.mxu0 0.0
    %4769 = vmatmul.mubr.f32.gmra.mrb[0].mxu0 %v4697
    %v4770 = vpop.f32.mrb[0].mxu0
    %v4771 = vadd.f32 %v4691, %v4770
    %v4772 = vpop.f32.mrb[0].mxu0
    %4773 = vdwg.mxu0
    %v4774 = vadd.f32 %v4766, %v4566
    %v4775 = vadd.f32 %v4771, %v4567
    %v4776 = vld [vmem:[%s53] sm:$0x1]
    %v4777 = vld [vmem:[%s55] sm:$0x1]
    %v4778 = vsel %vm139, %v4774, 0.0
    %4779 = vadd.xlane.f32.xlu0 %v4778
    %v4780 = vpop.xlane.xlu0 %4779
    %v4781 = vsel %vm139, %v4775, 0.0
    %4782 = vadd.xlane.f32.xlu0 %v4781
    %v4783 = vpop.xlane.xlu0 %4782
    %v4784 = vmul.f32 %v4780, %v146
    %v4785 = vmul.f32 %v4783, %v146
    %v4786 = vsub.f32 %v4774, %v4784
    %v4787 = vsub.f32 %v4775, %v4785
    %v4788 = vmul.f32 %v4786, %v4786
    %v4789 = vmul.f32 %v4787, %v4787
    %v4790 = vsel %vm139, %v4788, 0.0
    %4791 = vadd.xlane.f32.xlu0 %v4790
    %v4792 = vpop.xlane.xlu0 %4791
    %v4793 = vsel %vm139, %v4789, 0.0
    %4794 = vadd.xlane.f32.xlu0 %v4793
    %v4795 = vpop.xlane.xlu0 %4794
    %v4796 = vmul.f32 %v4792, %v146
    %v4797 = vmul.f32 %v4795, %v146
    %v4798 = vadd.f32 %v4796, 1e-12
    %v4799 = vadd.f32 %v4797, 1e-12
    %v4800 = vrsqrt.pop %v4798
    %v4801 = vrsqrt.pop %v4799
    %v4802 = vmul.f32 %v4786, %v4800
    %v4803 = vmul.f32 %v4787, %v4801
    %v4805 = vlaneseq
    %v4806 = vshrl.u32 %v4805, 7
    %v4807 = vsub.s32 0, %v4806
    %v4808 = vrot.slane %v4776, %v4807
    %v4810 = vmul.f32 %v4802, %v4808
    %v4811 = vmul.f32 %v4803, %v4808
    %v4813 = vlaneseq
    %v4814 = vshrl.u32 %v4813, 7
    %v4815 = vsub.s32 0, %v4814
    %v4816 = vrot.slane %v4777, %v4815
    %v4818 = vadd.f32 %v4810, %v4816
    %v4819 = vadd.f32 %v4811, %v4816
    %v4821 = vrot.slane %v4819, 7
    %vm4823 = vcmask 1040384
    %v4824 = vsel %vm4823, %v4818, %v4821
    %v4825 = vld [vmem:[%s57] sm:$0xff]
    %v4826 = vld [vmem:[%s57 + $0x8] sm:$0xff]
    %v4827 = vld [vmem:[%s57 + $0x10] sm:$0xff]
    %v4828 = vld [vmem:[%s57 + $0x18] sm:$0xff]
    %v4829 = vld [vmem:[%s59] sm:$0x1]
    %v4831 = vlaneseq
    %v4832 = vshrl.u32 %v4831, 7
    %v4833 = vsub.s32 0, %v4832
    %v4834 = vrot.slane %v4829, %v4833
    %v4837 = vsel %vm139, %v4824, 0
    %4839 = vmatprep.subr.mxu0 0.0
    %4840 = vmatpush1.msra.mxu0 %v4825
    %4841 = vmatprep.subr.mxu0 0.0
    %4842 = vmatpush1.msra.mxu0 %v4826
    %4843 = vmatprep.subr.mxu0 0.0
    %4844 = vmatpush1.msra.mxu0 %v4827
    %4845 = vmatprep.subr.mxu0 0.0
    %4846 = vmatpush1.msra.mxu0 %v4828
    %4847 = vmatprep.subr.mxu0 0.0
    %4848 = vmatpush1.msra.mxu0 0.0
    %4849 = vmatprep.subr.mxu0 0.0
    %4850 = vmatpush1.msra.mxu0 0.0
    %4851 = vmatprep.subr.mxu0 0.0
    %4852 = vmatpush1.msra.mxu0 0.0
    %4853 = vmatprep.subr.mxu0 0.0
    %4854 = vmatpush1.msra.mxu0 0.0
    %4855 = vmatprep.subr.mxu0 0.0
    %4856 = vmatpush1.msra.mxu0 0.0
    %4857 = vmatprep.subr.mxu0 0.0
    %4858 = vmatpush1.msra.mxu0 0.0
    %4859 = vmatprep.subr.mxu0 0.0
    %4860 = vmatpush1.msra.mxu0 0.0
    %4861 = vmatprep.subr.mxu0 0.0
    %4862 = vmatpush1.msra.mxu0 0.0
    %4863 = vmatprep.subr.mxu0 0.0
    %4864 = vmatpush1.msra.mxu0 0.0
    %4865 = vmatprep.subr.mxu0 0.0
    %4866 = vmatpush1.msra.mxu0 0.0
    %4867 = vmatprep.subr.mxu0 0.0
    %4868 = vmatpush1.msra.mxu0 0.0
    %4869 = vmatprep.subr.mxu0 0.0
    %4870 = vmatpush1.msra.mxu0 0.0
    %4871 = vmatprep.subr.mxu0 0.0
    %4872 = vmatpush1.msra.mxu0 0.0
    %4873 = vmatprep.subr.mxu0 0.0
    %4874 = vmatpush1.msra.mxu0 0.0
    %4875 = vmatprep.subr.mxu0 0.0
    %4876 = vmatpush1.msra.mxu0 0.0
    %4877 = vmatprep.subr.mxu0 0.0
    %4878 = vmatpush1.msra.mxu0 0.0
    %4879 = vmatprep.subr.mxu0 0.0
    %4880 = vmatpush1.msra.mxu0 0.0
    %4881 = vmatprep.subr.mxu0 0.0
    %4882 = vmatpush1.msra.mxu0 0.0
    %4883 = vmatprep.subr.mxu0 0.0
    %4884 = vmatpush1.msra.mxu0 0.0
    %4885 = vmatprep.subr.mxu0 0.0
    %4886 = vmatpush1.msra.mxu0 0.0
    %4887 = vmatprep.subr.mxu0 0.0
    %4888 = vmatpush1.msra.mxu0 0.0
    %4889 = vmatprep.subr.mxu0 0.0
    %4890 = vmatpush1.msra.mxu0 0.0
    %4891 = vmatprep.subr.mxu0 0.0
    %4892 = vmatpush1.msra.mxu0 0.0
    %4893 = vmatprep.subr.mxu0 0.0
    %4894 = vmatpush1.msra.mxu0 0.0
    %4895 = vmatprep.subr.mxu0 0.0
    %4896 = vmatpush1.msra.mxu0 0.0
    %4897 = vmatprep.subr.mxu0 0.0
    %4898 = vmatpush1.msra.mxu0 0.0
    %4899 = vmatprep.subr.mxu0 0.0
    %4900 = vmatpush1.msra.mxu0 0.0
    %4901 = vmatprep.subr.mxu0 0.0
    %4902 = vmatpush1.msra.mxu0 0.0
    %4903 = vmatprep.mubr.f32.mxu0 0.0
    %4904 = vmatmul.mubr.f32.gmra.mrb[0].mxu0 %v4837
    %v4905 = vpop.f32.mrb[0].mxu0
    %v4906 = vadd.f32 %v4834, %v4905
    %v4907 = vpop.f32.mrb[0].mxu0
    %4908 = vdwg.mxu0
    %v4909 = vmax.f32 %v4906, 0.0
    %v4910 = vld [vmem:[%s61] sm:$0xff]
    %v4911 = vld [vmem:[%s61 + $0x8] sm:$0xff]
    %v4912 = vld [vmem:[%s61 + $0x10] sm:$0xff]
    %v4913 = vld [vmem:[%s61 + $0x18] sm:$0xff]
    %v4914 = vld [vmem:[%s61 + $0x20] sm:$0xff]
    %v4915 = vld [vmem:[%s61 + $0x28] sm:$0xff]
    %v4916 = vld [vmem:[%s61 + $0x30] sm:$0xff]
    %v4917 = vld [vmem:[%s61 + $0x38] sm:$0xff]
    %v4918 = vld [vmem:[%s61 + $0x40] sm:$0xff]
    %v4919 = vld [vmem:[%s61 + $0x48] sm:$0xff]
    %v4920 = vld [vmem:[%s61 + $0x50] sm:$0xff]
    %v4921 = vld [vmem:[%s61 + $0x58] sm:$0xff]
    %v4922 = vld [vmem:[%s61 + $0x60] sm:$0xff]
    %v4923 = vld [vmem:[%s61 + $0x68] sm:$0xff]
    %v4924 = vld [vmem:[%s61 + $0x70] sm:$0xff]
    %v4925 = vld [vmem:[%s61 + $0x78] sm:$0xff]
    %v4926 = vld [vmem:[%s63] sm:$0x1]
    %v4928 = vlaneseq
    %v4929 = vshrl.u32 %v4928, 7
    %v4930 = vsub.s32 0, %v4929
    %v4931 = vrot.slane %v4926, %v4930
    %4933 = vmatprep.subr.mxu0 0.0
    %4934 = vmatpush1.msra.mxu0 %v4910
    %4935 = vmatprep.subr.mxu0 0.0
    %4936 = vmatpush1.msra.mxu0 %v4911
    %4937 = vmatprep.subr.mxu0 0.0
    %4938 = vmatpush1.msra.mxu0 %v4912
    %4939 = vmatprep.subr.mxu0 0.0
    %4940 = vmatpush1.msra.mxu0 %v4913
    %4941 = vmatprep.subr.mxu0 0.0
    %4942 = vmatpush1.msra.mxu0 %v4914
    %4943 = vmatprep.subr.mxu0 0.0
    %4944 = vmatpush1.msra.mxu0 %v4915
    %4945 = vmatprep.subr.mxu0 0.0
    %4946 = vmatpush1.msra.mxu0 %v4916
    %4947 = vmatprep.subr.mxu0 0.0
    %4948 = vmatpush1.msra.mxu0 %v4917
    %4949 = vmatprep.subr.mxu0 0.0
    %4950 = vmatpush1.msra.mxu0 %v4918
    %4951 = vmatprep.subr.mxu0 0.0
    %4952 = vmatpush1.msra.mxu0 %v4919
    %4953 = vmatprep.subr.mxu0 0.0
    %4954 = vmatpush1.msra.mxu0 %v4920
    %4955 = vmatprep.subr.mxu0 0.0
    %4956 = vmatpush1.msra.mxu0 %v4921
    %4957 = vmatprep.subr.mxu0 0.0
    %4958 = vmatpush1.msra.mxu0 %v4922
    %4959 = vmatprep.subr.mxu0 0.0
    %4960 = vmatpush1.msra.mxu0 %v4923
    %4961 = vmatprep.subr.mxu0 0.0
    %4962 = vmatpush1.msra.mxu0 %v4924
    %4963 = vmatprep.subr.mxu0 0.0
    %4964 = vmatpush1.msra.mxu0 %v4925
    %4965 = vmatprep.subr.mxu0 0.0
    %4966 = vmatpush1.msra.mxu0 0.0
    %4967 = vmatprep.subr.mxu0 0.0
    %4968 = vmatpush1.msra.mxu0 0.0
    %4969 = vmatprep.subr.mxu0 0.0
    %4970 = vmatpush1.msra.mxu0 0.0
    %4971 = vmatprep.subr.mxu0 0.0
    %4972 = vmatpush1.msra.mxu0 0.0
    %4973 = vmatprep.subr.mxu0 0.0
    %4974 = vmatpush1.msra.mxu0 0.0
    %4975 = vmatprep.subr.mxu0 0.0
    %4976 = vmatpush1.msra.mxu0 0.0
    %4977 = vmatprep.subr.mxu0 0.0
    %4978 = vmatpush1.msra.mxu0 0.0
    %4979 = vmatprep.subr.mxu0 0.0
    %4980 = vmatpush1.msra.mxu0 0.0
    %4981 = vmatprep.subr.mxu0 0.0
    %4982 = vmatpush1.msra.mxu0 0.0
    %4983 = vmatprep.subr.mxu0 0.0
    %4984 = vmatpush1.msra.mxu0 0.0
    %4985 = vmatprep.subr.mxu0 0.0
    %4986 = vmatpush1.msra.mxu0 0.0
    %4987 = vmatprep.subr.mxu0 0.0
    %4988 = vmatpush1.msra.mxu0 0.0
    %4989 = vmatprep.subr.mxu0 0.0
    %4990 = vmatpush1.msra.mxu0 0.0
    %4991 = vmatprep.subr.mxu0 0.0
    %4992 = vmatpush1.msra.mxu0 0.0
    %4993 = vmatprep.subr.mxu0 0.0
    %4994 = vmatpush1.msra.mxu0 0.0
    %4995 = vmatprep.subr.mxu0 0.0
    %4996 = vmatpush1.msra.mxu0 0.0
    %4997 = vmatprep.mubr.f32.mxu0 0.0
    %4998 = vmatmul.mubr.f32.gmra.mrb[0].mxu0 %v4909
    %v4999 = vpop.f32.mrb[0].mxu0
    %v5000 = vadd.f32 %v4931, %v4999
    %v5001 = vpop.f32.mrb[0].mxu0
    %5002 = vdwg.mxu0
    %vm5003 = vcmask 17408
    %5004 = vst.msk [vmem:[#allocation2] sm:$0x3] %vm5003, %v5000
    // Predicated region
    $region130: #{model_forward.1} parent=1 // pred_check
      _
    $region131: #{model_forward.1} parent=1 // pred_check_branch
      %5006 = sbr.rel (0) target = $region133
    $region132: #{model_forward.1} parent=1 // pred_region
      %s5008 = ssub.s32 32, 32
      %5009 = vsyncadd [#allocation3], %s5008
      %s5011 = sshll.u32 [#allocation2], 4
      %s5012 = int_to_ptr.vmem [resolvable:$true] %s5011
      %5014 = dma.vmem_to_hbm [thread:$0]  %s5012, 32, %s65, [#allocation3]
    $region133: #{model_forward.1} parent=1 // pred_fallthru
      _
    // Predicated region
    $region134: #{model_forward.1} parent=1 // pred_check
      _
    $region135: #{model_forward.1} parent=1 // pred_check_branch
      %5016 = sbr.rel (0) target = $region137
    $region136: #{model_forward.1} parent=1 // pred_region
      %5017 = dma.done [#allocation3], 32
    $region137: #{model_forward.1} parent=1 // pred_fallthru
      _
    %5018 = vsyncpa [#allocation3], 1

</llo_original>
